<compile_context>
chip_gen: v7x
topology: tpu7x:2x2x1
jax: 0.10.0
libtpu: 0.0.40
codegen_flags: <defaults>
</compile_context>

<pallas_src>
import jax
import jax.numpy as jnp
from jax.experimental import pallas as pl
from jax.experimental.pallas import tpu as pltpu


def _round_up(n, m):
    return ((n + m - 1) // m) * m


# ----------------------------------------------------------------------------
# Fused kernel
# ----------------------------------------------------------------------------
def _body(x_ref, a01_ref, w1_ref, c1_ref, g_ref, bfc_ref, o_ref):
    f32, bf16 = jnp.float32, jnp.bfloat16

    # downsample0 + downsample1 aggregations, folded: s01 = x @ (A0T @ A1T).
    # M = TILE_B fills the MXU rows; f32 accumulation on the MXU.
    if a01_ref is not None:
        s01 = jnp.dot(x_ref[...].astype(bf16), a01_ref[...],
                      preferred_element_type=f32)                # (B, V2) f32
    else:
        # Both adjacencies identity: keep x in f32, no bf16 round trip.
        s01 = x_ref[...]

    # downsample0 + downsample1 channel mixes folded into a rank-1 affine:
    #     t2[c2, b, v2] = w1eff[c2] * s01[b, v2] + c1eff[c2, v2]
    # t2 IS the downsample1 output (activation1 slot -- identity today); kept
    # channel-major so the batched contraction below needs no transposes.
    t2 = (w1_ref[...][:, :, None] * s01[None, :, :]
          + c1_ref[...][:, None, :]).astype(bf16)                # (C2, B, V2)

    # downsample2 (aggregation + channel mix) + fc folded into the precomputed
    # G[c2, k, v2]: one batched MXU contraction over v2 with c2 as the batch
    # dim (same pattern as flash-attention's QK^T), then a cheap leading-axis
    # reduction on the VPU.
    pf = jnp.einsum("cbv,ckv->cbk", t2, g_ref[...],
                    preferred_element_type=f32)                  # (C2, B, K)
    logits = jnp.sum(pf, axis=0) + bfc_ref[...]                  # (B, K) f32
    o_ref[...] = logits.astype(o_ref.dtype)


def _make_kernel(has_a01):
    if has_a01:
        def kernel(x_ref, a01_ref, w1_ref, c1_ref, g_ref, bfc_ref, o_ref):
            _body(x_ref, a01_ref, w1_ref, c1_ref, g_ref, bfc_ref, o_ref)
    else:
        def kernel(x_ref, w1_ref, c1_ref, g_ref, bfc_ref, o_ref):
            _body(x_ref, None, w1_ref, c1_ref, g_ref, bfc_ref, o_ref)
    return kernel


# ----------------------------------------------------------------------------
# Wrapper: single pallas_call, batch-tiled grid
# ----------------------------------------------------------------------------
def classifier_forward(params, x, *, tile_b=128):
    """x: (N, V0) float32 -> logits (N, num_classes) float32.

    tile_b: samples per grid step.  128 is safe on v5e/v6e/v7x (~8 MiB VMEM);
    256 fully fills the v6e/v7x MXU rows and still fits their scoped VMEM.
    """
    assert tile_b % 8 == 0
    n, v0 = x.shape
    k = params["bfc_fold"].shape[1]
    has_a01 = "A01" in params

    tb = min(tile_b, _round_up(n, 8))
    n_pad = _round_up(n, tb)
    if n_pad != n:
        x = jnp.pad(x, ((0, n_pad - n), (0, 0)))

    def const_spec(arr):
        nd = arr.ndim
        return pl.BlockSpec(arr.shape, lambda i, _nd=nd: (0,) * _nd)

    inputs = [x]
    in_specs = [pl.BlockSpec((tb, v0), lambda i: (i, 0))]
    if has_a01:
        inputs.append(params["A01"])
        in_specs.append(const_spec(params["A01"]))
    for name in ("w1eff", "c1eff", "G", "bfc_fold"):
        inputs.append(params[name])
        in_specs.append(const_spec(params[name]))

    out = pl.pallas_call(
        _make_kernel(has_a01),
        out_shape=jax.ShapeDtypeStruct((n_pad, k), jnp.float32),
        grid=(n_pad // tb,),
        in_specs=in_specs,
        out_specs=pl.BlockSpec((tb, k), lambda i: (i, 0)),
        compiler_params=pltpu.CompilerParams(
            dimension_semantics=("parallel",),   # batch shards across v7x TCs
        ),
    )(*inputs)
    return out[:n] if n_pad != n else out


forward = jax.jit(classifier_forward, static_argnames=("tile_b",))


# ----------------------------------------------------------------------------
# Parameter construction (plain-JAX glue) + unfolded reference
# ----------------------------------------------------------------------------
def make_adjacency_t(v_in, v_out):
    """Synthetic contiguous-block mean adjacency, transposed: (V_in, V_out)."""
    if v_in == v_out:
        return jnp.eye(v_in, dtype=jnp.float32)
    deg = v_in // v_out
    rows = jnp.arange(v_in) // deg
    a_t = (rows[:, None] == jnp.arange(v_out)[None, :]).astype(jnp.float32)
    return a_t / float(deg)


def weight_normed(key, shape, scale=0.05):
    """PyTorch weight_norm(dim=0) with its default g = ||v|| init => W == v."""
    return scale * jax.random.normal(key, shape, dtype=jnp.float32)


def init_params(key, node_sizes, channel_sizes, num_classes):
    """Returns (folded kernel params, unfolded reference params)."""
    assert channel_sizes[0] == 1, "Classifier unsqueezes a single input channel"
    _, c1, c2, c3 = channel_sizes
    v0, v1, v2, v3 = node_sizes
    ks = jax.random.split(key, 8)

    # ---- unfolded reference parameters (what the torch module holds) -------
    a0t = make_adjacency_t(v0, v1)                    # (V0, V1)
    a1t = make_adjacency_t(v1, v2)                    # (V1, V2)
    a2t = make_adjacency_t(v2, v3)                    # (V2, V3)
    w0 = weight_normed(ks[0], (c1,))                  # downsample0 mix (C_in=1)
    b0 = 0.1 * jax.random.normal(ks[1], (c1,), jnp.float32)
    w1m = weight_normed(ks[2], (c2, c1))
    b1 = 0.1 * jax.random.normal(ks[3], (c2,), jnp.float32)
    w2m = weight_normed(ks[4], (c3, c2))
    b2 = 0.1 * jax.random.normal(ks[5], (c3,), jnp.float32)
    wfc = weight_normed(ks[6], (num_classes, c3 * v3))
    bfc = 0.1 * jax.random.normal(ks[7], (num_classes,), jnp.float32)
    ref = dict(A0T=a0t, A1T=a1t, A2T=a2t, w0=w0, b0=b0, W1=w1m, b1=b1,
               W2=w2m, b2=b2, Wfc=wfc, bfc=bfc)

    # ---- folded kernel parameters (exact: activation0 / activation2 are
    # identity nn.Sequential()s in the module) -------------------------------
    p = {}
    if not (v0 == v1 == v2):
        p["A01"] = (a0t @ a1t).astype(jnp.bfloat16)   # (V0, V2)
    col_a1 = a1t.sum(axis=0)                          # (V2,)
    p["w1eff"] = (w1m @ w0).reshape(c2, 1)            # (C2, 1)  f32
    p["c1eff"] = ((w1m @ b0)[:, None] * col_a1[None, :]
                  + b1[:, None]).astype(jnp.float32)  # (C2, V2) f32
    wfc3 = wfc.reshape(num_classes, c3, v3)           # matches t3.view(N, -1)
    wfold = jnp.einsum("kcv,co->kov", wfc3, w2m)      # fc folded through W2
    p["G"] = jnp.einsum("kov,wv->okw", wfold, a2t).astype(jnp.bfloat16)  # (C2, K, V2)
    p["bfc_fold"] = (bfc + jnp.einsum("kcv,c->k", wfc3, b2)).reshape(1, num_classes)
    return p, ref


def reference_forward(ref, x):
    """Plain-JAX, f32, unfolded forward (mirrors the torch module step by step)."""
    s0 = x @ ref["A0T"]                                                   # (N, V1)
    t1 = ref["w0"][None, :, None] * s0[:, None, :] + ref["b0"][None, :, None]
    s1 = jnp.einsum("ncv,vw->ncw", t1, ref["A1T"])
    t2 = jnp.einsum("oc,ncv->nov", ref["W1"], s1) + ref["b1"][None, :, None]
    s2 = jnp.einsum("ncv,vw->ncw", t2, ref["A2T"])
    t3 = jnp.einsum("oc,ncv->nov", ref["W2"], s2) + ref["b2"][None, :, None]
    return t3.reshape(x.shape[0], -1) @ ref["Wfc"].T + ref["bfc"][None, :]


# ----------------------------------------------------------------------------
if __name__ == "__main__":
    # Small, module-consistent sizes (node sizes strictly downsample like
    # [in_features, 512z, 128z, z]; channel sizes match the module).
    NODE_SIZES = [1024, 512, 128, 32]
    CHANNEL_SIZES = [1, 32, 64, 128]
    NUM_CLASSES = 8
    N = 4

    key = jax.random.PRNGKey(0)
    k_param, k_x = jax.random.split(key)
    params, ref = init_params(k_param, NODE_SIZES, CHANNEL_SIZES, NUM_CLASSES)
    x = jax.random.normal(k_x, (N, NODE_SIZES[0]), dtype=jnp.float32)

    out = jax.block_until_ready(forward(params, x))
    assert out.shape == (N, NUM_CLASSES), out.shape
    assert bool(jnp.all(jnp.isfinite(out)))

    # Validate kernel + algebraic folds against the unfolded f32 reference
    # (bf16 operands in the kernel -> loose tolerance).
    want = reference_forward(ref, x)
    err = float(jnp.max(jnp.abs(out - want)))
    scale = float(jnp.max(jnp.abs(want)))
    assert err <= 5e-2 * scale + 1e-3, (err, scale)
    print("KERNEL_OK")
</pallas_src>

<mosaic_0001>
module attributes {stable_mosaic.version = 11 : i64} {
  func.func @kernel(%arg0: i32, %arg1: memref<8x1024xf32, #tpu.memory_space<vmem>>, %arg2: memref<1024x128xbf16, #tpu.memory_space<vmem>>, %arg3: memref<64x1xf32, #tpu.memory_space<vmem>>, %arg4: memref<64x128xf32, #tpu.memory_space<vmem>>, %arg5: memref<64x8x128xbf16, #tpu.memory_space<vmem>>, %arg6: memref<1x8xf32, #tpu.memory_space<vmem>>, %arg7: memref<8x8xf32, #tpu.memory_space<vmem>>) attributes {dimension_semantics = [#tpu.dimension_semantics<parallel>], iteration_bounds = array<i64: 1>, scalar_prefetch = 0 : i64, scratch_operands = 0 : i64, tpu.core_type = #tpu.core_type<tc>, window_params = [{transform_indices = @transform_0, window_bounds = array<i64: 8, 1024>}, {pipeline_mode = #tpu.pipeline_mode<synchronous>, transform_indices = @transform_1, window_bounds = array<i64: 1024, 128>}, {pipeline_mode = #tpu.pipeline_mode<synchronous>, transform_indices = @transform_2, window_bounds = array<i64: 64, 1>}, {pipeline_mode = #tpu.pipeline_mode<synchronous>, transform_indices = @transform_3, window_bounds = array<i64: 64, 128>}, {pipeline_mode = #tpu.pipeline_mode<synchronous>, transform_indices = @transform_4, window_bounds = array<i64: 64, 8, 128>}, {pipeline_mode = #tpu.pipeline_mode<synchronous>, transform_indices = @transform_5, window_bounds = array<i64: 1, 8>}, {transform_indices = @transform_6, window_bounds = array<i64: 8, 8>}]} {
    %c0 = arith.constant 0 : index
    %c0_0 = arith.constant 0 : index
    %0 = vector.load %arg1[%c0, %c0_0] : memref<8x1024xf32, #tpu.memory_space<vmem>>, vector<8x1024xf32>
    %1 = arith.truncf %0 : vector<8x1024xf32> to vector<8x1024xbf16>
    %c0_1 = arith.constant 0 : index
    %c0_2 = arith.constant 0 : index
    %2 = vector.load %arg2[%c0_1, %c0_2] : memref<1024x128xbf16, #tpu.memory_space<vmem>>, vector<1024x128xbf16>
    %cst = arith.constant dense<0.000000e+00> : vector<8x128xf32>
    %3 = tpu.matmul %1, %2, %cst {dimension_numbers = #tpu.dot_dimension_numbers<[1], [0], [0], [1], [0, 0, 1, 1], [], []>} : vector<8x1024xbf16>, vector<1024x128xbf16>, vector<8x128xf32> -> vector<8x128xf32>
    %c0_3 = arith.constant 0 : index
    %c0_4 = arith.constant 0 : index
    %4 = vector.load %arg3[%c0_3, %c0_4] : memref<64x1xf32, #tpu.memory_space<vmem>>, vector<64x1xf32>
    %5 = vector.shape_cast %4 : vector<64x1xf32> to vector<64x1x1xf32>
    %6 = vector.shape_cast %3 : vector<8x128xf32> to vector<1x8x128xf32>
    %7 = vector.broadcast %5 : vector<64x1x1xf32> to vector<64x8x128xf32>
    %8 = vector.broadcast %6 : vector<1x8x128xf32> to vector<64x8x128xf32>
    %9 = arith.mulf %7, %8 : vector<64x8x128xf32>
    %c0_5 = arith.constant 0 : index
    %c0_6 = arith.constant 0 : index
    %10 = vector.load %arg4[%c0_5, %c0_6] : memref<64x128xf32, #tpu.memory_space<vmem>>, vector<64x128xf32>
    %11 = vector.shape_cast %10 : vector<64x128xf32> to vector<64x1x128xf32>
    %12 = vector.broadcast %11 : vector<64x1x128xf32> to vector<64x8x128xf32>
    %13 = arith.addf %9, %12 : vector<64x8x128xf32>
    %14 = arith.truncf %13 : vector<64x8x128xf32> to vector<64x8x128xbf16>
    %c0_7 = arith.constant 0 : index
    %c0_8 = arith.constant 0 : index
    %c0_9 = arith.constant 0 : index
    %15 = vector.load %arg5[%c0_7, %c0_8, %c0_9] : memref<64x8x128xbf16, #tpu.memory_space<vmem>>, vector<64x8x128xbf16>
    "tpu.trace_start"() <{level = 10 : i32, message = "cbv,ckv->cbk"}> : () -> ()
    %cst_10 = arith.constant dense<0.000000e+00> : vector<64x8x8xf32>
    %16 = tpu.matmul %14, %15, %cst_10 {dimension_numbers = #tpu.dot_dimension_numbers<[2], [2], [1], [1], [0, 0, 0, 1, 1, 1], [0], [0]>} : vector<64x8x128xbf16>, vector<64x8x128xbf16>, vector<64x8x8xf32> -> vector<64x8x8xf32>
    "tpu.trace_stop"() : () -> ()
    %cst_11 = arith.constant dense<0.000000e+00> : vector<8x8xf32>
    %17 = vector.multi_reduction <add>, %16, %cst_11 [0] : vector<64x8x8xf32> to vector<8x8xf32>
    %c0_12 = arith.constant 0 : index
    %c0_13 = arith.constant 0 : index
    %18 = vector.load %arg6[%c0_12, %c0_13] : memref<1x8xf32, #tpu.memory_space<vmem>>, vector<1x8xf32>
    %19 = vector.broadcast %18 : vector<1x8xf32> to vector<8x8xf32>
    %20 = arith.addf %17, %19 : vector<8x8xf32>
    %c0_14 = arith.constant 0 : index
    %c0_15 = arith.constant 0 : index
    %21 = vector.load %arg7[%c0_14, %c0_15] : memref<8x8xf32, #tpu.memory_space<vmem>>, vector<8x8xf32>
    tpu.vector_store %arg7[%c0_14, %c0_15], %20 {strides = array<i32>} : memref<8x8xf32, #tpu.memory_space<vmem>>, vector<8x8xf32>,
    return
  }
  func.func @transform_0(%arg0: i32) -> (i32, i32) {
    %c0_i32 = arith.constant 0 : i32
    %c0_i32_0 = arith.constant 0 : i32
    return %arg0, %c0_i32 : i32, i32
  }
  func.func @transform_1(%arg0: i32) -> (i32, i32) {
    %c0_i32 = arith.constant 0 : i32
    %c0_i32_0 = arith.constant 0 : i32
    %c0_i32_1 = arith.constant 0 : i32
    return %c0_i32, %c0_i32_0 : i32, i32
  }
  func.func @transform_2(%arg0: i32) -> (i32, i32) {
    %c0_i32 = arith.constant 0 : i32
    %c0_i32_0 = arith.constant 0 : i32
    %c0_i32_1 = arith.constant 0 : i32
    return %c0_i32, %c0_i32_0 : i32, i32
  }
  func.func @transform_3(%arg0: i32) -> (i32, i32) {
    %c0_i32 = arith.constant 0 : i32
    %c0_i32_0 = arith.constant 0 : i32
    %c0_i32_1 = arith.constant 0 : i32
    return %c0_i32, %c0_i32_0 : i32, i32
  }
  func.func @transform_4(%arg0: i32) -> (i32, i32, i32) {
    %c0_i32 = arith.constant 0 : i32
    %c0_i32_0 = arith.constant 0 : i32
    %c0_i32_1 = arith.constant 0 : i32
    %c0_i32_2 = arith.constant 0 : i32
    return %c0_i32, %c0_i32_0, %c0_i32_1 : i32, i32, i32
  }
  func.func @transform_5(%arg0: i32) -> (i32, i32) {
    %c0_i32 = arith.constant 0 : i32
    %c0_i32_0 = arith.constant 0 : i32
    %c0_i32_1 = arith.constant 0 : i32
    return %c0_i32, %c0_i32_0 : i32, i32
  }
  func.func @transform_6(%arg0: i32) -> (i32, i32) {
    %c0_i32 = arith.constant 0 : i32
    %c0_i32_0 = arith.constant 0 : i32
    return %arg0, %c0_i32 : i32, i32
  }
}

</mosaic_0001>

<llo_original>
// kernel: classifier_forward.1
$region0: #{classifier_forward.1}
  #allocation0 [shape = 'u32[]', space=smem, size = 0x4, offset = 0x4, fixed_abs, tag = 'smem constant byte address 0x4 - core index']
  #allocation1 [shape = 'u32[144,128]{1,0:T(1,128)}', space=vmem, size = 0x12000, scoped, tag = 'internal scratch']
  %s0 = inlined_call_operand.vmem [shape: f32[8,1024], index: 0, kind: input, shape index: {}]
  %s1 = inlined_call_operand.hbm [shape: bf16[1024,128], index: 1, kind: input, shape index: {}]
  %s2 = inlined_call_operand.vmem [shape: f32[64,1], index: 2, kind: input, shape index: {}]
  %s3 = inlined_call_operand.vmem [shape: f32[64,128], index: 3, kind: input, shape index: {}]
  %s4 = inlined_call_operand.hbm [shape: bf16[64,8,128], index: 4, kind: input, shape index: {}]
  %s5 = inlined_call_operand.vmem [shape: f32[1,8], index: 5, kind: input, shape index: {}]
  %s6 = inlined_call_operand.vmem [shape: f32[8,8], index: 6, kind: output, shape index: {}]
  %s7 = sld [smem:[#allocation0]]
  $region42: #{classifier_forward.1} parent=0
    _
  %s9 = ssub.s32 1, %s7
  %s10 = scalar_select 0, %s9, %s7
  $region1: #{classifier_forward.1} parent=0
    #allocation2 [shape = 'u8[262144]{0}', space=vmem, size = 0x40000, scoped, tag = 'input window, operand 1, single buffered']
    #allocation3 [shape = 's32[1]{0}', space=sflag, size = 0x4, scoped, tag = 'scoped memory for classifier_forward.1']
    #allocation4 [shape = 'u8[131072]{0}', space=vmem, size = 0x20000, scoped, tag = 'input window, operand 4, single buffered']
    #allocation5 [shape = 's32[1]{0}', space=sflag, size = 0x4, scoped, tag = 'scoped memory for classifier_forward.1']
    %11 = vsyncpa [#allocation3], 0
    %12 = vsyncpa [#allocation5], 0
    // Predicated region
    $region2: #{classifier_forward.1} parent=1 // pred_check
      _
    $region3: #{classifier_forward.1} parent=1 // pred_check_branch
      %14 = sbr.rel (0) target = $region5
    $region4: #{classifier_forward.1} parent=1 // pred_region
      _
    $region5: #{classifier_forward.1} parent=1 // pred_fallthru
      _
    // Predicated region
    $region6: #{classifier_forward.1} parent=1 // pred_check
      _
    $region7: #{classifier_forward.1} parent=1 // pred_check_branch
      %16 = sbr.rel (0) target = $region9
    $region8: #{classifier_forward.1} parent=1 // pred_region
      %s18 = ssub.s32 8192, 8192
      %19 = vsyncadd [#allocation3], %s18
      %s20 = sshll.u32 [#allocation2], 4
      %s21 = int_to_ptr.vmem [resolvable:$true] %s20
      %26 = dma.hbm_to_vmem [thread:$0]  %s1, 8192, %s21, [#allocation3], 64, 64, 4
    $region9: #{classifier_forward.1} parent=1 // pred_fallthru
      _
    // Predicated region
    $region10: #{classifier_forward.1} parent=1 // pred_check
      _
    $region11: #{classifier_forward.1} parent=1 // pred_check_branch
      %28 = sbr.rel (0) target = $region13
    $region12: #{classifier_forward.1} parent=1 // pred_region
      _
    $region13: #{classifier_forward.1} parent=1 // pred_fallthru
      _
    // Predicated region
    $region14: #{classifier_forward.1} parent=1 // pred_check
      _
    $region15: #{classifier_forward.1} parent=1 // pred_check_branch
      %30 = sbr.rel (0) target = $region17
    $region16: #{classifier_forward.1} parent=1 // pred_region
      _
    $region17: #{classifier_forward.1} parent=1 // pred_fallthru
      _
    // Predicated region
    $region18: #{classifier_forward.1} parent=1 // pred_check
      _
    $region19: #{classifier_forward.1} parent=1 // pred_check_branch
      %32 = sbr.rel (0) target = $region21
    $region20: #{classifier_forward.1} parent=1 // pred_region
      %s34 = ssub.s32 4096, 4096
      %35 = vsyncadd [#allocation5], %s34
      %s36 = sshll.u32 [#allocation4], 4
      %s37 = int_to_ptr.vmem [resolvable:$true] %s36
      %42 = dma.hbm_to_vmem [thread:$0]  %s4, 4096, %s37, [#allocation5], 64, 64, 4
    $region21: #{classifier_forward.1} parent=1 // pred_fallthru
      _
    // Predicated region
    $region22: #{classifier_forward.1} parent=1 // pred_check
      _
    $region23: #{classifier_forward.1} parent=1 // pred_check_branch
      %44 = sbr.rel (0) target = $region25
    $region24: #{classifier_forward.1} parent=1 // pred_region
      _
    $region25: #{classifier_forward.1} parent=1 // pred_fallthru
      _
    // Predicated region
    $region26: #{classifier_forward.1} parent=1 // pred_check
      _
    $region27: #{classifier_forward.1} parent=1 // pred_check_branch
      %46 = sbr.rel (0) target = $region29
    $region28: #{classifier_forward.1} parent=1 // pred_region
      %47 = dma.done [#allocation3], 8192
    $region29: #{classifier_forward.1} parent=1 // pred_fallthru
      _
    // Predicated region
    $region30: #{classifier_forward.1} parent=1 // pred_check
      _
    $region31: #{classifier_forward.1} parent=1 // pred_check_branch
      %49 = sbr.rel (0) target = $region33
    $region32: #{classifier_forward.1} parent=1 // pred_region
      %50 = dma.done [#allocation5], 4096
    $region33: #{classifier_forward.1} parent=1 // pred_fallthru
      _
    %v52 = vld [vmem:[%s0] sm:$0xff]
    %v53 = vld [vmem:[%s0 + $0x8] sm:$0xff]
    %v54 = vld [vmem:[%s0 + $0x10] sm:$0xff]
    %v55 = vld [vmem:[%s0 + $0x18] sm:$0xff]
    %v56 = vld [vmem:[%s0 + $0x20] sm:$0xff]
    %v57 = vld [vmem:[%s0 + $0x28] sm:$0xff]
    %v58 = vld [vmem:[%s0 + $0x30] sm:$0xff]
    %v59 = vld [vmem:[%s0 + $0x38] sm:$0xff]
    %v60 = vpack.c.bf16 %v52, %v52
    %v61 = vpack.c.bf16 %v53, %v53
    %v62 = vpack.c.bf16 %v54, %v54
    %v63 = vpack.c.bf16 %v55, %v55
    %v64 = vpack.c.bf16 %v56, %v56
    %v65 = vpack.c.bf16 %v57, %v57
    %v66 = vpack.c.bf16 %v58, %v58
    %v67 = vpack.c.bf16 %v59, %v59
    %v68 = vld [vmem:[#allocation2] sm:$0xf]
    %v69 = vld [vmem:[#allocation2 + $0x4] sm:$0xf]
    %v70 = vld [vmem:[#allocation2 + $0x8] sm:$0xf]
    %v71 = vld [vmem:[#allocation2 + $0xc] sm:$0xf]
    %v72 = vld [vmem:[#allocation2 + $0x10] sm:$0xf]
    %v73 = vld [vmem:[#allocation2 + $0x14] sm:$0xf]
    %v74 = vld [vmem:[#allocation2 + $0x18] sm:$0xf]
    %v75 = vld [vmem:[#allocation2 + $0x1c] sm:$0xf]
    %v76 = vld [vmem:[#allocation2 + $0x20] sm:$0xf]
    %v77 = vld [vmem:[#allocation2 + $0x24] sm:$0xf]
    %v78 = vld [vmem:[#allocation2 + $0x28] sm:$0xf]
    %v79 = vld [vmem:[#allocation2 + $0x2c] sm:$0xf]
    %v80 = vld [vmem:[#allocation2 + $0x30] sm:$0xf]
    %v81 = vld [vmem:[#allocation2 + $0x34] sm:$0xf]
    %v82 = vld [vmem:[#allocation2 + $0x38] sm:$0xf]
    %v83 = vld [vmem:[#allocation2 + $0x3c] sm:$0xf]
    %v84 = vld [vmem:[#allocation2 + $0x40] sm:$0xf]
    %v85 = vld [vmem:[#allocation2 + $0x44] sm:$0xf]
    %v86 = vld [vmem:[#allocation2 + $0x48] sm:$0xf]
    %v87 = vld [vmem:[#allocation2 + $0x4c] sm:$0xf]
    %v88 = vld [vmem:[#allocation2 + $0x50] sm:$0xf]
    %v89 = vld [vmem:[#allocation2 + $0x54] sm:$0xf]
    %v90 = vld [vmem:[#allocation2 + $0x58] sm:$0xf]
    %v91 = vld [vmem:[#allocation2 + $0x5c] sm:$0xf]
    %v92 = vld [vmem:[#allocation2 + $0x60] sm:$0xf]
    %v93 = vld [vmem:[#allocation2 + $0x64] sm:$0xf]
    %v94 = vld [vmem:[#allocation2 + $0x68] sm:$0xf]
    %v95 = vld [vmem:[#allocation2 + $0x6c] sm:$0xf]
    %v96 = vld [vmem:[#allocation2 + $0x70] sm:$0xf]
    %v97 = vld [vmem:[#allocation2 + $0x74] sm:$0xf]
    %v98 = vld [vmem:[#allocation2 + $0x78] sm:$0xf]
    %v99 = vld [vmem:[#allocation2 + $0x7c] sm:$0xf]
    %v100 = vld [vmem:[#allocation2 + $0x80] sm:$0xf]
    %v101 = vld [vmem:[#allocation2 + $0x84] sm:$0xf]
    %v102 = vld [vmem:[#allocation2 + $0x88] sm:$0xf]
    %v103 = vld [vmem:[#allocation2 + $0x8c] sm:$0xf]
    %v104 = vld [vmem:[#allocation2 + $0x90] sm:$0xf]
    %v105 = vld [vmem:[#allocation2 + $0x94] sm:$0xf]
    %v106 = vld [vmem:[#allocation2 + $0x98] sm:$0xf]
    %v107 = vld [vmem:[#allocation2 + $0x9c] sm:$0xf]
    %v108 = vld [vmem:[#allocation2 + $0xa0] sm:$0xf]
    %v109 = vld [vmem:[#allocation2 + $0xa4] sm:$0xf]
    %v110 = vld [vmem:[#allocation2 + $0xa8] sm:$0xf]
    %v111 = vld [vmem:[#allocation2 + $0xac] sm:$0xf]
    %v112 = vld [vmem:[#allocation2 + $0xb0] sm:$0xf]
    %v113 = vld [vmem:[#allocation2 + $0xb4] sm:$0xf]
    %v114 = vld [vmem:[#allocation2 + $0xb8] sm:$0xf]
    %v115 = vld [vmem:[#allocation2 + $0xbc] sm:$0xf]
    %v116 = vld [vmem:[#allocation2 + $0xc0] sm:$0xf]
    %v117 = vld [vmem:[#allocation2 + $0xc4] sm:$0xf]
    %v118 = vld [vmem:[#allocation2 + $0xc8] sm:$0xf]
    %v119 = vld [vmem:[#allocation2 + $0xcc] sm:$0xf]
    %v120 = vld [vmem:[#allocation2 + $0xd0] sm:$0xf]
    %v121 = vld [vmem:[#allocation2 + $0xd4] sm:$0xf]
    %v122 = vld [vmem:[#allocation2 + $0xd8] sm:$0xf]
    %v123 = vld [vmem:[#allocation2 + $0xdc] sm:$0xf]
    %v124 = vld [vmem:[#allocation2 + $0xe0] sm:$0xf]
    %v125 = vld [vmem:[#allocation2 + $0xe4] sm:$0xf]
    %v126 = vld [vmem:[#allocation2 + $0xe8] sm:$0xf]
    %v127 = vld [vmem:[#allocation2 + $0xec] sm:$0xf]
    %v128 = vld [vmem:[#allocation2 + $0xf0] sm:$0xf]
    %v129 = vld [vmem:[#allocation2 + $0xf4] sm:$0xf]
    %v130 = vld [vmem:[#allocation2 + $0xf8] sm:$0xf]
    %v131 = vld [vmem:[#allocation2 + $0xfc] sm:$0xf]
    %v132 = vld [vmem:[#allocation2 + $0x100] sm:$0xf]
    %v133 = vld [vmem:[#allocation2 + $0x104] sm:$0xf]
    %v134 = vld [vmem:[#allocation2 + $0x108] sm:$0xf]
    %v135 = vld [vmem:[#allocation2 + $0x10c] sm:$0xf]
    %v136 = vld [vmem:[#allocation2 + $0x110] sm:$0xf]
    %v137 = vld [vmem:[#allocation2 + $0x114] sm:$0xf]
    %v138 = vld [vmem:[#allocation2 + $0x118] sm:$0xf]
    %v139 = vld [vmem:[#allocation2 + $0x11c] sm:$0xf]
    %v140 = vld [vmem:[#allocation2 + $0x120] sm:$0xf]
    %v141 = vld [vmem:[#allocation2 + $0x124] sm:$0xf]
    %v142 = vld [vmem:[#allocation2 + $0x128] sm:$0xf]
    %v143 = vld [vmem:[#allocation2 + $0x12c] sm:$0xf]
    %v144 = vld [vmem:[#allocation2 + $0x130] sm:$0xf]
    %v145 = vld [vmem:[#allocation2 + $0x134] sm:$0xf]
    %v146 = vld [vmem:[#allocation2 + $0x138] sm:$0xf]
    %v147 = vld [vmem:[#allocation2 + $0x13c] sm:$0xf]
    %v148 = vld [vmem:[#allocation2 + $0x140] sm:$0xf]
    %v149 = vld [vmem:[#allocation2 + $0x144] sm:$0xf]
    %v150 = vld [vmem:[#allocation2 + $0x148] sm:$0xf]
    %v151 = vld [vmem:[#allocation2 + $0x14c] sm:$0xf]
    %v152 = vld [vmem:[#allocation2 + $0x150] sm:$0xf]
    %v153 = vld [vmem:[#allocation2 + $0x154] sm:$0xf]
    %v154 = vld [vmem:[#allocation2 + $0x158] sm:$0xf]
    %v155 = vld [vmem:[#allocation2 + $0x15c] sm:$0xf]
    %v156 = vld [vmem:[#allocation2 + $0x160] sm:$0xf]
    %v157 = vld [vmem:[#allocation2 + $0x164] sm:$0xf]
    %v158 = vld [vmem:[#allocation2 + $0x168] sm:$0xf]
    %v159 = vld [vmem:[#allocation2 + $0x16c] sm:$0xf]
    %v160 = vld [vmem:[#allocation2 + $0x170] sm:$0xf]
    %v161 = vld [vmem:[#allocation2 + $0x174] sm:$0xf]
    %v162 = vld [vmem:[#allocation2 + $0x178] sm:$0xf]
    %v163 = vld [vmem:[#allocation2 + $0x17c] sm:$0xf]
    %v164 = vld [vmem:[#allocation2 + $0x180] sm:$0xf]
    %v165 = vld [vmem:[#allocation2 + $0x184] sm:$0xf]
    %v166 = vld [vmem:[#allocation2 + $0x188] sm:$0xf]
    %v167 = vld [vmem:[#allocation2 + $0x18c] sm:$0xf]
    %v168 = vld [vmem:[#allocation2 + $0x190] sm:$0xf]
    %v169 = vld [vmem:[#allocation2 + $0x194] sm:$0xf]
    %v170 = vld [vmem:[#allocation2 + $0x198] sm:$0xf]
    %v171 = vld [vmem:[#allocation2 + $0x19c] sm:$0xf]
    %v172 = vld [vmem:[#allocation2 + $0x1a0] sm:$0xf]
    %v173 = vld [vmem:[#allocation2 + $0x1a4] sm:$0xf]
    %v174 = vld [vmem:[#allocation2 + $0x1a8] sm:$0xf]
    %v175 = vld [vmem:[#allocation2 + $0x1ac] sm:$0xf]
    %v176 = vld [vmem:[#allocation2 + $0x1b0] sm:$0xf]
    %v177 = vld [vmem:[#allocation2 + $0x1b4] sm:$0xf]
    %v178 = vld [vmem:[#allocation2 + $0x1b8] sm:$0xf]
    %v179 = vld [vmem:[#allocation2 + $0x1bc] sm:$0xf]
    %v180 = vld [vmem:[#allocation2 + $0x1c0] sm:$0xf]
    %v181 = vld [vmem:[#allocation2 + $0x1c4] sm:$0xf]
    %v182 = vld [vmem:[#allocation2 + $0x1c8] sm:$0xf]
    %v183 = vld [vmem:[#allocation2 + $0x1cc] sm:$0xf]
    %v184 = vld [vmem:[#allocation2 + $0x1d0] sm:$0xf]
    %v185 = vld [vmem:[#allocation2 + $0x1d4] sm:$0xf]
    %v186 = vld [vmem:[#allocation2 + $0x1d8] sm:$0xf]
    %v187 = vld [vmem:[#allocation2 + $0x1dc] sm:$0xf]
    %v188 = vld [vmem:[#allocation2 + $0x1e0] sm:$0xf]
    %v189 = vld [vmem:[#allocation2 + $0x1e4] sm:$0xf]
    %v190 = vld [vmem:[#allocation2 + $0x1e8] sm:$0xf]
    %v191 = vld [vmem:[#allocation2 + $0x1ec] sm:$0xf]
    %v192 = vld [vmem:[#allocation2 + $0x1f0] sm:$0xf]
    %v193 = vld [vmem:[#allocation2 + $0x1f4] sm:$0xf]
    %v194 = vld [vmem:[#allocation2 + $0x1f8] sm:$0xf]
    %v195 = vld [vmem:[#allocation2 + $0x1fc] sm:$0xf]
    %v324 = vunpack.c.l.b16 %v68
    %v325 = vunpack.c.l.b16 %v69
    %v326 = vunpack.c.l.b16 %v70
    %v327 = vunpack.c.l.b16 %v71
    %v328 = vunpack.c.l.b16 %v72
    %v329 = vunpack.c.l.b16 %v73
    %v330 = vunpack.c.l.b16 %v74
    %v331 = vunpack.c.l.b16 %v75
    %v332 = vunpack.c.l.b16 %v76
    %v333 = vunpack.c.l.b16 %v77
    %v334 = vunpack.c.l.b16 %v78
    %v335 = vunpack.c.l.b16 %v79
    %v336 = vunpack.c.l.b16 %v80
    %v337 = vunpack.c.l.b16 %v81
    %v338 = vunpack.c.l.b16 %v82
    %v339 = vunpack.c.l.b16 %v83
    %v340 = vunpack.c.l.b16 %v84
    %v341 = vunpack.c.l.b16 %v85
    %v342 = vunpack.c.l.b16 %v86
    %v343 = vunpack.c.l.b16 %v87
    %v344 = vunpack.c.l.b16 %v88
    %v345 = vunpack.c.l.b16 %v89
    %v346 = vunpack.c.l.b16 %v90
    %v347 = vunpack.c.l.b16 %v91
    %v348 = vunpack.c.l.b16 %v92
    %v349 = vunpack.c.l.b16 %v93
    %v350 = vunpack.c.l.b16 %v94
    %v351 = vunpack.c.l.b16 %v95
    %v352 = vunpack.c.l.b16 %v96
    %v353 = vunpack.c.l.b16 %v97
    %v354 = vunpack.c.l.b16 %v98
    %v355 = vunpack.c.l.b16 %v99
    %v356 = vunpack.c.l.b16 %v100
    %v357 = vunpack.c.l.b16 %v101
    %v358 = vunpack.c.l.b16 %v102
    %v359 = vunpack.c.l.b16 %v103
    %v360 = vunpack.c.l.b16 %v104
    %v361 = vunpack.c.l.b16 %v105
    %v362 = vunpack.c.l.b16 %v106
    %v363 = vunpack.c.l.b16 %v107
    %v364 = vunpack.c.l.b16 %v108
    %v365 = vunpack.c.l.b16 %v109
    %v366 = vunpack.c.l.b16 %v110
    %v367 = vunpack.c.l.b16 %v111
    %v368 = vunpack.c.l.b16 %v112
    %v369 = vunpack.c.l.b16 %v113
    %v370 = vunpack.c.l.b16 %v114
    %v371 = vunpack.c.l.b16 %v115
    %v372 = vunpack.c.l.b16 %v116
    %v373 = vunpack.c.l.b16 %v117
    %v374 = vunpack.c.l.b16 %v118
    %v375 = vunpack.c.l.b16 %v119
    %v376 = vunpack.c.l.b16 %v120
    %v377 = vunpack.c.l.b16 %v121
    %v378 = vunpack.c.l.b16 %v122
    %v379 = vunpack.c.l.b16 %v123
    %v380 = vunpack.c.l.b16 %v124
    %v381 = vunpack.c.l.b16 %v125
    %v382 = vunpack.c.l.b16 %v126
    %v383 = vunpack.c.l.b16 %v127
    %v384 = vunpack.c.l.b16 %v128
    %v385 = vunpack.c.l.b16 %v129
    %v386 = vunpack.c.l.b16 %v130
    %v387 = vunpack.c.l.b16 %v131
    %v388 = vunpack.c.l.b16 %v132
    %v389 = vunpack.c.l.b16 %v133
    %v390 = vunpack.c.l.b16 %v134
    %v391 = vunpack.c.l.b16 %v135
    %v392 = vunpack.c.l.b16 %v136
    %v393 = vunpack.c.l.b16 %v137
    %v394 = vunpack.c.l.b16 %v138
    %v395 = vunpack.c.l.b16 %v139
    %v396 = vunpack.c.l.b16 %v140
    %v397 = vunpack.c.l.b16 %v141
    %v398 = vunpack.c.l.b16 %v142
    %v399 = vunpack.c.l.b16 %v143
    %v400 = vunpack.c.l.b16 %v144
    %v401 = vunpack.c.l.b16 %v145
    %v402 = vunpack.c.l.b16 %v146
    %v403 = vunpack.c.l.b16 %v147
    %v404 = vunpack.c.l.b16 %v148
    %v405 = vunpack.c.l.b16 %v149
    %v406 = vunpack.c.l.b16 %v150
    %v407 = vunpack.c.l.b16 %v151
    %v408 = vunpack.c.l.b16 %v152
    %v409 = vunpack.c.l.b16 %v153
    %v410 = vunpack.c.l.b16 %v154
    %v411 = vunpack.c.l.b16 %v155
    %v412 = vunpack.c.l.b16 %v156
    %v413 = vunpack.c.l.b16 %v157
    %v414 = vunpack.c.l.b16 %v158
    %v415 = vunpack.c.l.b16 %v159
    %v416 = vunpack.c.l.b16 %v160
    %v417 = vunpack.c.l.b16 %v161
    %v418 = vunpack.c.l.b16 %v162
    %v419 = vunpack.c.l.b16 %v163
    %v420 = vunpack.c.l.b16 %v164
    %v421 = vunpack.c.l.b16 %v165
    %v422 = vunpack.c.l.b16 %v166
    %v423 = vunpack.c.l.b16 %v167
    %v424 = vunpack.c.l.b16 %v168
    %v425 = vunpack.c.l.b16 %v169
    %v426 = vunpack.c.l.b16 %v170
    %v427 = vunpack.c.l.b16 %v171
    %v428 = vunpack.c.l.b16 %v172
    %v429 = vunpack.c.l.b16 %v173
    %v430 = vunpack.c.l.b16 %v174
    %v431 = vunpack.c.l.b16 %v175
    %v432 = vunpack.c.l.b16 %v176
    %v433 = vunpack.c.l.b16 %v177
    %v434 = vunpack.c.l.b16 %v178
    %v435 = vunpack.c.l.b16 %v179
    %v436 = vunpack.c.l.b16 %v180
    %v437 = vunpack.c.l.b16 %v181
    %v438 = vunpack.c.l.b16 %v182
    %v439 = vunpack.c.l.b16 %v183
    %v440 = vunpack.c.l.b16 %v184
    %v441 = vunpack.c.l.b16 %v185
    %v442 = vunpack.c.l.b16 %v186
    %v443 = vunpack.c.l.b16 %v187
    %v444 = vunpack.c.l.b16 %v188
    %v445 = vunpack.c.l.b16 %v189
    %v446 = vunpack.c.l.b16 %v190
    %v447 = vunpack.c.l.b16 %v191
    %v448 = vunpack.c.l.b16 %v192
    %v449 = vunpack.c.l.b16 %v193
    %v450 = vunpack.c.l.b16 %v194
    %v451 = vunpack.c.l.b16 %v195
    %v452 = vpack.c.b16 %v325, %v324
    %v453 = vpack.c.b16 %v327, %v326
    %v454 = vpack.c.b16 %v329, %v328
    %v455 = vpack.c.b16 %v331, %v330
    %v456 = vpack.c.b16 %v333, %v332
    %v457 = vpack.c.b16 %v335, %v334
    %v458 = vpack.c.b16 %v337, %v336
    %v459 = vpack.c.b16 %v339, %v338
    %v460 = vpack.c.b16 %v341, %v340
    %v461 = vpack.c.b16 %v343, %v342
    %v462 = vpack.c.b16 %v345, %v344
    %v463 = vpack.c.b16 %v347, %v346
    %v464 = vpack.c.b16 %v349, %v348
    %v465 = vpack.c.b16 %v351, %v350
    %v466 = vpack.c.b16 %v353, %v352
    %v467 = vpack.c.b16 %v355, %v354
    %v468 = vpack.c.b16 %v357, %v356
    %v469 = vpack.c.b16 %v359, %v358
    %v470 = vpack.c.b16 %v361, %v360
    %v471 = vpack.c.b16 %v363, %v362
    %v472 = vpack.c.b16 %v365, %v364
    %v473 = vpack.c.b16 %v367, %v366
    %v474 = vpack.c.b16 %v369, %v368
    %v475 = vpack.c.b16 %v371, %v370
    %v476 = vpack.c.b16 %v373, %v372
    %v477 = vpack.c.b16 %v375, %v374
    %v478 = vpack.c.b16 %v377, %v376
    %v479 = vpack.c.b16 %v379, %v378
    %v480 = vpack.c.b16 %v381, %v380
    %v481 = vpack.c.b16 %v383, %v382
    %v482 = vpack.c.b16 %v385, %v384
    %v483 = vpack.c.b16 %v387, %v386
    %v484 = vpack.c.b16 %v389, %v388
    %v485 = vpack.c.b16 %v391, %v390
    %v486 = vpack.c.b16 %v393, %v392
    %v487 = vpack.c.b16 %v395, %v394
    %v488 = vpack.c.b16 %v397, %v396
    %v489 = vpack.c.b16 %v399, %v398
    %v490 = vpack.c.b16 %v401, %v400
    %v491 = vpack.c.b16 %v403, %v402
    %v492 = vpack.c.b16 %v405, %v404
    %v493 = vpack.c.b16 %v407, %v406
    %v494 = vpack.c.b16 %v409, %v408
    %v495 = vpack.c.b16 %v411, %v410
    %v496 = vpack.c.b16 %v413, %v412
    %v497 = vpack.c.b16 %v415, %v414
    %v498 = vpack.c.b16 %v417, %v416
    %v499 = vpack.c.b16 %v419, %v418
    %v500 = vpack.c.b16 %v421, %v420
    %v501 = vpack.c.b16 %v423, %v422
    %v502 = vpack.c.b16 %v425, %v424
    %v503 = vpack.c.b16 %v427, %v426
    %v504 = vpack.c.b16 %v429, %v428
    %v505 = vpack.c.b16 %v431, %v430
    %v506 = vpack.c.b16 %v433, %v432
    %v507 = vpack.c.b16 %v435, %v434
    %v508 = vpack.c.b16 %v437, %v436
    %v509 = vpack.c.b16 %v439, %v438
    %v510 = vpack.c.b16 %v441, %v440
    %v511 = vpack.c.b16 %v443, %v442
    %v512 = vpack.c.b16 %v445, %v444
    %v513 = vpack.c.b16 %v447, %v446
    %v514 = vpack.c.b16 %v449, %v448
    %v515 = vpack.c.b16 %v451, %v450
    %580 = vmatprep.subr.bf16.mxu0 0
    %581 = vmatpush1.bf16.msra.mxu0 %v452
    %582 = vmatprep.subr.bf16.mxu0 0
    %583 = vmatpush1.bf16.msra.mxu0 %v453
    %584 = vmatprep.subr.bf16.mxu0 0
    %585 = vmatpush1.bf16.msra.mxu0 %v454
    %586 = vmatprep.subr.bf16.mxu0 0
    %587 = vmatpush1.bf16.msra.mxu0 %v455
    %588 = vmatprep.subr.bf16.mxu0 0
    %589 = vmatpush1.bf16.msra.mxu0 %v456
    %590 = vmatprep.subr.bf16.mxu0 0
    %591 = vmatpush1.bf16.msra.mxu0 %v457
    %592 = vmatprep.subr.bf16.mxu0 0
    %593 = vmatpush1.bf16.msra.mxu0 %v458
    %594 = vmatprep.subr.bf16.mxu0 0
    %595 = vmatpush1.bf16.msra.mxu0 %v459
    %596 = vmatprep.subr.bf16.mxu0 0
    %597 = vmatpush1.bf16.msra.mxu0 %v460
    %598 = vmatprep.subr.bf16.mxu0 0
    %599 = vmatpush1.bf16.msra.mxu0 %v461
    %600 = vmatprep.subr.bf16.mxu0 0
    %601 = vmatpush1.bf16.msra.mxu0 %v462
    %602 = vmatprep.subr.bf16.mxu0 0
    %603 = vmatpush1.bf16.msra.mxu0 %v463
    %604 = vmatprep.subr.bf16.mxu0 0
    %605 = vmatpush1.bf16.msra.mxu0 %v464
    %606 = vmatprep.subr.bf16.mxu0 0
    %607 = vmatpush1.bf16.msra.mxu0 %v465
    %608 = vmatprep.subr.bf16.mxu0 0
    %609 = vmatpush1.bf16.msra.mxu0 %v466
    %610 = vmatprep.subr.bf16.mxu0 0
    %611 = vmatpush1.bf16.msra.mxu0 %v467
    %612 = vmatprep.mubr.bf16.mxu0 %v61
    %613 = vmatmul.mubr.bf16.gmra.mrb[0].mxu0 %v60
    %v614 = vpop.f32.mrb[0].mxu0
    %v615 = vadd.f32 0.0, %v614
    %v616 = vpop.f32.mrb[0].mxu0
    %v617 = vpop.f32.mrb[0].mxu0
    %v618 = vpop.f32.mrb[0].mxu0
    %619 = vdwg.mxu0
    %620 = vmatprep.subr.bf16.mxu0 0
    %621 = vmatpush1.bf16.msra.mxu0 %v468
    %622 = vmatprep.subr.bf16.mxu0 0
    %623 = vmatpush1.bf16.msra.mxu0 %v469
    %624 = vmatprep.subr.bf16.mxu0 0
    %625 = vmatpush1.bf16.msra.mxu0 %v470
    %626 = vmatprep.subr.bf16.mxu0 0
    %627 = vmatpush1.bf16.msra.mxu0 %v471
    %628 = vmatprep.subr.bf16.mxu0 0
    %629 = vmatpush1.bf16.msra.mxu0 %v472
    %630 = vmatprep.subr.bf16.mxu0 0
    %631 = vmatpush1.bf16.msra.mxu0 %v473
    %632 = vmatprep.subr.bf16.mxu0 0
    %633 = vmatpush1.bf16.msra.mxu0 %v474
    %634 = vmatprep.subr.bf16.mxu0 0
    %635 = vmatpush1.bf16.msra.mxu0 %v475
    %636 = vmatprep.subr.bf16.mxu0 0
    %637 = vmatpush1.bf16.msra.mxu0 %v476
    %638 = vmatprep.subr.bf16.mxu0 0
    %639 = vmatpush1.bf16.msra.mxu0 %v477
    %640 = vmatprep.subr.bf16.mxu0 0
    %641 = vmatpush1.bf16.msra.mxu0 %v478
    %642 = vmatprep.subr.bf16.mxu0 0
    %643 = vmatpush1.bf16.msra.mxu0 %v479
    %644 = vmatprep.subr.bf16.mxu0 0
    %645 = vmatpush1.bf16.msra.mxu0 %v480
    %646 = vmatprep.subr.bf16.mxu0 0
    %647 = vmatpush1.bf16.msra.mxu0 %v481
    %648 = vmatprep.subr.bf16.mxu0 0
    %649 = vmatpush1.bf16.msra.mxu0 %v482
    %650 = vmatprep.subr.bf16.mxu0 0
    %651 = vmatpush1.bf16.msra.mxu0 %v483
    %652 = vmatprep.mubr.bf16.mxu0 %v63
    %653 = vmatmul.mubr.bf16.gmra.mrb[0].mxu0 %v62
    %v654 = vpop.f32.mrb[0].mxu0
    %v655 = vadd.f32 %v615, %v654
    %v656 = vpop.f32.mrb[0].mxu0
    %v657 = vpop.f32.mrb[0].mxu0
    %v658 = vpop.f32.mrb[0].mxu0
    %659 = vdwg.mxu0
    %660 = vmatprep.subr.bf16.mxu0 0
    %661 = vmatpush1.bf16.msra.mxu0 %v484
    %662 = vmatprep.subr.bf16.mxu0 0
    %663 = vmatpush1.bf16.msra.mxu0 %v485
    %664 = vmatprep.subr.bf16.mxu0 0
    %665 = vmatpush1.bf16.msra.mxu0 %v486
    %666 = vmatprep.subr.bf16.mxu0 0
    %667 = vmatpush1.bf16.msra.mxu0 %v487
    %668 = vmatprep.subr.bf16.mxu0 0
    %669 = vmatpush1.bf16.msra.mxu0 %v488
    %670 = vmatprep.subr.bf16.mxu0 0
    %671 = vmatpush1.bf16.msra.mxu0 %v489
    %672 = vmatprep.subr.bf16.mxu0 0
    %673 = vmatpush1.bf16.msra.mxu0 %v490
    %674 = vmatprep.subr.bf16.mxu0 0
    %675 = vmatpush1.bf16.msra.mxu0 %v491
    %676 = vmatprep.subr.bf16.mxu0 0
    %677 = vmatpush1.bf16.msra.mxu0 %v492
    %678 = vmatprep.subr.bf16.mxu0 0
    %679 = vmatpush1.bf16.msra.mxu0 %v493
    %680 = vmatprep.subr.bf16.mxu0 0
    %681 = vmatpush1.bf16.msra.mxu0 %v494
    %682 = vmatprep.subr.bf16.mxu0 0
    %683 = vmatpush1.bf16.msra.mxu0 %v495
    %684 = vmatprep.subr.bf16.mxu0 0
    %685 = vmatpush1.bf16.msra.mxu0 %v496
    %686 = vmatprep.subr.bf16.mxu0 0
    %687 = vmatpush1.bf16.msra.mxu0 %v497
    %688 = vmatprep.subr.bf16.mxu0 0
    %689 = vmatpush1.bf16.msra.mxu0 %v498
    %690 = vmatprep.subr.bf16.mxu0 0
    %691 = vmatpush1.bf16.msra.mxu0 %v499
    %692 = vmatprep.mubr.bf16.mxu0 %v65
    %693 = vmatmul.mubr.bf16.gmra.mrb[0].mxu0 %v64
    %v694 = vpop.f32.mrb[0].mxu0
    %v695 = vadd.f32 %v655, %v694
    %v696 = vpop.f32.mrb[0].mxu0
    %v697 = vpop.f32.mrb[0].mxu0
    %v698 = vpop.f32.mrb[0].mxu0
    %699 = vdwg.mxu0
    %700 = vmatprep.subr.bf16.mxu0 0
    %701 = vmatpush1.bf16.msra.mxu0 %v500
    %702 = vmatprep.subr.bf16.mxu0 0
    %703 = vmatpush1.bf16.msra.mxu0 %v501
    %704 = vmatprep.subr.bf16.mxu0 0
    %705 = vmatpush1.bf16.msra.mxu0 %v502
    %706 = vmatprep.subr.bf16.mxu0 0
    %707 = vmatpush1.bf16.msra.mxu0 %v503
    %708 = vmatprep.subr.bf16.mxu0 0
    %709 = vmatpush1.bf16.msra.mxu0 %v504
    %710 = vmatprep.subr.bf16.mxu0 0
    %711 = vmatpush1.bf16.msra.mxu0 %v505
    %712 = vmatprep.subr.bf16.mxu0 0
    %713 = vmatpush1.bf16.msra.mxu0 %v506
    %714 = vmatprep.subr.bf16.mxu0 0
    %715 = vmatpush1.bf16.msra.mxu0 %v507
    %716 = vmatprep.subr.bf16.mxu0 0
    %717 = vmatpush1.bf16.msra.mxu0 %v508
    %718 = vmatprep.subr.bf16.mxu0 0
    %719 = vmatpush1.bf16.msra.mxu0 %v509
    %720 = vmatprep.subr.bf16.mxu0 0
    %721 = vmatpush1.bf16.msra.mxu0 %v510
    %722 = vmatprep.subr.bf16.mxu0 0
    %723 = vmatpush1.bf16.msra.mxu0 %v511
    %724 = vmatprep.subr.bf16.mxu0 0
    %725 = vmatpush1.bf16.msra.mxu0 %v512
    %726 = vmatprep.subr.bf16.mxu0 0
    %727 = vmatpush1.bf16.msra.mxu0 %v513
    %728 = vmatprep.subr.bf16.mxu0 0
    %729 = vmatpush1.bf16.msra.mxu0 %v514
    %730 = vmatprep.subr.bf16.mxu0 0
    %731 = vmatpush1.bf16.msra.mxu0 %v515
    %732 = vmatprep.mubr.bf16.mxu0 %v67
    %733 = vmatmul.mubr.bf16.gmra.mrb[0].mxu0 %v66
    %v734 = vpop.f32.mrb[0].mxu0
    %v735 = vadd.f32 %v695, %v734
    %v736 = vpop.f32.mrb[0].mxu0
    %v737 = vpop.f32.mrb[0].mxu0
    %v738 = vpop.f32.mrb[0].mxu0
    %739 = vdwg.mxu0
    %v740 = vld [vmem:[%s2] sm:$0xff]
    %v741 = vld [vmem:[%s2 + $0x8] sm:$0xff]
    %v742 = vld [vmem:[%s2 + $0x10] sm:$0xff]
    %v743 = vld [vmem:[%s2 + $0x18] sm:$0xff]
    %v744 = vld [vmem:[%s2 + $0x20] sm:$0xff]
    %v745 = vld [vmem:[%s2 + $0x28] sm:$0xff]
    %v746 = vld [vmem:[%s2 + $0x30] sm:$0xff]
    %v747 = vld [vmem:[%s2 + $0x38] sm:$0xff]
    %v756 = vcombine.high %v740, %v740
    %v758 = vunpack.c.l.s4 1966171168
    %v759 = vunpack.c.0.s8 %v758
    %v760 = vlaneseq
    %v761 = vshrl.u32 %v760, 7
    %v762 = vsub.s32 %v759, %v761
    %v763 = vrot.slane %v740, %v762
    %v765 = vunpack.c.l.s4 1966171168
    %v766 = vunpack.c.0.s8 %v765
    %v767 = vlaneseq
    %v768 = vshrl.u32 %v767, 7
    %v769 = vsub.s32 %v766, %v768
    %v770 = vrot.slane %v756, %v769
    %v771 = vcombine.high %v763, %v763
    %v772 = vcombine.high %v770, %v770
    %v774 = vunpack.c.l.s4 1966171168
    %v775 = vunpack.c.0.s8 %v774
    %v776 = vlaneseq
    %v777 = vshrl.u32 %v776, 7
    %v778 = vsub.s32 %v775, %v777
    %v779 = vrot.slane %v763, %v778
    %v781 = vunpack.c.l.s4 1966171168
    %v782 = vunpack.c.0.s8 %v781
    %v783 = vlaneseq
    %v784 = vshrl.u32 %v783, 7
    %v785 = vsub.s32 %v782, %v784
    %v786 = vrot.slane %v770, %v785
    %v788 = vunpack.c.l.s4 1966171168
    %v789 = vunpack.c.0.s8 %v788
    %v790 = vlaneseq
    %v791 = vshrl.u32 %v790, 7
    %v792 = vsub.s32 %v789, %v791
    %v793 = vrot.slane %v771, %v792
    %v795 = vunpack.c.l.s4 1966171168
    %v796 = vunpack.c.0.s8 %v795
    %v797 = vlaneseq
    %v798 = vshrl.u32 %v797, 7
    %v799 = vsub.s32 %v796, %v798
    %v800 = vrot.slane %v772, %v799
    %v801 = vcombine.high %v779, %v779
    %v802 = vcombine.high %v786, %v786
    %v803 = vcombine.high %v793, %v793
    %v804 = vcombine.high %v800, %v800
    %v805 = vcombine.high %v741, %v741
    %v807 = vunpack.c.l.s4 1966171168
    %v808 = vunpack.c.0.s8 %v807
    %v809 = vlaneseq
    %v810 = vshrl.u32 %v809, 7
    %v811 = vsub.s32 %v808, %v810
    %v812 = vrot.slane %v741, %v811
    %v814 = vunpack.c.l.s4 1966171168
    %v815 = vunpack.c.0.s8 %v814
    %v816 = vlaneseq
    %v817 = vshrl.u32 %v816, 7
    %v818 = vsub.s32 %v815, %v817
    %v819 = vrot.slane %v805, %v818
    %v820 = vcombine.high %v812, %v812
    %v821 = vcombine.high %v819, %v819
    %v823 = vunpack.c.l.s4 1966171168
    %v824 = vunpack.c.0.s8 %v823
    %v825 = vlaneseq
    %v826 = vshrl.u32 %v825, 7
    %v827 = vsub.s32 %v824, %v826
    %v828 = vrot.slane %v812, %v827
    %v830 = vunpack.c.l.s4 1966171168
    %v831 = vunpack.c.0.s8 %v830
    %v832 = vlaneseq
    %v833 = vshrl.u32 %v832, 7
    %v834 = vsub.s32 %v831, %v833
    %v835 = vrot.slane %v819, %v834
    %v837 = vunpack.c.l.s4 1966171168
    %v838 = vunpack.c.0.s8 %v837
    %v839 = vlaneseq
    %v840 = vshrl.u32 %v839, 7
    %v841 = vsub.s32 %v838, %v840
    %v842 = vrot.slane %v820, %v841
    %v844 = vunpack.c.l.s4 1966171168
    %v845 = vunpack.c.0.s8 %v844
    %v846 = vlaneseq
    %v847 = vshrl.u32 %v846, 7
    %v848 = vsub.s32 %v845, %v847
    %v849 = vrot.slane %v821, %v848
    %v850 = vcombine.high %v828, %v828
    %v851 = vcombine.high %v835, %v835
    %v852 = vcombine.high %v842, %v842
    %v853 = vcombine.high %v849, %v849
    %v854 = vcombine.high %v742, %v742
    %v856 = vunpack.c.l.s4 1966171168
    %v857 = vunpack.c.0.s8 %v856
    %v858 = vlaneseq
    %v859 = vshrl.u32 %v858, 7
    %v860 = vsub.s32 %v857, %v859
    %v861 = vrot.slane %v742, %v860
    %v863 = vunpack.c.l.s4 1966171168
    %v864 = vunpack.c.0.s8 %v863
    %v865 = vlaneseq
    %v866 = vshrl.u32 %v865, 7
    %v867 = vsub.s32 %v864, %v866
    %v868 = vrot.slane %v854, %v867
    %v869 = vcombine.high %v861, %v861
    %v870 = vcombine.high %v868, %v868
    %v872 = vunpack.c.l.s4 1966171168
    %v873 = vunpack.c.0.s8 %v872
    %v874 = vlaneseq
    %v875 = vshrl.u32 %v874, 7
    %v876 = vsub.s32 %v873, %v875
    %v877 = vrot.slane %v861, %v876
    %v879 = vunpack.c.l.s4 1966171168
    %v880 = vunpack.c.0.s8 %v879
    %v881 = vlaneseq
    %v882 = vshrl.u32 %v881, 7
    %v883 = vsub.s32 %v880, %v882
    %v884 = vrot.slane %v868, %v883
    %v886 = vunpack.c.l.s4 1966171168
    %v887 = vunpack.c.0.s8 %v886
    %v888 = vlaneseq
    %v889 = vshrl.u32 %v888, 7
    %v890 = vsub.s32 %v887, %v889
    %v891 = vrot.slane %v869, %v890
    %v893 = vunpack.c.l.s4 1966171168
    %v894 = vunpack.c.0.s8 %v893
    %v895 = vlaneseq
    %v896 = vshrl.u32 %v895, 7
    %v897 = vsub.s32 %v894, %v896
    %v898 = vrot.slane %v870, %v897
    %v899 = vcombine.high %v877, %v877
    %v900 = vcombine.high %v884, %v884
    %v901 = vcombine.high %v891, %v891
    %v902 = vcombine.high %v898, %v898
    %v903 = vcombine.high %v743, %v743
    %v905 = vunpack.c.l.s4 1966171168
    %v906 = vunpack.c.0.s8 %v905
    %v907 = vlaneseq
    %v908 = vshrl.u32 %v907, 7
    %v909 = vsub.s32 %v906, %v908
    %v910 = vrot.slane %v743, %v909
    %v912 = vunpack.c.l.s4 1966171168
    %v913 = vunpack.c.0.s8 %v912
    %v914 = vlaneseq
    %v915 = vshrl.u32 %v914, 7
    %v916 = vsub.s32 %v913, %v915
    %v917 = vrot.slane %v903, %v916
    %v918 = vcombine.high %v910, %v910
    %v919 = vcombine.high %v917, %v917
    %v921 = vunpack.c.l.s4 1966171168
    %v922 = vunpack.c.0.s8 %v921
    %v923 = vlaneseq
    %v924 = vshrl.u32 %v923, 7
    %v925 = vsub.s32 %v922, %v924
    %v926 = vrot.slane %v910, %v925
    %v928 = vunpack.c.l.s4 1966171168
    %v929 = vunpack.c.0.s8 %v928
    %v930 = vlaneseq
    %v931 = vshrl.u32 %v930, 7
    %v932 = vsub.s32 %v929, %v931
    %v933 = vrot.slane %v917, %v932
    %v935 = vunpack.c.l.s4 1966171168
    %v936 = vunpack.c.0.s8 %v935
    %v937 = vlaneseq
    %v938 = vshrl.u32 %v937, 7
    %v939 = vsub.s32 %v936, %v938
    %v940 = vrot.slane %v918, %v939
    %v942 = vunpack.c.l.s4 1966171168
    %v943 = vunpack.c.0.s8 %v942
    %v944 = vlaneseq
    %v945 = vshrl.u32 %v944, 7
    %v946 = vsub.s32 %v943, %v945
    %v947 = vrot.slane %v919, %v946
    %v948 = vcombine.high %v926, %v926
    %v949 = vcombine.high %v933, %v933
    %v950 = vcombine.high %v940, %v940
    %v951 = vcombine.high %v947, %v947
    %v952 = vcombine.high %v744, %v744
    %v954 = vunpack.c.l.s4 1966171168
    %v955 = vunpack.c.0.s8 %v954
    %v956 = vlaneseq
    %v957 = vshrl.u32 %v956, 7
    %v958 = vsub.s32 %v955, %v957
    %v959 = vrot.slane %v744, %v958
    %v961 = vunpack.c.l.s4 1966171168
    %v962 = vunpack.c.0.s8 %v961
    %v963 = vlaneseq
    %v964 = vshrl.u32 %v963, 7
    %v965 = vsub.s32 %v962, %v964
    %v966 = vrot.slane %v952, %v965
    %v967 = vcombine.high %v959, %v959
    %v968 = vcombine.high %v966, %v966
    %v970 = vunpack.c.l.s4 1966171168
    %v971 = vunpack.c.0.s8 %v970
    %v972 = vlaneseq
    %v973 = vshrl.u32 %v972, 7
    %v974 = vsub.s32 %v971, %v973
    %v975 = vrot.slane %v959, %v974
    %v977 = vunpack.c.l.s4 1966171168
    %v978 = vunpack.c.0.s8 %v977
    %v979 = vlaneseq
    %v980 = vshrl.u32 %v979, 7
    %v981 = vsub.s32 %v978, %v980
    %v982 = vrot.slane %v966, %v981
    %v984 = vunpack.c.l.s4 1966171168
    %v985 = vunpack.c.0.s8 %v984
    %v986 = vlaneseq
    %v987 = vshrl.u32 %v986, 7
    %v988 = vsub.s32 %v985, %v987
    %v989 = vrot.slane %v967, %v988
    %v991 = vunpack.c.l.s4 1966171168
    %v992 = vunpack.c.0.s8 %v991
    %v993 = vlaneseq
    %v994 = vshrl.u32 %v993, 7
    %v995 = vsub.s32 %v992, %v994
    %v996 = vrot.slane %v968, %v995
    %v997 = vcombine.high %v975, %v975
    %v998 = vcombine.high %v982, %v982
    %v999 = vcombine.high %v989, %v989
    %v1000 = vcombine.high %v996, %v996
    %v1001 = vcombine.high %v745, %v745
    %v1003 = vunpack.c.l.s4 1966171168
    %v1004 = vunpack.c.0.s8 %v1003
    %v1005 = vlaneseq
    %v1006 = vshrl.u32 %v1005, 7
    %v1007 = vsub.s32 %v1004, %v1006
    %v1008 = vrot.slane %v745, %v1007
    %v1010 = vunpack.c.l.s4 1966171168
    %v1011 = vunpack.c.0.s8 %v1010
    %v1012 = vlaneseq
    %v1013 = vshrl.u32 %v1012, 7
    %v1014 = vsub.s32 %v1011, %v1013
    %v1015 = vrot.slane %v1001, %v1014
    %v1016 = vcombine.high %v1008, %v1008
    %v1017 = vcombine.high %v1015, %v1015
    %v1019 = vunpack.c.l.s4 1966171168
    %v1020 = vunpack.c.0.s8 %v1019
    %v1021 = vlaneseq
    %v1022 = vshrl.u32 %v1021, 7
    %v1023 = vsub.s32 %v1020, %v1022
    %v1024 = vrot.slane %v1008, %v1023
    %v1026 = vunpack.c.l.s4 1966171168
    %v1027 = vunpack.c.0.s8 %v1026
    %v1028 = vlaneseq
    %v1029 = vshrl.u32 %v1028, 7
    %v1030 = vsub.s32 %v1027, %v1029
    %v1031 = vrot.slane %v1015, %v1030
    %v1033 = vunpack.c.l.s4 1966171168
    %v1034 = vunpack.c.0.s8 %v1033
    %v1035 = vlaneseq
    %v1036 = vshrl.u32 %v1035, 7
    %v1037 = vsub.s32 %v1034, %v1036
    %v1038 = vrot.slane %v1016, %v1037
    %v1040 = vunpack.c.l.s4 1966171168
    %v1041 = vunpack.c.0.s8 %v1040
    %v1042 = vlaneseq
    %v1043 = vshrl.u32 %v1042, 7
    %v1044 = vsub.s32 %v1041, %v1043
    %v1045 = vrot.slane %v1017, %v1044
    %v1046 = vcombine.high %v1024, %v1024
    %v1047 = vcombine.high %v1031, %v1031
    %v1048 = vcombine.high %v1038, %v1038
    %v1049 = vcombine.high %v1045, %v1045
    %v1050 = vcombine.high %v746, %v746
    %v1052 = vunpack.c.l.s4 1966171168
    %v1053 = vunpack.c.0.s8 %v1052
    %v1054 = vlaneseq
    %v1055 = vshrl.u32 %v1054, 7
    %v1056 = vsub.s32 %v1053, %v1055
    %v1057 = vrot.slane %v746, %v1056
    %v1059 = vunpack.c.l.s4 1966171168
    %v1060 = vunpack.c.0.s8 %v1059
    %v1061 = vlaneseq
    %v1062 = vshrl.u32 %v1061, 7
    %v1063 = vsub.s32 %v1060, %v1062
    %v1064 = vrot.slane %v1050, %v1063
    %v1065 = vcombine.high %v1057, %v1057
    %v1066 = vcombine.high %v1064, %v1064
    %v1068 = vunpack.c.l.s4 1966171168
    %v1069 = vunpack.c.0.s8 %v1068
    %v1070 = vlaneseq
    %v1071 = vshrl.u32 %v1070, 7
    %v1072 = vsub.s32 %v1069, %v1071
    %v1073 = vrot.slane %v1057, %v1072
    %v1075 = vunpack.c.l.s4 1966171168
    %v1076 = vunpack.c.0.s8 %v1075
    %v1077 = vlaneseq
    %v1078 = vshrl.u32 %v1077, 7
    %v1079 = vsub.s32 %v1076, %v1078
    %v1080 = vrot.slane %v1064, %v1079
    %v1082 = vunpack.c.l.s4 1966171168
    %v1083 = vunpack.c.0.s8 %v1082
    %v1084 = vlaneseq
    %v1085 = vshrl.u32 %v1084, 7
    %v1086 = vsub.s32 %v1083, %v1085
    %v1087 = vrot.slane %v1065, %v1086
    %v1089 = vunpack.c.l.s4 1966171168
    %v1090 = vunpack.c.0.s8 %v1089
    %v1091 = vlaneseq
    %v1092 = vshrl.u32 %v1091, 7
    %v1093 = vsub.s32 %v1090, %v1092
    %v1094 = vrot.slane %v1066, %v1093
    %v1095 = vcombine.high %v1073, %v1073
    %v1096 = vcombine.high %v1080, %v1080
    %v1097 = vcombine.high %v1087, %v1087
    %v1098 = vcombine.high %v1094, %v1094
    %v1099 = vcombine.high %v747, %v747
    %v1101 = vunpack.c.l.s4 1966171168
    %v1102 = vunpack.c.0.s8 %v1101
    %v1103 = vlaneseq
    %v1104 = vshrl.u32 %v1103, 7
    %v1105 = vsub.s32 %v1102, %v1104
    %v1106 = vrot.slane %v747, %v1105
    %v1108 = vunpack.c.l.s4 1966171168
    %v1109 = vunpack.c.0.s8 %v1108
    %v1110 = vlaneseq
    %v1111 = vshrl.u32 %v1110, 7
    %v1112 = vsub.s32 %v1109, %v1111
    %v1113 = vrot.slane %v1099, %v1112
    %v1114 = vcombine.high %v1106, %v1106
    %v1115 = vcombine.high %v1113, %v1113
    %v1117 = vunpack.c.l.s4 1966171168
    %v1118 = vunpack.c.0.s8 %v1117
    %v1119 = vlaneseq
    %v1120 = vshrl.u32 %v1119, 7
    %v1121 = vsub.s32 %v1118, %v1120
    %v1122 = vrot.slane %v1106, %v1121
    %v1124 = vunpack.c.l.s4 1966171168
    %v1125 = vunpack.c.0.s8 %v1124
    %v1126 = vlaneseq
    %v1127 = vshrl.u32 %v1126, 7
    %v1128 = vsub.s32 %v1125, %v1127
    %v1129 = vrot.slane %v1113, %v1128
    %v1131 = vunpack.c.l.s4 1966171168
    %v1132 = vunpack.c.0.s8 %v1131
    %v1133 = vlaneseq
    %v1134 = vshrl.u32 %v1133, 7
    %v1135 = vsub.s32 %v1132, %v1134
    %v1136 = vrot.slane %v1114, %v1135
    %v1138 = vunpack.c.l.s4 1966171168
    %v1139 = vunpack.c.0.s8 %v1138
    %v1140 = vlaneseq
    %v1141 = vshrl.u32 %v1140, 7
    %v1142 = vsub.s32 %v1139, %v1141
    %v1143 = vrot.slane %v1115, %v1142
    %v1144 = vcombine.high %v1122, %v1122
    %v1145 = vcombine.high %v1129, %v1129
    %v1146 = vcombine.high %v1136, %v1136
    %v1147 = vcombine.high %v1143, %v1143
    %v1148 = vlaneseq
    %v1149 = vshrl.u32 %v1148, 7
    %v1150 = vsub.s32 0, %v1149
    %v1151 = vrot.slane %v779, %v1150
    %v1152 = vlaneseq
    %v1153 = vshrl.u32 %v1152, 7
    %v1154 = vsub.s32 0, %v1153
    %v1155 = vrot.slane %v793, %v1154
    %v1156 = vlaneseq
    %v1157 = vshrl.u32 %v1156, 7
    %v1158 = vsub.s32 0, %v1157
    %v1159 = vrot.slane %v801, %v1158
    %v1160 = vlaneseq
    %v1161 = vshrl.u32 %v1160, 7
    %v1162 = vsub.s32 0, %v1161
    %v1163 = vrot.slane %v803, %v1162
    %v1164 = vlaneseq
    %v1165 = vshrl.u32 %v1164, 7
    %v1166 = vsub.s32 0, %v1165
    %v1167 = vrot.slane %v786, %v1166
    %v1168 = vlaneseq
    %v1169 = vshrl.u32 %v1168, 7
    %v1170 = vsub.s32 0, %v1169
    %v1171 = vrot.slane %v800, %v1170
    %v1172 = vlaneseq
    %v1173 = vshrl.u32 %v1172, 7
    %v1174 = vsub.s32 0, %v1173
    %v1175 = vrot.slane %v802, %v1174
    %v1176 = vlaneseq
    %v1177 = vshrl.u32 %v1176, 7
    %v1178 = vsub.s32 0, %v1177
    %v1179 = vrot.slane %v804, %v1178
    %v1180 = vlaneseq
    %v1181 = vshrl.u32 %v1180, 7
    %v1182 = vsub.s32 0, %v1181
    %v1183 = vrot.slane %v828, %v1182
    %v1184 = vlaneseq
    %v1185 = vshrl.u32 %v1184, 7
    %v1186 = vsub.s32 0, %v1185
    %v1187 = vrot.slane %v842, %v1186
    %v1188 = vlaneseq
    %v1189 = vshrl.u32 %v1188, 7
    %v1190 = vsub.s32 0, %v1189
    %v1191 = vrot.slane %v850, %v1190
    %v1192 = vlaneseq
    %v1193 = vshrl.u32 %v1192, 7
    %v1194 = vsub.s32 0, %v1193
    %v1195 = vrot.slane %v852, %v1194
    %v1196 = vlaneseq
    %v1197 = vshrl.u32 %v1196, 7
    %v1198 = vsub.s32 0, %v1197
    %v1199 = vrot.slane %v835, %v1198
    %v1200 = vlaneseq
    %v1201 = vshrl.u32 %v1200, 7
    %v1202 = vsub.s32 0, %v1201
    %v1203 = vrot.slane %v849, %v1202
    %v1204 = vlaneseq
    %v1205 = vshrl.u32 %v1204, 7
    %v1206 = vsub.s32 0, %v1205
    %v1207 = vrot.slane %v851, %v1206
    %v1208 = vlaneseq
    %v1209 = vshrl.u32 %v1208, 7
    %v1210 = vsub.s32 0, %v1209
    %v1211 = vrot.slane %v853, %v1210
    %v1212 = vlaneseq
    %v1213 = vshrl.u32 %v1212, 7
    %v1214 = vsub.s32 0, %v1213
    %v1215 = vrot.slane %v877, %v1214
    %v1216 = vlaneseq
    %v1217 = vshrl.u32 %v1216, 7
    %v1218 = vsub.s32 0, %v1217
    %v1219 = vrot.slane %v891, %v1218
    %v1220 = vlaneseq
    %v1221 = vshrl.u32 %v1220, 7
    %v1222 = vsub.s32 0, %v1221
    %v1223 = vrot.slane %v899, %v1222
    %v1224 = vlaneseq
    %v1225 = vshrl.u32 %v1224, 7
    %v1226 = vsub.s32 0, %v1225
    %v1227 = vrot.slane %v901, %v1226
    %v1228 = vlaneseq
    %v1229 = vshrl.u32 %v1228, 7
    %v1230 = vsub.s32 0, %v1229
    %v1231 = vrot.slane %v884, %v1230
    %v1232 = vlaneseq
    %v1233 = vshrl.u32 %v1232, 7
    %v1234 = vsub.s32 0, %v1233
    %v1235 = vrot.slane %v898, %v1234
    %v1236 = vlaneseq
    %v1237 = vshrl.u32 %v1236, 7
    %v1238 = vsub.s32 0, %v1237
    %v1239 = vrot.slane %v900, %v1238
    %v1240 = vlaneseq
    %v1241 = vshrl.u32 %v1240, 7
    %v1242 = vsub.s32 0, %v1241
    %v1243 = vrot.slane %v902, %v1242
    %v1244 = vlaneseq
    %v1245 = vshrl.u32 %v1244, 7
    %v1246 = vsub.s32 0, %v1245
    %v1247 = vrot.slane %v926, %v1246
    %v1248 = vlaneseq
    %v1249 = vshrl.u32 %v1248, 7
    %v1250 = vsub.s32 0, %v1249
    %v1251 = vrot.slane %v940, %v1250
    %v1252 = vlaneseq
    %v1253 = vshrl.u32 %v1252, 7
    %v1254 = vsub.s32 0, %v1253
    %v1255 = vrot.slane %v948, %v1254
    %v1256 = vlaneseq
    %v1257 = vshrl.u32 %v1256, 7
    %v1258 = vsub.s32 0, %v1257
    %v1259 = vrot.slane %v950, %v1258
    %v1260 = vlaneseq
    %v1261 = vshrl.u32 %v1260, 7
    %v1262 = vsub.s32 0, %v1261
    %v1263 = vrot.slane %v933, %v1262
    %v1264 = vlaneseq
    %v1265 = vshrl.u32 %v1264, 7
    %v1266 = vsub.s32 0, %v1265
    %v1267 = vrot.slane %v947, %v1266
    %v1268 = vlaneseq
    %v1269 = vshrl.u32 %v1268, 7
    %v1270 = vsub.s32 0, %v1269
    %v1271 = vrot.slane %v949, %v1270
    %v1272 = vlaneseq
    %v1273 = vshrl.u32 %v1272, 7
    %v1274 = vsub.s32 0, %v1273
    %v1275 = vrot.slane %v951, %v1274
    %v1276 = vlaneseq
    %v1277 = vshrl.u32 %v1276, 7
    %v1278 = vsub.s32 0, %v1277
    %v1279 = vrot.slane %v975, %v1278
    %v1280 = vlaneseq
    %v1281 = vshrl.u32 %v1280, 7
    %v1282 = vsub.s32 0, %v1281
    %v1283 = vrot.slane %v989, %v1282
    %v1284 = vlaneseq
    %v1285 = vshrl.u32 %v1284, 7
    %v1286 = vsub.s32 0, %v1285
    %v1287 = vrot.slane %v997, %v1286
    %v1288 = vlaneseq
    %v1289 = vshrl.u32 %v1288, 7
    %v1290 = vsub.s32 0, %v1289
    %v1291 = vrot.slane %v999, %v1290
    %v1292 = vlaneseq
    %v1293 = vshrl.u32 %v1292, 7
    %v1294 = vsub.s32 0, %v1293
    %v1295 = vrot.slane %v982, %v1294
    %v1296 = vlaneseq
    %v1297 = vshrl.u32 %v1296, 7
    %v1298 = vsub.s32 0, %v1297
    %v1299 = vrot.slane %v996, %v1298
    %v1300 = vlaneseq
    %v1301 = vshrl.u32 %v1300, 7
    %v1302 = vsub.s32 0, %v1301
    %v1303 = vrot.slane %v998, %v1302
    %v1304 = vlaneseq
    %v1305 = vshrl.u32 %v1304, 7
    %v1306 = vsub.s32 0, %v1305
    %v1307 = vrot.slane %v1000, %v1306
    %v1308 = vlaneseq
    %v1309 = vshrl.u32 %v1308, 7
    %v1310 = vsub.s32 0, %v1309
    %v1311 = vrot.slane %v1024, %v1310
    %v1312 = vlaneseq
    %v1313 = vshrl.u32 %v1312, 7
    %v1314 = vsub.s32 0, %v1313
    %v1315 = vrot.slane %v1038, %v1314
    %v1316 = vlaneseq
    %v1317 = vshrl.u32 %v1316, 7
    %v1318 = vsub.s32 0, %v1317
    %v1319 = vrot.slane %v1046, %v1318
    %v1320 = vlaneseq
    %v1321 = vshrl.u32 %v1320, 7
    %v1322 = vsub.s32 0, %v1321
    %v1323 = vrot.slane %v1048, %v1322
    %v1324 = vlaneseq
    %v1325 = vshrl.u32 %v1324, 7
    %v1326 = vsub.s32 0, %v1325
    %v1327 = vrot.slane %v1031, %v1326
    %v1328 = vlaneseq
    %v1329 = vshrl.u32 %v1328, 7
    %v1330 = vsub.s32 0, %v1329
    %v1331 = vrot.slane %v1045, %v1330
    %v1332 = vlaneseq
    %v1333 = vshrl.u32 %v1332, 7
    %v1334 = vsub.s32 0, %v1333
    %v1335 = vrot.slane %v1047, %v1334
    %v1336 = vlaneseq
    %v1337 = vshrl.u32 %v1336, 7
    %v1338 = vsub.s32 0, %v1337
    %v1339 = vrot.slane %v1049, %v1338
    %v1340 = vlaneseq
    %v1341 = vshrl.u32 %v1340, 7
    %v1342 = vsub.s32 0, %v1341
    %v1343 = vrot.slane %v1073, %v1342
    %v1344 = vlaneseq
    %v1345 = vshrl.u32 %v1344, 7
    %v1346 = vsub.s32 0, %v1345
    %v1347 = vrot.slane %v1087, %v1346
    %v1348 = vlaneseq
    %v1349 = vshrl.u32 %v1348, 7
    %v1350 = vsub.s32 0, %v1349
    %v1351 = vrot.slane %v1095, %v1350
    %v1352 = vlaneseq
    %v1353 = vshrl.u32 %v1352, 7
    %v1354 = vsub.s32 0, %v1353
    %v1355 = vrot.slane %v1097, %v1354
    %v1356 = vlaneseq
    %v1357 = vshrl.u32 %v1356, 7
    %v1358 = vsub.s32 0, %v1357
    %v1359 = vrot.slane %v1080, %v1358
    %v1360 = vlaneseq
    %v1361 = vshrl.u32 %v1360, 7
    %v1362 = vsub.s32 0, %v1361
    %v1363 = vrot.slane %v1094, %v1362
    %v1364 = vlaneseq
    %v1365 = vshrl.u32 %v1364, 7
    %v1366 = vsub.s32 0, %v1365
    %v1367 = vrot.slane %v1096, %v1366
    %v1368 = vlaneseq
    %v1369 = vshrl.u32 %v1368, 7
    %v1370 = vsub.s32 0, %v1369
    %v1371 = vrot.slane %v1098, %v1370
    %v1372 = vlaneseq
    %v1373 = vshrl.u32 %v1372, 7
    %v1374 = vsub.s32 0, %v1373
    %v1375 = vrot.slane %v1122, %v1374
    %v1376 = vlaneseq
    %v1377 = vshrl.u32 %v1376, 7
    %v1378 = vsub.s32 0, %v1377
    %v1379 = vrot.slane %v1136, %v1378
    %v1380 = vlaneseq
    %v1381 = vshrl.u32 %v1380, 7
    %v1382 = vsub.s32 0, %v1381
    %v1383 = vrot.slane %v1144, %v1382
    %v1384 = vlaneseq
    %v1385 = vshrl.u32 %v1384, 7
    %v1386 = vsub.s32 0, %v1385
    %v1387 = vrot.slane %v1146, %v1386
    %v1388 = vlaneseq
    %v1389 = vshrl.u32 %v1388, 7
    %v1390 = vsub.s32 0, %v1389
    %v1391 = vrot.slane %v1129, %v1390
    %v1392 = vlaneseq
    %v1393 = vshrl.u32 %v1392, 7
    %v1394 = vsub.s32 0, %v1393
    %v1395 = vrot.slane %v1143, %v1394
    %v1396 = vlaneseq
    %v1397 = vshrl.u32 %v1396, 7
    %v1398 = vsub.s32 0, %v1397
    %v1399 = vrot.slane %v1145, %v1398
    %v1400 = vlaneseq
    %v1401 = vshrl.u32 %v1400, 7
    %v1402 = vsub.s32 0, %v1401
    %v1403 = vrot.slane %v1147, %v1402
    %1404 = vset.pattern.permute.xlu0 0
    %1405 = vperm.xlu0 %1404, %v1151
    %v1406 = vpop.permute.xlu0 %1405
    %1408 = vset.pattern.permute.xlu0 0
    %1409 = vperm.xlu0 %1408, %v1155
    %v1410 = vpop.permute.xlu0 %1409
    %1412 = vset.pattern.permute.xlu0 0
    %1413 = vperm.xlu0 %1412, %v1159
    %v1414 = vpop.permute.xlu0 %1413
    %1416 = vset.pattern.permute.xlu0 0
    %1417 = vperm.xlu0 %1416, %v1163
    %v1418 = vpop.permute.xlu0 %1417
    %1420 = vset.pattern.permute.xlu0 0
    %1421 = vperm.xlu0 %1420, %v1167
    %v1422 = vpop.permute.xlu0 %1421
    %1424 = vset.pattern.permute.xlu0 0
    %1425 = vperm.xlu0 %1424, %v1171
    %v1426 = vpop.permute.xlu0 %1425
    %1428 = vset.pattern.permute.xlu0 0
    %1429 = vperm.xlu0 %1428, %v1175
    %v1430 = vpop.permute.xlu0 %1429
    %1432 = vset.pattern.permute.xlu0 0
    %1433 = vperm.xlu0 %1432, %v1179
    %v1434 = vpop.permute.xlu0 %1433
    %1436 = vset.pattern.permute.xlu0 0
    %1437 = vperm.xlu0 %1436, %v1183
    %v1438 = vpop.permute.xlu0 %1437
    %1440 = vset.pattern.permute.xlu0 0
    %1441 = vperm.xlu0 %1440, %v1187
    %v1442 = vpop.permute.xlu0 %1441
    %1444 = vset.pattern.permute.xlu0 0
    %1445 = vperm.xlu0 %1444, %v1191
    %v1446 = vpop.permute.xlu0 %1445
    %1448 = vset.pattern.permute.xlu0 0
    %1449 = vperm.xlu0 %1448, %v1195
    %v1450 = vpop.permute.xlu0 %1449
    %1452 = vset.pattern.permute.xlu0 0
    %1453 = vperm.xlu0 %1452, %v1199
    %v1454 = vpop.permute.xlu0 %1453
    %1456 = vset.pattern.permute.xlu0 0
    %1457 = vperm.xlu0 %1456, %v1203
    %v1458 = vpop.permute.xlu0 %1457
    %1460 = vset.pattern.permute.xlu0 0
    %1461 = vperm.xlu0 %1460, %v1207
    %v1462 = vpop.permute.xlu0 %1461
    %1464 = vset.pattern.permute.xlu0 0
    %1465 = vperm.xlu0 %1464, %v1211
    %v1466 = vpop.permute.xlu0 %1465
    %1468 = vset.pattern.permute.xlu0 0
    %1469 = vperm.xlu0 %1468, %v1215
    %v1470 = vpop.permute.xlu0 %1469
    %1472 = vset.pattern.permute.xlu0 0
    %1473 = vperm.xlu0 %1472, %v1219
    %v1474 = vpop.permute.xlu0 %1473
    %1476 = vset.pattern.permute.xlu0 0
    %1477 = vperm.xlu0 %1476, %v1223
    %v1478 = vpop.permute.xlu0 %1477
    %1480 = vset.pattern.permute.xlu0 0
    %1481 = vperm.xlu0 %1480, %v1227
    %v1482 = vpop.permute.xlu0 %1481
    %1484 = vset.pattern.permute.xlu0 0
    %1485 = vperm.xlu0 %1484, %v1231
    %v1486 = vpop.permute.xlu0 %1485
    %1488 = vset.pattern.permute.xlu0 0
    %1489 = vperm.xlu0 %1488, %v1235
    %v1490 = vpop.permute.xlu0 %1489
    %1492 = vset.pattern.permute.xlu0 0
    %1493 = vperm.xlu0 %1492, %v1239
    %v1494 = vpop.permute.xlu0 %1493
    %1496 = vset.pattern.permute.xlu0 0
    %1497 = vperm.xlu0 %1496, %v1243
    %v1498 = vpop.permute.xlu0 %1497
    %1500 = vset.pattern.permute.xlu0 0
    %1501 = vperm.xlu0 %1500, %v1247
    %v1502 = vpop.permute.xlu0 %1501
    %1504 = vset.pattern.permute.xlu0 0
    %1505 = vperm.xlu0 %1504, %v1251
    %v1506 = vpop.permute.xlu0 %1505
    %1508 = vset.pattern.permute.xlu0 0
    %1509 = vperm.xlu0 %1508, %v1255
    %v1510 = vpop.permute.xlu0 %1509
    %1512 = vset.pattern.permute.xlu0 0
    %1513 = vperm.xlu0 %1512, %v1259
    %v1514 = vpop.permute.xlu0 %1513
    %1516 = vset.pattern.permute.xlu0 0
    %1517 = vperm.xlu0 %1516, %v1263
    %v1518 = vpop.permute.xlu0 %1517
    %1520 = vset.pattern.permute.xlu0 0
    %1521 = vperm.xlu0 %1520, %v1267
    %v1522 = vpop.permute.xlu0 %1521
    %1524 = vset.pattern.permute.xlu0 0
    %1525 = vperm.xlu0 %1524, %v1271
    %v1526 = vpop.permute.xlu0 %1525
    %1528 = vset.pattern.permute.xlu0 0
    %1529 = vperm.xlu0 %1528, %v1275
    %v1530 = vpop.permute.xlu0 %1529
    %1532 = vset.pattern.permute.xlu0 0
    %1533 = vperm.xlu0 %1532, %v1279
    %v1534 = vpop.permute.xlu0 %1533
    %1536 = vset.pattern.permute.xlu0 0
    %1537 = vperm.xlu0 %1536, %v1283
    %v1538 = vpop.permute.xlu0 %1537
    %1540 = vset.pattern.permute.xlu0 0
    %1541 = vperm.xlu0 %1540, %v1287
    %v1542 = vpop.permute.xlu0 %1541
    %1544 = vset.pattern.permute.xlu0 0
    %1545 = vperm.xlu0 %1544, %v1291
    %v1546 = vpop.permute.xlu0 %1545
    %1548 = vset.pattern.permute.xlu0 0
    %1549 = vperm.xlu0 %1548, %v1295
    %v1550 = vpop.permute.xlu0 %1549
    %1552 = vset.pattern.permute.xlu0 0
    %1553 = vperm.xlu0 %1552, %v1299
    %v1554 = vpop.permute.xlu0 %1553
    %1556 = vset.pattern.permute.xlu0 0
    %1557 = vperm.xlu0 %1556, %v1303
    %v1558 = vpop.permute.xlu0 %1557
    %1560 = vset.pattern.permute.xlu0 0
    %1561 = vperm.xlu0 %1560, %v1307
    %v1562 = vpop.permute.xlu0 %1561
    %1564 = vset.pattern.permute.xlu0 0
    %1565 = vperm.xlu0 %1564, %v1311
    %v1566 = vpop.permute.xlu0 %1565
    %1568 = vset.pattern.permute.xlu0 0
    %1569 = vperm.xlu0 %1568, %v1315
    %v1570 = vpop.permute.xlu0 %1569
    %1572 = vset.pattern.permute.xlu0 0
    %1573 = vperm.xlu0 %1572, %v1319
    %v1574 = vpop.permute.xlu0 %1573
    %1576 = vset.pattern.permute.xlu0 0
    %1577 = vperm.xlu0 %1576, %v1323
    %v1578 = vpop.permute.xlu0 %1577
    %1580 = vset.pattern.permute.xlu0 0
    %1581 = vperm.xlu0 %1580, %v1327
    %v1582 = vpop.permute.xlu0 %1581
    %1584 = vset.pattern.permute.xlu0 0
    %1585 = vperm.xlu0 %1584, %v1331
    %v1586 = vpop.permute.xlu0 %1585
    %1588 = vset.pattern.permute.xlu0 0
    %1589 = vperm.xlu0 %1588, %v1335
    %v1590 = vpop.permute.xlu0 %1589
    %1592 = vset.pattern.permute.xlu0 0
    %1593 = vperm.xlu0 %1592, %v1339
    %v1594 = vpop.permute.xlu0 %1593
    %1596 = vset.pattern.permute.xlu0 0
    %1597 = vperm.xlu0 %1596, %v1343
    %v1598 = vpop.permute.xlu0 %1597
    %1600 = vset.pattern.permute.xlu0 0
    %1601 = vperm.xlu0 %1600, %v1347
    %v1602 = vpop.permute.xlu0 %1601
    %1604 = vset.pattern.permute.xlu0 0
    %1605 = vperm.xlu0 %1604, %v1351
    %v1606 = vpop.permute.xlu0 %1605
    %1608 = vset.pattern.permute.xlu0 0
    %1609 = vperm.xlu0 %1608, %v1355
    %v1610 = vpop.permute.xlu0 %1609
    %1612 = vset.pattern.permute.xlu0 0
    %1613 = vperm.xlu0 %1612, %v1359
    %v1614 = vpop.permute.xlu0 %1613
    %1616 = vset.pattern.permute.xlu0 0
    %1617 = vperm.xlu0 %1616, %v1363
    %v1618 = vpop.permute.xlu0 %1617
    %1620 = vset.pattern.permute.xlu0 0
    %1621 = vperm.xlu0 %1620, %v1367
    %v1622 = vpop.permute.xlu0 %1621
    %1624 = vset.pattern.permute.xlu0 0
    %1625 = vperm.xlu0 %1624, %v1371
    %v1626 = vpop.permute.xlu0 %1625
    %1628 = vset.pattern.permute.xlu0 0
    %1629 = vperm.xlu0 %1628, %v1375
    %v1630 = vpop.permute.xlu0 %1629
    %1632 = vset.pattern.permute.xlu0 0
    %1633 = vperm.xlu0 %1632, %v1379
    %v1634 = vpop.permute.xlu0 %1633
    %1636 = vset.pattern.permute.xlu0 0
    %1637 = vperm.xlu0 %1636, %v1383
    %v1638 = vpop.permute.xlu0 %1637
    %1640 = vset.pattern.permute.xlu0 0
    %1641 = vperm.xlu0 %1640, %v1387
    %v1642 = vpop.permute.xlu0 %1641
    %1644 = vset.pattern.permute.xlu0 0
    %1645 = vperm.xlu0 %1644, %v1391
    %v1646 = vpop.permute.xlu0 %1645
    %1648 = vset.pattern.permute.xlu0 0
    %1649 = vperm.xlu0 %1648, %v1395
    %v1650 = vpop.permute.xlu0 %1649
    %1652 = vset.pattern.permute.xlu0 0
    %1653 = vperm.xlu0 %1652, %v1399
    %v1654 = vpop.permute.xlu0 %1653
    %1656 = vset.pattern.permute.xlu0 0
    %1657 = vperm.xlu0 %1656, %v1403
    %v1658 = vpop.permute.xlu0 %1657
    %v1660 = vmul.f32 %v1406, %v735
    %v1661 = vmul.f32 %v1410, %v735
    %v1662 = vmul.f32 %v1414, %v735
    %v1663 = vmul.f32 %v1418, %v735
    %v1664 = vmul.f32 %v1422, %v735
    %v1665 = vmul.f32 %v1426, %v735
    %v1666 = vmul.f32 %v1430, %v735
    %v1667 = vmul.f32 %v1434, %v735
    %v1668 = vmul.f32 %v1438, %v735
    %v1669 = vmul.f32 %v1442, %v735
    %v1670 = vmul.f32 %v1446, %v735
    %v1671 = vmul.f32 %v1450, %v735
    %v1672 = vmul.f32 %v1454, %v735
    %v1673 = vmul.f32 %v1458, %v735
    %v1674 = vmul.f32 %v1462, %v735
    %v1675 = vmul.f32 %v1466, %v735
    %v1676 = vmul.f32 %v1470, %v735
    %v1677 = vmul.f32 %v1474, %v735
    %v1678 = vmul.f32 %v1478, %v735
    %v1679 = vmul.f32 %v1482, %v735
    %v1680 = vmul.f32 %v1486, %v735
    %v1681 = vmul.f32 %v1490, %v735
    %v1682 = vmul.f32 %v1494, %v735
    %v1683 = vmul.f32 %v1498, %v735
    %v1684 = vmul.f32 %v1502, %v735
    %v1685 = vmul.f32 %v1506, %v735
    %v1686 = vmul.f32 %v1510, %v735
    %v1687 = vmul.f32 %v1514, %v735
    %v1688 = vmul.f32 %v1518, %v735
    %v1689 = vmul.f32 %v1522, %v735
    %v1690 = vmul.f32 %v1526, %v735
    %v1691 = vmul.f32 %v1530, %v735
    %v1692 = vmul.f32 %v1534, %v735
    %v1693 = vmul.f32 %v1538, %v735
    %v1694 = vmul.f32 %v1542, %v735
    %v1695 = vmul.f32 %v1546, %v735
    %v1696 = vmul.f32 %v1550, %v735
    %v1697 = vmul.f32 %v1554, %v735
    %v1698 = vmul.f32 %v1558, %v735
    %v1699 = vmul.f32 %v1562, %v735
    %v1700 = vmul.f32 %v1566, %v735
    %v1701 = vmul.f32 %v1570, %v735
    %v1702 = vmul.f32 %v1574, %v735
    %v1703 = vmul.f32 %v1578, %v735
    %v1704 = vmul.f32 %v1582, %v735
    %v1705 = vmul.f32 %v1586, %v735
    %v1706 = vmul.f32 %v1590, %v735
    %v1707 = vmul.f32 %v1594, %v735
    %v1708 = vmul.f32 %v1598, %v735
    %v1709 = vmul.f32 %v1602, %v735
    %v1710 = vmul.f32 %v1606, %v735
    %v1711 = vmul.f32 %v1610, %v735
    %v1712 = vmul.f32 %v1614, %v735
    %v1713 = vmul.f32 %v1618, %v735
    %v1714 = vmul.f32 %v1622, %v735
    %v1715 = vmul.f32 %v1626, %v735
    %v1716 = vmul.f32 %v1630, %v735
    %v1717 = vmul.f32 %v1634, %v735
    %v1718 = vmul.f32 %v1638, %v735
    %v1719 = vmul.f32 %v1642, %v735
    %v1720 = vmul.f32 %v1646, %v735
    %v1721 = vmul.f32 %v1650, %v735
    %v1722 = vmul.f32 %v1654, %v735
    %v1723 = vmul.f32 %v1658, %v735
    %v1724 = vld [vmem:[%s3] sm:$0xff]
    %v1725 = vld [vmem:[%s3 + $0x8] sm:$0xff]
    %v1726 = vld [vmem:[%s3 + $0x10] sm:$0xff]
    %v1727 = vld [vmem:[%s3 + $0x18] sm:$0xff]
    %v1728 = vld [vmem:[%s3 + $0x20] sm:$0xff]
    %v1729 = vld [vmem:[%s3 + $0x28] sm:$0xff]
    %v1730 = vld [vmem:[%s3 + $0x30] sm:$0xff]
    %v1731 = vld [vmem:[%s3 + $0x38] sm:$0xff]
    %v1740 = vcombine.high %v1724, %v1724
    %v1742 = vunpack.c.l.s4 1966171168
    %v1743 = vunpack.c.0.s8 %v1742
    %v1744 = vlaneseq
    %v1745 = vshrl.u32 %v1744, 7
    %v1746 = vsub.s32 %v1743, %v1745
    %v1747 = vrot.slane %v1724, %v1746
    %v1749 = vunpack.c.l.s4 1966171168
    %v1750 = vunpack.c.0.s8 %v1749
    %v1751 = vlaneseq
    %v1752 = vshrl.u32 %v1751, 7
    %v1753 = vsub.s32 %v1750, %v1752
    %v1754 = vrot.slane %v1740, %v1753
    %v1755 = vcombine.high %v1747, %v1747
    %v1756 = vcombine.high %v1754, %v1754
    %v1758 = vunpack.c.l.s4 1966171168
    %v1759 = vunpack.c.0.s8 %v1758
    %v1760 = vlaneseq
    %v1761 = vshrl.u32 %v1760, 7
    %v1762 = vsub.s32 %v1759, %v1761
    %v1763 = vrot.slane %v1747, %v1762
    %v1765 = vunpack.c.l.s4 1966171168
    %v1766 = vunpack.c.0.s8 %v1765
    %v1767 = vlaneseq
    %v1768 = vshrl.u32 %v1767, 7
    %v1769 = vsub.s32 %v1766, %v1768
    %v1770 = vrot.slane %v1754, %v1769
    %v1772 = vunpack.c.l.s4 1966171168
    %v1773 = vunpack.c.0.s8 %v1772
    %v1774 = vlaneseq
    %v1775 = vshrl.u32 %v1774, 7
    %v1776 = vsub.s32 %v1773, %v1775
    %v1777 = vrot.slane %v1755, %v1776
    %v1779 = vunpack.c.l.s4 1966171168
    %v1780 = vunpack.c.0.s8 %v1779
    %v1781 = vlaneseq
    %v1782 = vshrl.u32 %v1781, 7
    %v1783 = vsub.s32 %v1780, %v1782
    %v1784 = vrot.slane %v1756, %v1783
    %v1785 = vcombine.high %v1763, %v1763
    %v1786 = vcombine.high %v1770, %v1770
    %v1787 = vcombine.high %v1777, %v1777
    %v1788 = vcombine.high %v1784, %v1784
    %v1789 = vcombine.high %v1725, %v1725
    %v1791 = vunpack.c.l.s4 1966171168
    %v1792 = vunpack.c.0.s8 %v1791
    %v1793 = vlaneseq
    %v1794 = vshrl.u32 %v1793, 7
    %v1795 = vsub.s32 %v1792, %v1794
    %v1796 = vrot.slane %v1725, %v1795
    %v1798 = vunpack.c.l.s4 1966171168
    %v1799 = vunpack.c.0.s8 %v1798
    %v1800 = vlaneseq
    %v1801 = vshrl.u32 %v1800, 7
    %v1802 = vsub.s32 %v1799, %v1801
    %v1803 = vrot.slane %v1789, %v1802
    %v1804 = vcombine.high %v1796, %v1796
    %v1805 = vcombine.high %v1803, %v1803
    %v1807 = vunpack.c.l.s4 1966171168
    %v1808 = vunpack.c.0.s8 %v1807
    %v1809 = vlaneseq
    %v1810 = vshrl.u32 %v1809, 7
    %v1811 = vsub.s32 %v1808, %v1810
    %v1812 = vrot.slane %v1796, %v1811
    %v1814 = vunpack.c.l.s4 1966171168
    %v1815 = vunpack.c.0.s8 %v1814
    %v1816 = vlaneseq
    %v1817 = vshrl.u32 %v1816, 7
    %v1818 = vsub.s32 %v1815, %v1817
    %v1819 = vrot.slane %v1803, %v1818
    %v1821 = vunpack.c.l.s4 1966171168
    %v1822 = vunpack.c.0.s8 %v1821
    %v1823 = vlaneseq
    %v1824 = vshrl.u32 %v1823, 7
    %v1825 = vsub.s32 %v1822, %v1824
    %v1826 = vrot.slane %v1804, %v1825
    %v1828 = vunpack.c.l.s4 1966171168
    %v1829 = vunpack.c.0.s8 %v1828
    %v1830 = vlaneseq
    %v1831 = vshrl.u32 %v1830, 7
    %v1832 = vsub.s32 %v1829, %v1831
    %v1833 = vrot.slane %v1805, %v1832
    %v1834 = vcombine.high %v1812, %v1812
    %v1835 = vcombine.high %v1819, %v1819
    %v1836 = vcombine.high %v1826, %v1826
    %v1837 = vcombine.high %v1833, %v1833
    %v1838 = vcombine.high %v1726, %v1726
    %v1840 = vunpack.c.l.s4 1966171168
    %v1841 = vunpack.c.0.s8 %v1840
    %v1842 = vlaneseq
    %v1843 = vshrl.u32 %v1842, 7
    %v1844 = vsub.s32 %v1841, %v1843
    %v1845 = vrot.slane %v1726, %v1844
    %v1847 = vunpack.c.l.s4 1966171168
    %v1848 = vunpack.c.0.s8 %v1847
    %v1849 = vlaneseq
    %v1850 = vshrl.u32 %v1849, 7
    %v1851 = vsub.s32 %v1848, %v1850
    %v1852 = vrot.slane %v1838, %v1851
    %v1853 = vcombine.high %v1845, %v1845
    %v1854 = vcombine.high %v1852, %v1852
    %v1856 = vunpack.c.l.s4 1966171168
    %v1857 = vunpack.c.0.s8 %v1856
    %v1858 = vlaneseq
    %v1859 = vshrl.u32 %v1858, 7
    %v1860 = vsub.s32 %v1857, %v1859
    %v1861 = vrot.slane %v1845, %v1860
    %v1863 = vunpack.c.l.s4 1966171168
    %v1864 = vunpack.c.0.s8 %v1863
    %v1865 = vlaneseq
    %v1866 = vshrl.u32 %v1865, 7
    %v1867 = vsub.s32 %v1864, %v1866
    %v1868 = vrot.slane %v1852, %v1867
    %v1870 = vunpack.c.l.s4 1966171168
    %v1871 = vunpack.c.0.s8 %v1870
    %v1872 = vlaneseq
    %v1873 = vshrl.u32 %v1872, 7
    %v1874 = vsub.s32 %v1871, %v1873
    %v1875 = vrot.slane %v1853, %v1874
    %v1877 = vunpack.c.l.s4 1966171168
    %v1878 = vunpack.c.0.s8 %v1877
    %v1879 = vlaneseq
    %v1880 = vshrl.u32 %v1879, 7
    %v1881 = vsub.s32 %v1878, %v1880
    %v1882 = vrot.slane %v1854, %v1881
    %v1883 = vcombine.high %v1861, %v1861
    %v1884 = vcombine.high %v1868, %v1868
    %v1885 = vcombine.high %v1875, %v1875
    %v1886 = vcombine.high %v1882, %v1882
    %v1887 = vcombine.high %v1727, %v1727
    %v1889 = vunpack.c.l.s4 1966171168
    %v1890 = vunpack.c.0.s8 %v1889
    %v1891 = vlaneseq
    %v1892 = vshrl.u32 %v1891, 7
    %v1893 = vsub.s32 %v1890, %v1892
    %v1894 = vrot.slane %v1727, %v1893
    %v1896 = vunpack.c.l.s4 1966171168
    %v1897 = vunpack.c.0.s8 %v1896
    %v1898 = vlaneseq
    %v1899 = vshrl.u32 %v1898, 7
    %v1900 = vsub.s32 %v1897, %v1899
    %v1901 = vrot.slane %v1887, %v1900
    %v1902 = vcombine.high %v1894, %v1894
    %v1903 = vcombine.high %v1901, %v1901
    %v1905 = vunpack.c.l.s4 1966171168
    %v1906 = vunpack.c.0.s8 %v1905
    %v1907 = vlaneseq
    %v1908 = vshrl.u32 %v1907, 7
    %v1909 = vsub.s32 %v1906, %v1908
    %v1910 = vrot.slane %v1894, %v1909
    %v1912 = vunpack.c.l.s4 1966171168
    %v1913 = vunpack.c.0.s8 %v1912
    %v1914 = vlaneseq
    %v1915 = vshrl.u32 %v1914, 7
    %v1916 = vsub.s32 %v1913, %v1915
    %v1917 = vrot.slane %v1901, %v1916
    %v1919 = vunpack.c.l.s4 1966171168
    %v1920 = vunpack.c.0.s8 %v1919
    %v1921 = vlaneseq
    %v1922 = vshrl.u32 %v1921, 7
    %v1923 = vsub.s32 %v1920, %v1922
    %v1924 = vrot.slane %v1902, %v1923
    %v1926 = vunpack.c.l.s4 1966171168
    %v1927 = vunpack.c.0.s8 %v1926
    %v1928 = vlaneseq
    %v1929 = vshrl.u32 %v1928, 7
    %v1930 = vsub.s32 %v1927, %v1929
    %v1931 = vrot.slane %v1903, %v1930
    %v1932 = vcombine.high %v1910, %v1910
    %v1933 = vcombine.high %v1917, %v1917
    %v1934 = vcombine.high %v1924, %v1924
    %v1935 = vcombine.high %v1931, %v1931
    %v1936 = vcombine.high %v1728, %v1728
    %v1938 = vunpack.c.l.s4 1966171168
    %v1939 = vunpack.c.0.s8 %v1938
    %v1940 = vlaneseq
    %v1941 = vshrl.u32 %v1940, 7
    %v1942 = vsub.s32 %v1939, %v1941
    %v1943 = vrot.slane %v1728, %v1942
    %v1945 = vunpack.c.l.s4 1966171168
    %v1946 = vunpack.c.0.s8 %v1945
    %v1947 = vlaneseq
    %v1948 = vshrl.u32 %v1947, 7
    %v1949 = vsub.s32 %v1946, %v1948
    %v1950 = vrot.slane %v1936, %v1949
    %v1951 = vcombine.high %v1943, %v1943
    %v1952 = vcombine.high %v1950, %v1950
    %v1954 = vunpack.c.l.s4 1966171168
    %v1955 = vunpack.c.0.s8 %v1954
    %v1956 = vlaneseq
    %v1957 = vshrl.u32 %v1956, 7
    %v1958 = vsub.s32 %v1955, %v1957
    %v1959 = vrot.slane %v1943, %v1958
    %v1961 = vunpack.c.l.s4 1966171168
    %v1962 = vunpack.c.0.s8 %v1961
    %v1963 = vlaneseq
    %v1964 = vshrl.u32 %v1963, 7
    %v1965 = vsub.s32 %v1962, %v1964
    %v1966 = vrot.slane %v1950, %v1965
    %v1968 = vunpack.c.l.s4 1966171168
    %v1969 = vunpack.c.0.s8 %v1968
    %v1970 = vlaneseq
    %v1971 = vshrl.u32 %v1970, 7
    %v1972 = vsub.s32 %v1969, %v1971
    %v1973 = vrot.slane %v1951, %v1972
    %v1975 = vunpack.c.l.s4 1966171168
    %v1976 = vunpack.c.0.s8 %v1975
    %v1977 = vlaneseq
    %v1978 = vshrl.u32 %v1977, 7
    %v1979 = vsub.s32 %v1976, %v1978
    %v1980 = vrot.slane %v1952, %v1979
    %v1981 = vcombine.high %v1959, %v1959
    %v1982 = vcombine.high %v1966, %v1966
    %v1983 = vcombine.high %v1973, %v1973
    %v1984 = vcombine.high %v1980, %v1980
    %v1985 = vcombine.high %v1729, %v1729
    %v1987 = vunpack.c.l.s4 1966171168
    %v1988 = vunpack.c.0.s8 %v1987
    %v1989 = vlaneseq
    %v1990 = vshrl.u32 %v1989, 7
    %v1991 = vsub.s32 %v1988, %v1990
    %v1992 = vrot.slane %v1729, %v1991
    %v1994 = vunpack.c.l.s4 1966171168
    %v1995 = vunpack.c.0.s8 %v1994
    %v1996 = vlaneseq
    %v1997 = vshrl.u32 %v1996, 7
    %v1998 = vsub.s32 %v1995, %v1997
    %v1999 = vrot.slane %v1985, %v1998
    %v2000 = vcombine.high %v1992, %v1992
    %v2001 = vcombine.high %v1999, %v1999
    %v2003 = vunpack.c.l.s4 1966171168
    %v2004 = vunpack.c.0.s8 %v2003
    %v2005 = vlaneseq
    %v2006 = vshrl.u32 %v2005, 7
    %v2007 = vsub.s32 %v2004, %v2006
    %v2008 = vrot.slane %v1992, %v2007
    %v2010 = vunpack.c.l.s4 1966171168
    %v2011 = vunpack.c.0.s8 %v2010
    %v2012 = vlaneseq
    %v2013 = vshrl.u32 %v2012, 7
    %v2014 = vsub.s32 %v2011, %v2013
    %v2015 = vrot.slane %v1999, %v2014
    %v2017 = vunpack.c.l.s4 1966171168
    %v2018 = vunpack.c.0.s8 %v2017
    %v2019 = vlaneseq
    %v2020 = vshrl.u32 %v2019, 7
    %v2021 = vsub.s32 %v2018, %v2020
    %v2022 = vrot.slane %v2000, %v2021
    %v2024 = vunpack.c.l.s4 1966171168
    %v2025 = vunpack.c.0.s8 %v2024
    %v2026 = vlaneseq
    %v2027 = vshrl.u32 %v2026, 7
    %v2028 = vsub.s32 %v2025, %v2027
    %v2029 = vrot.slane %v2001, %v2028
    %v2030 = vcombine.high %v2008, %v2008
    %v2031 = vcombine.high %v2015, %v2015
    %v2032 = vcombine.high %v2022, %v2022
    %v2033 = vcombine.high %v2029, %v2029
    %v2034 = vcombine.high %v1730, %v1730
    %v2036 = vunpack.c.l.s4 1966171168
    %v2037 = vunpack.c.0.s8 %v2036
    %v2038 = vlaneseq
    %v2039 = vshrl.u32 %v2038, 7
    %v2040 = vsub.s32 %v2037, %v2039
    %v2041 = vrot.slane %v1730, %v2040
    %v2043 = vunpack.c.l.s4 1966171168
    %v2044 = vunpack.c.0.s8 %v2043
    %v2045 = vlaneseq
    %v2046 = vshrl.u32 %v2045, 7
    %v2047 = vsub.s32 %v2044, %v2046
    %v2048 = vrot.slane %v2034, %v2047
    %v2049 = vcombine.high %v2041, %v2041
    %v2050 = vcombine.high %v2048, %v2048
    %v2052 = vunpack.c.l.s4 1966171168
    %v2053 = vunpack.c.0.s8 %v2052
    %v2054 = vlaneseq
    %v2055 = vshrl.u32 %v2054, 7
    %v2056 = vsub.s32 %v2053, %v2055
    %v2057 = vrot.slane %v2041, %v2056
    %v2059 = vunpack.c.l.s4 1966171168
    %v2060 = vunpack.c.0.s8 %v2059
    %v2061 = vlaneseq
    %v2062 = vshrl.u32 %v2061, 7
    %v2063 = vsub.s32 %v2060, %v2062
    %v2064 = vrot.slane %v2048, %v2063
    %v2066 = vunpack.c.l.s4 1966171168
    %v2067 = vunpack.c.0.s8 %v2066
    %v2068 = vlaneseq
    %v2069 = vshrl.u32 %v2068, 7
    %v2070 = vsub.s32 %v2067, %v2069
    %v2071 = vrot.slane %v2049, %v2070
    %v2073 = vunpack.c.l.s4 1966171168
    %v2074 = vunpack.c.0.s8 %v2073
    %v2075 = vlaneseq
    %v2076 = vshrl.u32 %v2075, 7
    %v2077 = vsub.s32 %v2074, %v2076
    %v2078 = vrot.slane %v2050, %v2077
    %v2079 = vcombine.high %v2057, %v2057
    %v2080 = vcombine.high %v2064, %v2064
    %v2081 = vcombine.high %v2071, %v2071
    %v2082 = vcombine.high %v2078, %v2078
    %v2083 = vcombine.high %v1731, %v1731
    %v2085 = vunpack.c.l.s4 1966171168
    %v2086 = vunpack.c.0.s8 %v2085
    %v2087 = vlaneseq
    %v2088 = vshrl.u32 %v2087, 7
    %v2089 = vsub.s32 %v2086, %v2088
    %v2090 = vrot.slane %v1731, %v2089
    %v2092 = vunpack.c.l.s4 1966171168
    %v2093 = vunpack.c.0.s8 %v2092
    %v2094 = vlaneseq
    %v2095 = vshrl.u32 %v2094, 7
    %v2096 = vsub.s32 %v2093, %v2095
    %v2097 = vrot.slane %v2083, %v2096
    %v2098 = vcombine.high %v2090, %v2090
    %v2099 = vcombine.high %v2097, %v2097
    %v2101 = vunpack.c.l.s4 1966171168
    %v2102 = vunpack.c.0.s8 %v2101
    %v2103 = vlaneseq
    %v2104 = vshrl.u32 %v2103, 7
    %v2105 = vsub.s32 %v2102, %v2104
    %v2106 = vrot.slane %v2090, %v2105
    %v2108 = vunpack.c.l.s4 1966171168
    %v2109 = vunpack.c.0.s8 %v2108
    %v2110 = vlaneseq
    %v2111 = vshrl.u32 %v2110, 7
    %v2112 = vsub.s32 %v2109, %v2111
    %v2113 = vrot.slane %v2097, %v2112
    %v2115 = vunpack.c.l.s4 1966171168
    %v2116 = vunpack.c.0.s8 %v2115
    %v2117 = vlaneseq
    %v2118 = vshrl.u32 %v2117, 7
    %v2119 = vsub.s32 %v2116, %v2118
    %v2120 = vrot.slane %v2098, %v2119
    %v2122 = vunpack.c.l.s4 1966171168
    %v2123 = vunpack.c.0.s8 %v2122
    %v2124 = vlaneseq
    %v2125 = vshrl.u32 %v2124, 7
    %v2126 = vsub.s32 %v2123, %v2125
    %v2127 = vrot.slane %v2099, %v2126
    %v2128 = vcombine.high %v2106, %v2106
    %v2129 = vcombine.high %v2113, %v2113
    %v2130 = vcombine.high %v2120, %v2120
    %v2131 = vcombine.high %v2127, %v2127
    %v2132 = vlaneseq
    %v2133 = vshrl.u32 %v2132, 7
    %v2134 = vsub.s32 0, %v2133
    %v2135 = vrot.slane %v1763, %v2134
    %v2136 = vlaneseq
    %v2137 = vshrl.u32 %v2136, 7
    %v2138 = vsub.s32 0, %v2137
    %v2139 = vrot.slane %v1777, %v2138
    %v2140 = vlaneseq
    %v2141 = vshrl.u32 %v2140, 7
    %v2142 = vsub.s32 0, %v2141
    %v2143 = vrot.slane %v1785, %v2142
    %v2144 = vlaneseq
    %v2145 = vshrl.u32 %v2144, 7
    %v2146 = vsub.s32 0, %v2145
    %v2147 = vrot.slane %v1787, %v2146
    %v2148 = vlaneseq
    %v2149 = vshrl.u32 %v2148, 7
    %v2150 = vsub.s32 0, %v2149
    %v2151 = vrot.slane %v1770, %v2150
    %v2152 = vlaneseq
    %v2153 = vshrl.u32 %v2152, 7
    %v2154 = vsub.s32 0, %v2153
    %v2155 = vrot.slane %v1784, %v2154
    %v2156 = vlaneseq
    %v2157 = vshrl.u32 %v2156, 7
    %v2158 = vsub.s32 0, %v2157
    %v2159 = vrot.slane %v1786, %v2158
    %v2160 = vlaneseq
    %v2161 = vshrl.u32 %v2160, 7
    %v2162 = vsub.s32 0, %v2161
    %v2163 = vrot.slane %v1788, %v2162
    %v2164 = vlaneseq
    %v2165 = vshrl.u32 %v2164, 7
    %v2166 = vsub.s32 0, %v2165
    %v2167 = vrot.slane %v1812, %v2166
    %v2168 = vlaneseq
    %v2169 = vshrl.u32 %v2168, 7
    %v2170 = vsub.s32 0, %v2169
    %v2171 = vrot.slane %v1826, %v2170
    %v2172 = vlaneseq
    %v2173 = vshrl.u32 %v2172, 7
    %v2174 = vsub.s32 0, %v2173
    %v2175 = vrot.slane %v1834, %v2174
    %v2176 = vlaneseq
    %v2177 = vshrl.u32 %v2176, 7
    %v2178 = vsub.s32 0, %v2177
    %v2179 = vrot.slane %v1836, %v2178
    %v2180 = vlaneseq
    %v2181 = vshrl.u32 %v2180, 7
    %v2182 = vsub.s32 0, %v2181
    %v2183 = vrot.slane %v1819, %v2182
    %v2184 = vlaneseq
    %v2185 = vshrl.u32 %v2184, 7
    %v2186 = vsub.s32 0, %v2185
    %v2187 = vrot.slane %v1833, %v2186
    %v2188 = vlaneseq
    %v2189 = vshrl.u32 %v2188, 7
    %v2190 = vsub.s32 0, %v2189
    %v2191 = vrot.slane %v1835, %v2190
    %v2192 = vlaneseq
    %v2193 = vshrl.u32 %v2192, 7
    %v2194 = vsub.s32 0, %v2193
    %v2195 = vrot.slane %v1837, %v2194
    %v2196 = vlaneseq
    %v2197 = vshrl.u32 %v2196, 7
    %v2198 = vsub.s32 0, %v2197
    %v2199 = vrot.slane %v1861, %v2198
    %v2200 = vlaneseq
    %v2201 = vshrl.u32 %v2200, 7
    %v2202 = vsub.s32 0, %v2201
    %v2203 = vrot.slane %v1875, %v2202
    %v2204 = vlaneseq
    %v2205 = vshrl.u32 %v2204, 7
    %v2206 = vsub.s32 0, %v2205
    %v2207 = vrot.slane %v1883, %v2206
    %v2208 = vlaneseq
    %v2209 = vshrl.u32 %v2208, 7
    %v2210 = vsub.s32 0, %v2209
    %v2211 = vrot.slane %v1885, %v2210
    %v2212 = vlaneseq
    %v2213 = vshrl.u32 %v2212, 7
    %v2214 = vsub.s32 0, %v2213
    %v2215 = vrot.slane %v1868, %v2214
    %v2216 = vlaneseq
    %v2217 = vshrl.u32 %v2216, 7
    %v2218 = vsub.s32 0, %v2217
    %v2219 = vrot.slane %v1882, %v2218
    %v2220 = vlaneseq
    %v2221 = vshrl.u32 %v2220, 7
    %v2222 = vsub.s32 0, %v2221
    %v2223 = vrot.slane %v1884, %v2222
    %v2224 = vlaneseq
    %v2225 = vshrl.u32 %v2224, 7
    %v2226 = vsub.s32 0, %v2225
    %v2227 = vrot.slane %v1886, %v2226
    %v2228 = vlaneseq
    %v2229 = vshrl.u32 %v2228, 7
    %v2230 = vsub.s32 0, %v2229
    %v2231 = vrot.slane %v1910, %v2230
    %v2232 = vlaneseq
    %v2233 = vshrl.u32 %v2232, 7
    %v2234 = vsub.s32 0, %v2233
    %v2235 = vrot.slane %v1924, %v2234
    %v2236 = vlaneseq
    %v2237 = vshrl.u32 %v2236, 7
    %v2238 = vsub.s32 0, %v2237
    %v2239 = vrot.slane %v1932, %v2238
    %v2240 = vlaneseq
    %v2241 = vshrl.u32 %v2240, 7
    %v2242 = vsub.s32 0, %v2241
    %v2243 = vrot.slane %v1934, %v2242
    %v2244 = vlaneseq
    %v2245 = vshrl.u32 %v2244, 7
    %v2246 = vsub.s32 0, %v2245
    %v2247 = vrot.slane %v1917, %v2246
    %v2248 = vlaneseq
    %v2249 = vshrl.u32 %v2248, 7
    %v2250 = vsub.s32 0, %v2249
    %v2251 = vrot.slane %v1931, %v2250
    %v2252 = vlaneseq
    %v2253 = vshrl.u32 %v2252, 7
    %v2254 = vsub.s32 0, %v2253
    %v2255 = vrot.slane %v1933, %v2254
    %v2256 = vlaneseq
    %v2257 = vshrl.u32 %v2256, 7
    %v2258 = vsub.s32 0, %v2257
    %v2259 = vrot.slane %v1935, %v2258
    %v2260 = vlaneseq
    %v2261 = vshrl.u32 %v2260, 7
    %v2262 = vsub.s32 0, %v2261
    %v2263 = vrot.slane %v1959, %v2262
    %v2264 = vlaneseq
    %v2265 = vshrl.u32 %v2264, 7
    %v2266 = vsub.s32 0, %v2265
    %v2267 = vrot.slane %v1973, %v2266
    %v2268 = vlaneseq
    %v2269 = vshrl.u32 %v2268, 7
    %v2270 = vsub.s32 0, %v2269
    %v2271 = vrot.slane %v1981, %v2270
    %v2272 = vlaneseq
    %v2273 = vshrl.u32 %v2272, 7
    %v2274 = vsub.s32 0, %v2273
    %v2275 = vrot.slane %v1983, %v2274
    %v2276 = vlaneseq
    %v2277 = vshrl.u32 %v2276, 7
    %v2278 = vsub.s32 0, %v2277
    %v2279 = vrot.slane %v1966, %v2278
    %v2280 = vlaneseq
    %v2281 = vshrl.u32 %v2280, 7
    %v2282 = vsub.s32 0, %v2281
    %v2283 = vrot.slane %v1980, %v2282
    %v2284 = vlaneseq
    %v2285 = vshrl.u32 %v2284, 7
    %v2286 = vsub.s32 0, %v2285
    %v2287 = vrot.slane %v1982, %v2286
    %v2288 = vlaneseq
    %v2289 = vshrl.u32 %v2288, 7
    %v2290 = vsub.s32 0, %v2289
    %v2291 = vrot.slane %v1984, %v2290
    %v2292 = vlaneseq
    %v2293 = vshrl.u32 %v2292, 7
    %v2294 = vsub.s32 0, %v2293
    %v2295 = vrot.slane %v2008, %v2294
    %v2296 = vlaneseq
    %v2297 = vshrl.u32 %v2296, 7
    %v2298 = vsub.s32 0, %v2297
    %v2299 = vrot.slane %v2022, %v2298
    %v2300 = vlaneseq
    %v2301 = vshrl.u32 %v2300, 7
    %v2302 = vsub.s32 0, %v2301
    %v2303 = vrot.slane %v2030, %v2302
    %v2304 = vlaneseq
    %v2305 = vshrl.u32 %v2304, 7
    %v2306 = vsub.s32 0, %v2305
    %v2307 = vrot.slane %v2032, %v2306
    %v2308 = vlaneseq
    %v2309 = vshrl.u32 %v2308, 7
    %v2310 = vsub.s32 0, %v2309
    %v2311 = vrot.slane %v2015, %v2310
    %v2312 = vlaneseq
    %v2313 = vshrl.u32 %v2312, 7
    %v2314 = vsub.s32 0, %v2313
    %v2315 = vrot.slane %v2029, %v2314
    %v2316 = vlaneseq
    %v2317 = vshrl.u32 %v2316, 7
    %v2318 = vsub.s32 0, %v2317
    %v2319 = vrot.slane %v2031, %v2318
    %v2320 = vlaneseq
    %v2321 = vshrl.u32 %v2320, 7
    %v2322 = vsub.s32 0, %v2321
    %v2323 = vrot.slane %v2033, %v2322
    %v2324 = vlaneseq
    %v2325 = vshrl.u32 %v2324, 7
    %v2326 = vsub.s32 0, %v2325
    %v2327 = vrot.slane %v2057, %v2326
    %v2328 = vlaneseq
    %v2329 = vshrl.u32 %v2328, 7
    %v2330 = vsub.s32 0, %v2329
    %v2331 = vrot.slane %v2071, %v2330
    %v2332 = vlaneseq
    %v2333 = vshrl.u32 %v2332, 7
    %v2334 = vsub.s32 0, %v2333
    %v2335 = vrot.slane %v2079, %v2334
    %v2336 = vlaneseq
    %v2337 = vshrl.u32 %v2336, 7
    %v2338 = vsub.s32 0, %v2337
    %v2339 = vrot.slane %v2081, %v2338
    %v2340 = vlaneseq
    %v2341 = vshrl.u32 %v2340, 7
    %v2342 = vsub.s32 0, %v2341
    %v2343 = vrot.slane %v2064, %v2342
    %v2344 = vlaneseq
    %v2345 = vshrl.u32 %v2344, 7
    %v2346 = vsub.s32 0, %v2345
    %v2347 = vrot.slane %v2078, %v2346
    %v2348 = vlaneseq
    %v2349 = vshrl.u32 %v2348, 7
    %v2350 = vsub.s32 0, %v2349
    %v2351 = vrot.slane %v2080, %v2350
    %v2352 = vlaneseq
    %v2353 = vshrl.u32 %v2352, 7
    %v2354 = vsub.s32 0, %v2353
    %v2355 = vrot.slane %v2082, %v2354
    %v2356 = vlaneseq
    %v2357 = vshrl.u32 %v2356, 7
    %v2358 = vsub.s32 0, %v2357
    %v2359 = vrot.slane %v2106, %v2358
    %v2360 = vlaneseq
    %v2361 = vshrl.u32 %v2360, 7
    %v2362 = vsub.s32 0, %v2361
    %v2363 = vrot.slane %v2120, %v2362
    %v2364 = vlaneseq
    %v2365 = vshrl.u32 %v2364, 7
    %v2366 = vsub.s32 0, %v2365
    %v2367 = vrot.slane %v2128, %v2366
    %v2368 = vlaneseq
    %v2369 = vshrl.u32 %v2368, 7
    %v2370 = vsub.s32 0, %v2369
    %v2371 = vrot.slane %v2130, %v2370
    %v2372 = vlaneseq
    %v2373 = vshrl.u32 %v2372, 7
    %v2374 = vsub.s32 0, %v2373
    %v2375 = vrot.slane %v2113, %v2374
    %v2376 = vlaneseq
    %v2377 = vshrl.u32 %v2376, 7
    %v2378 = vsub.s32 0, %v2377
    %v2379 = vrot.slane %v2127, %v2378
    %v2380 = vlaneseq
    %v2381 = vshrl.u32 %v2380, 7
    %v2382 = vsub.s32 0, %v2381
    %v2383 = vrot.slane %v2129, %v2382
    %v2384 = vlaneseq
    %v2385 = vshrl.u32 %v2384, 7
    %v2386 = vsub.s32 0, %v2385
    %v2387 = vrot.slane %v2131, %v2386
    %v2452 = vadd.f32 %v1660, %v2135
    %v2453 = vadd.f32 %v1661, %v2139
    %v2454 = vadd.f32 %v1662, %v2143
    %v2455 = vadd.f32 %v1663, %v2147
    %v2456 = vadd.f32 %v1664, %v2151
    %v2457 = vadd.f32 %v1665, %v2155
    %v2458 = vadd.f32 %v1666, %v2159
    %v2459 = vadd.f32 %v1667, %v2163
    %v2460 = vadd.f32 %v1668, %v2167
    %v2461 = vadd.f32 %v1669, %v2171
    %v2462 = vadd.f32 %v1670, %v2175
    %v2463 = vadd.f32 %v1671, %v2179
    %v2464 = vadd.f32 %v1672, %v2183
    %v2465 = vadd.f32 %v1673, %v2187
    %v2466 = vadd.f32 %v1674, %v2191
    %v2467 = vadd.f32 %v1675, %v2195
    %v2468 = vadd.f32 %v1676, %v2199
    %v2469 = vadd.f32 %v1677, %v2203
    %v2470 = vadd.f32 %v1678, %v2207
    %v2471 = vadd.f32 %v1679, %v2211
    %v2472 = vadd.f32 %v1680, %v2215
    %v2473 = vadd.f32 %v1681, %v2219
    %v2474 = vadd.f32 %v1682, %v2223
    %v2475 = vadd.f32 %v1683, %v2227
    %v2476 = vadd.f32 %v1684, %v2231
    %v2477 = vadd.f32 %v1685, %v2235
    %v2478 = vadd.f32 %v1686, %v2239
    %v2479 = vadd.f32 %v1687, %v2243
    %v2480 = vadd.f32 %v1688, %v2247
    %v2481 = vadd.f32 %v1689, %v2251
    %v2482 = vadd.f32 %v1690, %v2255
    %v2483 = vadd.f32 %v1691, %v2259
    %v2484 = vadd.f32 %v1692, %v2263
    %v2485 = vadd.f32 %v1693, %v2267
    %v2486 = vadd.f32 %v1694, %v2271
    %v2487 = vadd.f32 %v1695, %v2275
    %v2488 = vadd.f32 %v1696, %v2279
    %v2489 = vadd.f32 %v1697, %v2283
    %v2490 = vadd.f32 %v1698, %v2287
    %v2491 = vadd.f32 %v1699, %v2291
    %v2492 = vadd.f32 %v1700, %v2295
    %v2493 = vadd.f32 %v1701, %v2299
    %v2494 = vadd.f32 %v1702, %v2303
    %v2495 = vadd.f32 %v1703, %v2307
    %v2496 = vadd.f32 %v1704, %v2311
    %v2497 = vadd.f32 %v1705, %v2315
    %v2498 = vadd.f32 %v1706, %v2319
    %v2499 = vadd.f32 %v1707, %v2323
    %v2500 = vadd.f32 %v1708, %v2327
    %v2501 = vadd.f32 %v1709, %v2331
    %v2502 = vadd.f32 %v1710, %v2335
    %v2503 = vadd.f32 %v1711, %v2339
    %v2504 = vadd.f32 %v1712, %v2343
    %v2505 = vadd.f32 %v1713, %v2347
    %v2506 = vadd.f32 %v1714, %v2351
    %v2507 = vadd.f32 %v1715, %v2355
    %v2508 = vadd.f32 %v1716, %v2359
    %v2509 = vadd.f32 %v1717, %v2363
    %v2510 = vadd.f32 %v1718, %v2367
    %v2511 = vadd.f32 %v1719, %v2371
    %v2512 = vadd.f32 %v1720, %v2375
    %v2513 = vadd.f32 %v1721, %v2379
    %v2514 = vadd.f32 %v1722, %v2383
    %v2515 = vadd.f32 %v1723, %v2387
    %v2516 = vpack.c.bf16 %v2452, %v2452
    %v2517 = vpack.c.bf16 %v2453, %v2453
    %v2518 = vpack.c.bf16 %v2454, %v2454
    %v2519 = vpack.c.bf16 %v2455, %v2455
    %v2520 = vpack.c.bf16 %v2456, %v2456
    %v2521 = vpack.c.bf16 %v2457, %v2457
    %v2522 = vpack.c.bf16 %v2458, %v2458
    %v2523 = vpack.c.bf16 %v2459, %v2459
    %v2524 = vpack.c.bf16 %v2460, %v2460
    %v2525 = vpack.c.bf16 %v2461, %v2461
    %v2526 = vpack.c.bf16 %v2462, %v2462
    %v2527 = vpack.c.bf16 %v2463, %v2463
    %v2528 = vpack.c.bf16 %v2464, %v2464
    %v2529 = vpack.c.bf16 %v2465, %v2465
    %v2530 = vpack.c.bf16 %v2466, %v2466
    %v2531 = vpack.c.bf16 %v2467, %v2467
    %v2532 = vpack.c.bf16 %v2468, %v2468
    %v2533 = vpack.c.bf16 %v2469, %v2469
    %v2534 = vpack.c.bf16 %v2470, %v2470
    %v2535 = vpack.c.bf16 %v2471, %v2471
    %v2536 = vpack.c.bf16 %v2472, %v2472
    %v2537 = vpack.c.bf16 %v2473, %v2473
    %v2538 = vpack.c.bf16 %v2474, %v2474
    %v2539 = vpack.c.bf16 %v2475, %v2475
    %v2540 = vpack.c.bf16 %v2476, %v2476
    %v2541 = vpack.c.bf16 %v2477, %v2477
    %v2542 = vpack.c.bf16 %v2478, %v2478
    %v2543 = vpack.c.bf16 %v2479, %v2479
    %v2544 = vpack.c.bf16 %v2480, %v2480
    %v2545 = vpack.c.bf16 %v2481, %v2481
    %v2546 = vpack.c.bf16 %v2482, %v2482
    %v2547 = vpack.c.bf16 %v2483, %v2483
    %v2548 = vpack.c.bf16 %v2484, %v2484
    %v2549 = vpack.c.bf16 %v2485, %v2485
    %v2550 = vpack.c.bf16 %v2486, %v2486
    %v2551 = vpack.c.bf16 %v2487, %v2487
    %v2552 = vpack.c.bf16 %v2488, %v2488
    %v2553 = vpack.c.bf16 %v2489, %v2489
    %v2554 = vpack.c.bf16 %v2490, %v2490
    %v2555 = vpack.c.bf16 %v2491, %v2491
    %v2556 = vpack.c.bf16 %v2492, %v2492
    %v2557 = vpack.c.bf16 %v2493, %v2493
    %v2558 = vpack.c.bf16 %v2494, %v2494
    %v2559 = vpack.c.bf16 %v2495, %v2495
    %v2560 = vpack.c.bf16 %v2496, %v2496
    %v2561 = vpack.c.bf16 %v2497, %v2497
    %v2562 = vpack.c.bf16 %v2498, %v2498
    %v2563 = vpack.c.bf16 %v2499, %v2499
    %v2564 = vpack.c.bf16 %v2500, %v2500
    %v2565 = vpack.c.bf16 %v2501, %v2501
    %v2566 = vpack.c.bf16 %v2502, %v2502
    %v2567 = vpack.c.bf16 %v2503, %v2503
    %v2568 = vpack.c.bf16 %v2504, %v2504
    %v2569 = vpack.c.bf16 %v2505, %v2505
    %v2570 = vpack.c.bf16 %v2506, %v2506
    %v2571 = vpack.c.bf16 %v2507, %v2507
    %v2572 = vpack.c.bf16 %v2508, %v2508
    %v2573 = vpack.c.bf16 %v2509, %v2509
    %v2574 = vpack.c.bf16 %v2510, %v2510
    %v2575 = vpack.c.bf16 %v2511, %v2511
    %v2576 = vpack.c.bf16 %v2512, %v2512
    %v2577 = vpack.c.bf16 %v2513, %v2513
    %v2578 = vpack.c.bf16 %v2514, %v2514
    %v2579 = vpack.c.bf16 %v2515, %v2515
    %v2580 = vld [vmem:[#allocation4] sm:$0xf]
    %v2581 = vld [vmem:[#allocation4 + $0x4] sm:$0xf]
    %v2582 = vld [vmem:[#allocation4 + $0x8] sm:$0xf]
    %v2583 = vld [vmem:[#allocation4 + $0xc] sm:$0xf]
    %v2584 = vld [vmem:[#allocation4 + $0x10] sm:$0xf]
    %v2585 = vld [vmem:[#allocation4 + $0x14] sm:$0xf]
    %v2586 = vld [vmem:[#allocation4 + $0x18] sm:$0xf]
    %v2587 = vld [vmem:[#allocation4 + $0x1c] sm:$0xf]
    %v2588 = vld [vmem:[#allocation4 + $0x20] sm:$0xf]
    %v2589 = vld [vmem:[#allocation4 + $0x24] sm:$0xf]
    %v2590 = vld [vmem:[#allocation4 + $0x28] sm:$0xf]
    %v2591 = vld [vmem:[#allocation4 + $0x2c] sm:$0xf]
    %v2592 = vld [vmem:[#allocation4 + $0x30] sm:$0xf]
    %v2593 = vld [vmem:[#allocation4 + $0x34] sm:$0xf]
    %v2594 = vld [vmem:[#allocation4 + $0x38] sm:$0xf]
    %v2595 = vld [vmem:[#allocation4 + $0x3c] sm:$0xf]
    %v2596 = vld [vmem:[#allocation4 + $0x40] sm:$0xf]
    %v2597 = vld [vmem:[#allocation4 + $0x44] sm:$0xf]
    %v2598 = vld [vmem:[#allocation4 + $0x48] sm:$0xf]
    %v2599 = vld [vmem:[#allocation4 + $0x4c] sm:$0xf]
    %v2600 = vld [vmem:[#allocation4 + $0x50] sm:$0xf]
    %v2601 = vld [vmem:[#allocation4 + $0x54] sm:$0xf]
    %v2602 = vld [vmem:[#allocation4 + $0x58] sm:$0xf]
    %v2603 = vld [vmem:[#allocation4 + $0x5c] sm:$0xf]
    %v2604 = vld [vmem:[#allocation4 + $0x60] sm:$0xf]
    %v2605 = vld [vmem:[#allocation4 + $0x64] sm:$0xf]
    %v2606 = vld [vmem:[#allocation4 + $0x68] sm:$0xf]
    %v2607 = vld [vmem:[#allocation4 + $0x6c] sm:$0xf]
    %v2608 = vld [vmem:[#allocation4 + $0x70] sm:$0xf]
    %v2609 = vld [vmem:[#allocation4 + $0x74] sm:$0xf]
    %v2610 = vld [vmem:[#allocation4 + $0x78] sm:$0xf]
    %v2611 = vld [vmem:[#allocation4 + $0x7c] sm:$0xf]
    %v2612 = vld [vmem:[#allocation4 + $0x80] sm:$0xf]
    %v2613 = vld [vmem:[#allocation4 + $0x84] sm:$0xf]
    %v2614 = vld [vmem:[#allocation4 + $0x88] sm:$0xf]
    %v2615 = vld [vmem:[#allocation4 + $0x8c] sm:$0xf]
    %v2616 = vld [vmem:[#allocation4 + $0x90] sm:$0xf]
    %v2617 = vld [vmem:[#allocation4 + $0x94] sm:$0xf]
    %v2618 = vld [vmem:[#allocation4 + $0x98] sm:$0xf]
    %v2619 = vld [vmem:[#allocation4 + $0x9c] sm:$0xf]
    %v2620 = vld [vmem:[#allocation4 + $0xa0] sm:$0xf]
    %v2621 = vld [vmem:[#allocation4 + $0xa4] sm:$0xf]
    %v2622 = vld [vmem:[#allocation4 + $0xa8] sm:$0xf]
    %v2623 = vld [vmem:[#allocation4 + $0xac] sm:$0xf]
    %v2624 = vld [vmem:[#allocation4 + $0xb0] sm:$0xf]
    %v2625 = vld [vmem:[#allocation4 + $0xb4] sm:$0xf]
    %v2626 = vld [vmem:[#allocation4 + $0xb8] sm:$0xf]
    %v2627 = vld [vmem:[#allocation4 + $0xbc] sm:$0xf]
    %v2628 = vld [vmem:[#allocation4 + $0xc0] sm:$0xf]
    %v2629 = vld [vmem:[#allocation4 + $0xc4] sm:$0xf]
    %v2630 = vld [vmem:[#allocation4 + $0xc8] sm:$0xf]
    %v2631 = vld [vmem:[#allocation4 + $0xcc] sm:$0xf]
    %v2632 = vld [vmem:[#allocation4 + $0xd0] sm:$0xf]
    %v2633 = vld [vmem:[#allocation4 + $0xd4] sm:$0xf]
    %v2634 = vld [vmem:[#allocation4 + $0xd8] sm:$0xf]
    %v2635 = vld [vmem:[#allocation4 + $0xdc] sm:$0xf]
    %v2636 = vld [vmem:[#allocation4 + $0xe0] sm:$0xf]
    %v2637 = vld [vmem:[#allocation4 + $0xe4] sm:$0xf]
    %v2638 = vld [vmem:[#allocation4 + $0xe8] sm:$0xf]
    %v2639 = vld [vmem:[#allocation4 + $0xec] sm:$0xf]
    %v2640 = vld [vmem:[#allocation4 + $0xf0] sm:$0xf]
    %v2641 = vld [vmem:[#allocation4 + $0xf4] sm:$0xf]
    %v2642 = vld [vmem:[#allocation4 + $0xf8] sm:$0xf]
    %v2643 = vld [vmem:[#allocation4 + $0xfc] sm:$0xf]
    %2644 = vmatprep.subr.bf16.mxu0 0
    %2645 = vmatpush1.bf16.xpose.msra.mxu0 %v2580
    %2646 = vmatprep.subr.bf16.mxu0 0
    %2647 = vmatpush1.bf16.xpose.msra.mxu0 0
    %2648 = vmatprep.subr.bf16.mxu0 0
    %2649 = vmatpush1.bf16.xpose.msra.mxu0 0
    %2650 = vmatprep.subr.bf16.mxu0 0
    %2651 = vmatpush1.bf16.xpose.msra.mxu0 0
    %2652 = vmatprep.subr.bf16.mxu0 0
    %2653 = vmatpush1.bf16.xpose.msra.mxu0 0
    %2654 = vmatprep.subr.bf16.mxu0 0
    %2655 = vmatpush1.bf16.xpose.msra.mxu0 0
    %2656 = vmatprep.subr.bf16.mxu0 0
    %2657 = vmatpush1.bf16.xpose.msra.mxu0 0
    %2658 = vmatprep.subr.bf16.mxu0 0
    %2659 = vmatpush1.bf16.xpose.msra.mxu0 0
    %2660 = vmatprep.subr.bf16.mxu0 0
    %2661 = vmatpush1.bf16.xpose.msra.mxu0 0
    %2662 = vmatprep.subr.bf16.mxu0 0
    %2663 = vmatpush1.bf16.xpose.msra.mxu0 0
    %2664 = vmatprep.subr.bf16.mxu0 0
    %2665 = vmatpush1.bf16.xpose.msra.mxu0 0
    %2666 = vmatprep.subr.bf16.mxu0 0
    %2667 = vmatpush1.bf16.xpose.msra.mxu0 0
    %2668 = vmatprep.subr.bf16.mxu0 0
    %2669 = vmatpush1.bf16.xpose.msra.mxu0 0
    %2670 = vmatprep.subr.bf16.mxu0 0
    %2671 = vmatpush1.bf16.xpose.msra.mxu0 0
    %2672 = vmatprep.subr.bf16.mxu0 0
    %2673 = vmatpush1.bf16.xpose.msra.mxu0 0
    %2674 = vmatprep.subr.bf16.mxu0 0
    %2675 = vmatpush1.bf16.xpose.msra.mxu0 0
    %2676 = vmatprep.mubr.bf16.mxu0 0
    %2677 = vmatmul.mubr.bf16.gmra.mrb[0].mxu0 %v2516
    %v2678 = vpop.f32.mrb[0].mxu0
    %v2679 = vadd.f32 0.0, %v2678
    %v2680 = vpop.f32.mrb[0].mxu0
    %v2681 = vpop.f32.mrb[0].mxu0
    %v2682 = vpop.f32.mrb[0].mxu0
    %2683 = vdwg.mxu0
    %2684 = vmatprep.subr.bf16.mxu0 0
    %2685 = vmatpush1.bf16.xpose.msra.mxu0 %v2581
    %2686 = vmatprep.subr.bf16.mxu0 0
    %2687 = vmatpush1.bf16.xpose.msra.mxu0 0
    %2688 = vmatprep.subr.bf16.mxu0 0
    %2689 = vmatpush1.bf16.xpose.msra.mxu0 0
    %2690 = vmatprep.subr.bf16.mxu0 0
    %2691 = vmatpush1.bf16.xpose.msra.mxu0 0
    %2692 = vmatprep.subr.bf16.mxu0 0
    %2693 = vmatpush1.bf16.xpose.msra.mxu0 0
    %2694 = vmatprep.subr.bf16.mxu0 0
    %2695 = vmatpush1.bf16.xpose.msra.mxu0 0
    %2696 = vmatprep.subr.bf16.mxu0 0
    %2697 = vmatpush1.bf16.xpose.msra.mxu0 0
    %2698 = vmatprep.subr.bf16.mxu0 0
    %2699 = vmatpush1.bf16.xpose.msra.mxu0 0
    %2700 = vmatprep.subr.bf16.mxu0 0
    %2701 = vmatpush1.bf16.xpose.msra.mxu0 0
    %2702 = vmatprep.subr.bf16.mxu0 0
    %2703 = vmatpush1.bf16.xpose.msra.mxu0 0
    %2704 = vmatprep.subr.bf16.mxu0 0
    %2705 = vmatpush1.bf16.xpose.msra.mxu0 0
    %2706 = vmatprep.subr.bf16.mxu0 0
    %2707 = vmatpush1.bf16.xpose.msra.mxu0 0
    %2708 = vmatprep.subr.bf16.mxu0 0
    %2709 = vmatpush1.bf16.xpose.msra.mxu0 0
    %2710 = vmatprep.subr.bf16.mxu0 0
    %2711 = vmatpush1.bf16.xpose.msra.mxu0 0
    %2712 = vmatprep.subr.bf16.mxu0 0
    %2713 = vmatpush1.bf16.xpose.msra.mxu0 0
    %2714 = vmatprep.subr.bf16.mxu0 0
    %2715 = vmatpush1.bf16.xpose.msra.mxu0 0
    %2716 = vmatprep.mubr.bf16.mxu0 0
    %2717 = vmatmul.mubr.bf16.gmra.mrb[0].mxu0 %v2517
    %v2718 = vpop.f32.mrb[0].mxu0
    %v2719 = vadd.f32 0.0, %v2718
    %v2720 = vpop.f32.mrb[0].mxu0
    %v2721 = vpop.f32.mrb[0].mxu0
    %v2722 = vpop.f32.mrb[0].mxu0
    %2723 = vdwg.mxu0
    %2724 = vmatprep.subr.bf16.mxu0 0
    %2725 = vmatpush1.bf16.xpose.msra.mxu0 %v2582
    %2726 = vmatprep.subr.bf16.mxu0 0
    %2727 = vmatpush1.bf16.xpose.msra.mxu0 0
    %2728 = vmatprep.subr.bf16.mxu0 0
    %2729 = vmatpush1.bf16.xpose.msra.mxu0 0
    %2730 = vmatprep.subr.bf16.mxu0 0
    %2731 = vmatpush1.bf16.xpose.msra.mxu0 0
    %2732 = vmatprep.subr.bf16.mxu0 0
    %2733 = vmatpush1.bf16.xpose.msra.mxu0 0
    %2734 = vmatprep.subr.bf16.mxu0 0
    %2735 = vmatpush1.bf16.xpose.msra.mxu0 0
    %2736 = vmatprep.subr.bf16.mxu0 0
    %2737 = vmatpush1.bf16.xpose.msra.mxu0 0
    %2738 = vmatprep.subr.bf16.mxu0 0
    %2739 = vmatpush1.bf16.xpose.msra.mxu0 0
    %2740 = vmatprep.subr.bf16.mxu0 0
    %2741 = vmatpush1.bf16.xpose.msra.mxu0 0
    %2742 = vmatprep.subr.bf16.mxu0 0
    %2743 = vmatpush1.bf16.xpose.msra.mxu0 0
    %2744 = vmatprep.subr.bf16.mxu0 0
    %2745 = vmatpush1.bf16.xpose.msra.mxu0 0
    %2746 = vmatprep.subr.bf16.mxu0 0
    %2747 = vmatpush1.bf16.xpose.msra.mxu0 0
    %2748 = vmatprep.subr.bf16.mxu0 0
    %2749 = vmatpush1.bf16.xpose.msra.mxu0 0
    %2750 = vmatprep.subr.bf16.mxu0 0
    %2751 = vmatpush1.bf16.xpose.msra.mxu0 0
    %2752 = vmatprep.subr.bf16.mxu0 0
    %2753 = vmatpush1.bf16.xpose.msra.mxu0 0
    %2754 = vmatprep.subr.bf16.mxu0 0
    %2755 = vmatpush1.bf16.xpose.msra.mxu0 0
    %2756 = vmatprep.mubr.bf16.mxu0 0
    %2757 = vmatmul.mubr.bf16.gmra.mrb[0].mxu0 %v2518
    %v2758 = vpop.f32.mrb[0].mxu0
    %v2759 = vadd.f32 0.0, %v2758
    %v2760 = vpop.f32.mrb[0].mxu0
    %v2761 = vpop.f32.mrb[0].mxu0
    %v2762 = vpop.f32.mrb[0].mxu0
    %2763 = vdwg.mxu0
    %2764 = vmatprep.subr.bf16.mxu0 0
    %2765 = vmatpush1.bf16.xpose.msra.mxu0 %v2583
    %2766 = vmatprep.subr.bf16.mxu0 0
    %2767 = vmatpush1.bf16.xpose.msra.mxu0 0
    %2768 = vmatprep.subr.bf16.mxu0 0
    %2769 = vmatpush1.bf16.xpose.msra.mxu0 0
    %2770 = vmatprep.subr.bf16.mxu0 0
    %2771 = vmatpush1.bf16.xpose.msra.mxu0 0
    %2772 = vmatprep.subr.bf16.mxu0 0
    %2773 = vmatpush1.bf16.xpose.msra.mxu0 0
    %2774 = vmatprep.subr.bf16.mxu0 0
    %2775 = vmatpush1.bf16.xpose.msra.mxu0 0
    %2776 = vmatprep.subr.bf16.mxu0 0
    %2777 = vmatpush1.bf16.xpose.msra.mxu0 0
    %2778 = vmatprep.subr.bf16.mxu0 0
    %2779 = vmatpush1.bf16.xpose.msra.mxu0 0
    %2780 = vmatprep.subr.bf16.mxu0 0
    %2781 = vmatpush1.bf16.xpose.msra.mxu0 0
    %2782 = vmatprep.subr.bf16.mxu0 0
    %2783 = vmatpush1.bf16.xpose.msra.mxu0 0
    %2784 = vmatprep.subr.bf16.mxu0 0
    %2785 = vmatpush1.bf16.xpose.msra.mxu0 0
    %2786 = vmatprep.subr.bf16.mxu0 0
    %2787 = vmatpush1.bf16.xpose.msra.mxu0 0
    %2788 = vmatprep.subr.bf16.mxu0 0
    %2789 = vmatpush1.bf16.xpose.msra.mxu0 0
    %2790 = vmatprep.subr.bf16.mxu0 0
    %2791 = vmatpush1.bf16.xpose.msra.mxu0 0
    %2792 = vmatprep.subr.bf16.mxu0 0
    %2793 = vmatpush1.bf16.xpose.msra.mxu0 0
    %2794 = vmatprep.subr.bf16.mxu0 0
    %2795 = vmatpush1.bf16.xpose.msra.mxu0 0
    %2796 = vmatprep.mubr.bf16.mxu0 0
    %2797 = vmatmul.mubr.bf16.gmra.mrb[0].mxu0 %v2519
    %v2798 = vpop.f32.mrb[0].mxu0
    %v2799 = vadd.f32 0.0, %v2798
    %v2800 = vpop.f32.mrb[0].mxu0
    %v2801 = vpop.f32.mrb[0].mxu0
    %v2802 = vpop.f32.mrb[0].mxu0
    %2803 = vdwg.mxu0
    %2804 = vmatprep.subr.bf16.mxu0 0
    %2805 = vmatpush1.bf16.xpose.msra.mxu0 %v2584
    %2806 = vmatprep.subr.bf16.mxu0 0
    %2807 = vmatpush1.bf16.xpose.msra.mxu0 0
    %2808 = vmatprep.subr.bf16.mxu0 0
    %2809 = vmatpush1.bf16.xpose.msra.mxu0 0
    %2810 = vmatprep.subr.bf16.mxu0 0
    %2811 = vmatpush1.bf16.xpose.msra.mxu0 0
    %2812 = vmatprep.subr.bf16.mxu0 0
    %2813 = vmatpush1.bf16.xpose.msra.mxu0 0
    %2814 = vmatprep.subr.bf16.mxu0 0
    %2815 = vmatpush1.bf16.xpose.msra.mxu0 0
    %2816 = vmatprep.subr.bf16.mxu0 0
    %2817 = vmatpush1.bf16.xpose.msra.mxu0 0
    %2818 = vmatprep.subr.bf16.mxu0 0
    %2819 = vmatpush1.bf16.xpose.msra.mxu0 0
    %2820 = vmatprep.subr.bf16.mxu0 0
    %2821 = vmatpush1.bf16.xpose.msra.mxu0 0
    %2822 = vmatprep.subr.bf16.mxu0 0
    %2823 = vmatpush1.bf16.xpose.msra.mxu0 0
    %2824 = vmatprep.subr.bf16.mxu0 0
    %2825 = vmatpush1.bf16.xpose.msra.mxu0 0
    %2826 = vmatprep.subr.bf16.mxu0 0
    %2827 = vmatpush1.bf16.xpose.msra.mxu0 0
    %2828 = vmatprep.subr.bf16.mxu0 0
    %2829 = vmatpush1.bf16.xpose.msra.mxu0 0
    %2830 = vmatprep.subr.bf16.mxu0 0
    %2831 = vmatpush1.bf16.xpose.msra.mxu0 0
    %2832 = vmatprep.subr.bf16.mxu0 0
    %2833 = vmatpush1.bf16.xpose.msra.mxu0 0
    %2834 = vmatprep.subr.bf16.mxu0 0
    %2835 = vmatpush1.bf16.xpose.msra.mxu0 0
    %2836 = vmatprep.mubr.bf16.mxu0 0
    %2837 = vmatmul.mubr.bf16.gmra.mrb[0].mxu0 %v2520
    %v2838 = vpop.f32.mrb[0].mxu0
    %v2839 = vadd.f32 0.0, %v2838
    %v2840 = vpop.f32.mrb[0].mxu0
    %v2841 = vpop.f32.mrb[0].mxu0
    %v2842 = vpop.f32.mrb[0].mxu0
    %2843 = vdwg.mxu0
    %2844 = vmatprep.subr.bf16.mxu0 0
    %2845 = vmatpush1.bf16.xpose.msra.mxu0 %v2585
    %2846 = vmatprep.subr.bf16.mxu0 0
    %2847 = vmatpush1.bf16.xpose.msra.mxu0 0
    %2848 = vmatprep.subr.bf16.mxu0 0
    %2849 = vmatpush1.bf16.xpose.msra.mxu0 0
    %2850 = vmatprep.subr.bf16.mxu0 0
    %2851 = vmatpush1.bf16.xpose.msra.mxu0 0
    %2852 = vmatprep.subr.bf16.mxu0 0
    %2853 = vmatpush1.bf16.xpose.msra.mxu0 0
    %2854 = vmatprep.subr.bf16.mxu0 0
    %2855 = vmatpush1.bf16.xpose.msra.mxu0 0
    %2856 = vmatprep.subr.bf16.mxu0 0
    %2857 = vmatpush1.bf16.xpose.msra.mxu0 0
    %2858 = vmatprep.subr.bf16.mxu0 0
    %2859 = vmatpush1.bf16.xpose.msra.mxu0 0
    %2860 = vmatprep.subr.bf16.mxu0 0
    %2861 = vmatpush1.bf16.xpose.msra.mxu0 0
    %2862 = vmatprep.subr.bf16.mxu0 0
    %2863 = vmatpush1.bf16.xpose.msra.mxu0 0
    %2864 = vmatprep.subr.bf16.mxu0 0
    %2865 = vmatpush1.bf16.xpose.msra.mxu0 0
    %2866 = vmatprep.subr.bf16.mxu0 0
    %2867 = vmatpush1.bf16.xpose.msra.mxu0 0
    %2868 = vmatprep.subr.bf16.mxu0 0
    %2869 = vmatpush1.bf16.xpose.msra.mxu0 0
    %2870 = vmatprep.subr.bf16.mxu0 0
    %2871 = vmatpush1.bf16.xpose.msra.mxu0 0
    %2872 = vmatprep.subr.bf16.mxu0 0
    %2873 = vmatpush1.bf16.xpose.msra.mxu0 0
    %2874 = vmatprep.subr.bf16.mxu0 0
    %2875 = vmatpush1.bf16.xpose.msra.mxu0 0
    %2876 = vmatprep.mubr.bf16.mxu0 0
    %2877 = vmatmul.mubr.bf16.gmra.mrb[0].mxu0 %v2521
    %v2878 = vpop.f32.mrb[0].mxu0
    %v2879 = vadd.f32 0.0, %v2878
    %v2880 = vpop.f32.mrb[0].mxu0
    %v2881 = vpop.f32.mrb[0].mxu0
    %v2882 = vpop.f32.mrb[0].mxu0
    %2883 = vdwg.mxu0
    %2884 = vmatprep.subr.bf16.mxu0 0
    %2885 = vmatpush1.bf16.xpose.msra.mxu0 %v2586
    %2886 = vmatprep.subr.bf16.mxu0 0
    %2887 = vmatpush1.bf16.xpose.msra.mxu0 0
    %2888 = vmatprep.subr.bf16.mxu0 0
    %2889 = vmatpush1.bf16.xpose.msra.mxu0 0
    %2890 = vmatprep.subr.bf16.mxu0 0
    %2891 = vmatpush1.bf16.xpose.msra.mxu0 0
    %2892 = vmatprep.subr.bf16.mxu0 0
    %2893 = vmatpush1.bf16.xpose.msra.mxu0 0
    %2894 = vmatprep.subr.bf16.mxu0 0
    %2895 = vmatpush1.bf16.xpose.msra.mxu0 0
    %2896 = vmatprep.subr.bf16.mxu0 0
    %2897 = vmatpush1.bf16.xpose.msra.mxu0 0
    %2898 = vmatprep.subr.bf16.mxu0 0
    %2899 = vmatpush1.bf16.xpose.msra.mxu0 0
    %2900 = vmatprep.subr.bf16.mxu0 0
    %2901 = vmatpush1.bf16.xpose.msra.mxu0 0
    %2902 = vmatprep.subr.bf16.mxu0 0
    %2903 = vmatpush1.bf16.xpose.msra.mxu0 0
    %2904 = vmatprep.subr.bf16.mxu0 0
    %2905 = vmatpush1.bf16.xpose.msra.mxu0 0
    %2906 = vmatprep.subr.bf16.mxu0 0
    %2907 = vmatpush1.bf16.xpose.msra.mxu0 0
    %2908 = vmatprep.subr.bf16.mxu0 0
    %2909 = vmatpush1.bf16.xpose.msra.mxu0 0
    %2910 = vmatprep.subr.bf16.mxu0 0
    %2911 = vmatpush1.bf16.xpose.msra.mxu0 0
    %2912 = vmatprep.subr.bf16.mxu0 0
    %2913 = vmatpush1.bf16.xpose.msra.mxu0 0
    %2914 = vmatprep.subr.bf16.mxu0 0
    %2915 = vmatpush1.bf16.xpose.msra.mxu0 0
    %2916 = vmatprep.mubr.bf16.mxu0 0
    %2917 = vmatmul.mubr.bf16.gmra.mrb[0].mxu0 %v2522
    %v2918 = vpop.f32.mrb[0].mxu0
    %v2919 = vadd.f32 0.0, %v2918
    %v2920 = vpop.f32.mrb[0].mxu0
    %v2921 = vpop.f32.mrb[0].mxu0
    %v2922 = vpop.f32.mrb[0].mxu0
    %2923 = vdwg.mxu0
    %2924 = vmatprep.subr.bf16.mxu0 0
    %2925 = vmatpush1.bf16.xpose.msra.mxu0 %v2587
    %2926 = vmatprep.subr.bf16.mxu0 0
    %2927 = vmatpush1.bf16.xpose.msra.mxu0 0
    %2928 = vmatprep.subr.bf16.mxu0 0
    %2929 = vmatpush1.bf16.xpose.msra.mxu0 0
    %2930 = vmatprep.subr.bf16.mxu0 0
    %2931 = vmatpush1.bf16.xpose.msra.mxu0 0
    %2932 = vmatprep.subr.bf16.mxu0 0
    %2933 = vmatpush1.bf16.xpose.msra.mxu0 0
    %2934 = vmatprep.subr.bf16.mxu0 0
    %2935 = vmatpush1.bf16.xpose.msra.mxu0 0
    %2936 = vmatprep.subr.bf16.mxu0 0
    %2937 = vmatpush1.bf16.xpose.msra.mxu0 0
    %2938 = vmatprep.subr.bf16.mxu0 0
    %2939 = vmatpush1.bf16.xpose.msra.mxu0 0
    %2940 = vmatprep.subr.bf16.mxu0 0
    %2941 = vmatpush1.bf16.xpose.msra.mxu0 0
    %2942 = vmatprep.subr.bf16.mxu0 0
    %2943 = vmatpush1.bf16.xpose.msra.mxu0 0
    %2944 = vmatprep.subr.bf16.mxu0 0
    %2945 = vmatpush1.bf16.xpose.msra.mxu0 0
    %2946 = vmatprep.subr.bf16.mxu0 0
    %2947 = vmatpush1.bf16.xpose.msra.mxu0 0
    %2948 = vmatprep.subr.bf16.mxu0 0
    %2949 = vmatpush1.bf16.xpose.msra.mxu0 0
    %2950 = vmatprep.subr.bf16.mxu0 0
    %2951 = vmatpush1.bf16.xpose.msra.mxu0 0
    %2952 = vmatprep.subr.bf16.mxu0 0
    %2953 = vmatpush1.bf16.xpose.msra.mxu0 0
    %2954 = vmatprep.subr.bf16.mxu0 0
    %2955 = vmatpush1.bf16.xpose.msra.mxu0 0
    %2956 = vmatprep.mubr.bf16.mxu0 0
    %2957 = vmatmul.mubr.bf16.gmra.mrb[0].mxu0 %v2523
    %v2958 = vpop.f32.mrb[0].mxu0
    %v2959 = vadd.f32 0.0, %v2958
    %v2960 = vpop.f32.mrb[0].mxu0
    %v2961 = vpop.f32.mrb[0].mxu0
    %v2962 = vpop.f32.mrb[0].mxu0
    %2963 = vdwg.mxu0
    %2964 = vmatprep.subr.bf16.mxu0 0
    %2965 = vmatpush1.bf16.xpose.msra.mxu0 %v2588
    %2966 = vmatprep.subr.bf16.mxu0 0
    %2967 = vmatpush1.bf16.xpose.msra.mxu0 0
    %2968 = vmatprep.subr.bf16.mxu0 0
    %2969 = vmatpush1.bf16.xpose.msra.mxu0 0
    %2970 = vmatprep.subr.bf16.mxu0 0
    %2971 = vmatpush1.bf16.xpose.msra.mxu0 0
    %2972 = vmatprep.subr.bf16.mxu0 0
    %2973 = vmatpush1.bf16.xpose.msra.mxu0 0
    %2974 = vmatprep.subr.bf16.mxu0 0
    %2975 = vmatpush1.bf16.xpose.msra.mxu0 0
    %2976 = vmatprep.subr.bf16.mxu0 0
    %2977 = vmatpush1.bf16.xpose.msra.mxu0 0
    %2978 = vmatprep.subr.bf16.mxu0 0
    %2979 = vmatpush1.bf16.xpose.msra.mxu0 0
    %2980 = vmatprep.subr.bf16.mxu0 0
    %2981 = vmatpush1.bf16.xpose.msra.mxu0 0
    %2982 = vmatprep.subr.bf16.mxu0 0
    %2983 = vmatpush1.bf16.xpose.msra.mxu0 0
    %2984 = vmatprep.subr.bf16.mxu0 0
    %2985 = vmatpush1.bf16.xpose.msra.mxu0 0
    %2986 = vmatprep.subr.bf16.mxu0 0
    %2987 = vmatpush1.bf16.xpose.msra.mxu0 0
    %2988 = vmatprep.subr.bf16.mxu0 0
    %2989 = vmatpush1.bf16.xpose.msra.mxu0 0
    %2990 = vmatprep.subr.bf16.mxu0 0
    %2991 = vmatpush1.bf16.xpose.msra.mxu0 0
    %2992 = vmatprep.subr.bf16.mxu0 0
    %2993 = vmatpush1.bf16.xpose.msra.mxu0 0
    %2994 = vmatprep.subr.bf16.mxu0 0
    %2995 = vmatpush1.bf16.xpose.msra.mxu0 0
    %2996 = vmatprep.mubr.bf16.mxu0 0
    %2997 = vmatmul.mubr.bf16.gmra.mrb[0].mxu0 %v2524
    %v2998 = vpop.f32.mrb[0].mxu0
    %v2999 = vadd.f32 0.0, %v2998
    %v3000 = vpop.f32.mrb[0].mxu0
    %v3001 = vpop.f32.mrb[0].mxu0
    %v3002 = vpop.f32.mrb[0].mxu0
    %3003 = vdwg.mxu0
    %3004 = vmatprep.subr.bf16.mxu0 0
    %3005 = vmatpush1.bf16.xpose.msra.mxu0 %v2589
    %3006 = vmatprep.subr.bf16.mxu0 0
    %3007 = vmatpush1.bf16.xpose.msra.mxu0 0
    %3008 = vmatprep.subr.bf16.mxu0 0
    %3009 = vmatpush1.bf16.xpose.msra.mxu0 0
    %3010 = vmatprep.subr.bf16.mxu0 0
    %3011 = vmatpush1.bf16.xpose.msra.mxu0 0
    %3012 = vmatprep.subr.bf16.mxu0 0
    %3013 = vmatpush1.bf16.xpose.msra.mxu0 0
    %3014 = vmatprep.subr.bf16.mxu0 0
    %3015 = vmatpush1.bf16.xpose.msra.mxu0 0
    %3016 = vmatprep.subr.bf16.mxu0 0
    %3017 = vmatpush1.bf16.xpose.msra.mxu0 0
    %3018 = vmatprep.subr.bf16.mxu0 0
    %3019 = vmatpush1.bf16.xpose.msra.mxu0 0
    %3020 = vmatprep.subr.bf16.mxu0 0
    %3021 = vmatpush1.bf16.xpose.msra.mxu0 0
    %3022 = vmatprep.subr.bf16.mxu0 0
    %3023 = vmatpush1.bf16.xpose.msra.mxu0 0
    %3024 = vmatprep.subr.bf16.mxu0 0
    %3025 = vmatpush1.bf16.xpose.msra.mxu0 0
    %3026 = vmatprep.subr.bf16.mxu0 0
    %3027 = vmatpush1.bf16.xpose.msra.mxu0 0
    %3028 = vmatprep.subr.bf16.mxu0 0
    %3029 = vmatpush1.bf16.xpose.msra.mxu0 0
    %3030 = vmatprep.subr.bf16.mxu0 0
    %3031 = vmatpush1.bf16.xpose.msra.mxu0 0
    %3032 = vmatprep.subr.bf16.mxu0 0
    %3033 = vmatpush1.bf16.xpose.msra.mxu0 0
    %3034 = vmatprep.subr.bf16.mxu0 0
    %3035 = vmatpush1.bf16.xpose.msra.mxu0 0
    %3036 = vmatprep.mubr.bf16.mxu0 0
    %3037 = vmatmul.mubr.bf16.gmra.mrb[0].mxu0 %v2525
    %v3038 = vpop.f32.mrb[0].mxu0
    %v3039 = vadd.f32 0.0, %v3038
    %v3040 = vpop.f32.mrb[0].mxu0
    %v3041 = vpop.f32.mrb[0].mxu0
    %v3042 = vpop.f32.mrb[0].mxu0
    %3043 = vdwg.mxu0
    %3044 = vmatprep.subr.bf16.mxu0 0
    %3045 = vmatpush1.bf16.xpose.msra.mxu0 %v2590
    %3046 = vmatprep.subr.bf16.mxu0 0
    %3047 = vmatpush1.bf16.xpose.msra.mxu0 0
    %3048 = vmatprep.subr.bf16.mxu0 0
    %3049 = vmatpush1.bf16.xpose.msra.mxu0 0
    %3050 = vmatprep.subr.bf16.mxu0 0
    %3051 = vmatpush1.bf16.xpose.msra.mxu0 0
    %3052 = vmatprep.subr.bf16.mxu0 0
    %3053 = vmatpush1.bf16.xpose.msra.mxu0 0
    %3054 = vmatprep.subr.bf16.mxu0 0
    %3055 = vmatpush1.bf16.xpose.msra.mxu0 0
    %3056 = vmatprep.subr.bf16.mxu0 0
    %3057 = vmatpush1.bf16.xpose.msra.mxu0 0
    %3058 = vmatprep.subr.bf16.mxu0 0
    %3059 = vmatpush1.bf16.xpose.msra.mxu0 0
    %3060 = vmatprep.subr.bf16.mxu0 0
    %3061 = vmatpush1.bf16.xpose.msra.mxu0 0
    %3062 = vmatprep.subr.bf16.mxu0 0
    %3063 = vmatpush1.bf16.xpose.msra.mxu0 0
    %3064 = vmatprep.subr.bf16.mxu0 0
    %3065 = vmatpush1.bf16.xpose.msra.mxu0 0
    %3066 = vmatprep.subr.bf16.mxu0 0
    %3067 = vmatpush1.bf16.xpose.msra.mxu0 0
    %3068 = vmatprep.subr.bf16.mxu0 0
    %3069 = vmatpush1.bf16.xpose.msra.mxu0 0
    %3070 = vmatprep.subr.bf16.mxu0 0
    %3071 = vmatpush1.bf16.xpose.msra.mxu0 0
    %3072 = vmatprep.subr.bf16.mxu0 0
    %3073 = vmatpush1.bf16.xpose.msra.mxu0 0
    %3074 = vmatprep.subr.bf16.mxu0 0
    %3075 = vmatpush1.bf16.xpose.msra.mxu0 0
    %3076 = vmatprep.mubr.bf16.mxu0 0
    %3077 = vmatmul.mubr.bf16.gmra.mrb[0].mxu0 %v2526
    %v3078 = vpop.f32.mrb[0].mxu0
    %v3079 = vadd.f32 0.0, %v3078
    %v3080 = vpop.f32.mrb[0].mxu0
    %v3081 = vpop.f32.mrb[0].mxu0
    %v3082 = vpop.f32.mrb[0].mxu0
    %3083 = vdwg.mxu0
    %3084 = vmatprep.subr.bf16.mxu0 0
    %3085 = vmatpush1.bf16.xpose.msra.mxu0 %v2591
    %3086 = vmatprep.subr.bf16.mxu0 0
    %3087 = vmatpush1.bf16.xpose.msra.mxu0 0
    %3088 = vmatprep.subr.bf16.mxu0 0
    %3089 = vmatpush1.bf16.xpose.msra.mxu0 0
    %3090 = vmatprep.subr.bf16.mxu0 0
    %3091 = vmatpush1.bf16.xpose.msra.mxu0 0
    %3092 = vmatprep.subr.bf16.mxu0 0
    %3093 = vmatpush1.bf16.xpose.msra.mxu0 0
    %3094 = vmatprep.subr.bf16.mxu0 0
    %3095 = vmatpush1.bf16.xpose.msra.mxu0 0
    %3096 = vmatprep.subr.bf16.mxu0 0
    %3097 = vmatpush1.bf16.xpose.msra.mxu0 0
    %3098 = vmatprep.subr.bf16.mxu0 0
    %3099 = vmatpush1.bf16.xpose.msra.mxu0 0
    %3100 = vmatprep.subr.bf16.mxu0 0
    %3101 = vmatpush1.bf16.xpose.msra.mxu0 0
    %3102 = vmatprep.subr.bf16.mxu0 0
    %3103 = vmatpush1.bf16.xpose.msra.mxu0 0
    %3104 = vmatprep.subr.bf16.mxu0 0
    %3105 = vmatpush1.bf16.xpose.msra.mxu0 0
    %3106 = vmatprep.subr.bf16.mxu0 0
    %3107 = vmatpush1.bf16.xpose.msra.mxu0 0
    %3108 = vmatprep.subr.bf16.mxu0 0
    %3109 = vmatpush1.bf16.xpose.msra.mxu0 0
    %3110 = vmatprep.subr.bf16.mxu0 0
    %3111 = vmatpush1.bf16.xpose.msra.mxu0 0
    %3112 = vmatprep.subr.bf16.mxu0 0
    %3113 = vmatpush1.bf16.xpose.msra.mxu0 0
    %3114 = vmatprep.subr.bf16.mxu0 0
    %3115 = vmatpush1.bf16.xpose.msra.mxu0 0
    %3116 = vmatprep.mubr.bf16.mxu0 0
    %3117 = vmatmul.mubr.bf16.gmra.mrb[0].mxu0 %v2527
    %v3118 = vpop.f32.mrb[0].mxu0
    %v3119 = vadd.f32 0.0, %v3118
    %v3120 = vpop.f32.mrb[0].mxu0
    %v3121 = vpop.f32.mrb[0].mxu0
    %v3122 = vpop.f32.mrb[0].mxu0
    %3123 = vdwg.mxu0
    %3124 = vmatprep.subr.bf16.mxu0 0
    %3125 = vmatpush1.bf16.xpose.msra.mxu0 %v2592
    %3126 = vmatprep.subr.bf16.mxu0 0
    %3127 = vmatpush1.bf16.xpose.msra.mxu0 0
    %3128 = vmatprep.subr.bf16.mxu0 0
    %3129 = vmatpush1.bf16.xpose.msra.mxu0 0
    %3130 = vmatprep.subr.bf16.mxu0 0
    %3131 = vmatpush1.bf16.xpose.msra.mxu0 0
    %3132 = vmatprep.subr.bf16.mxu0 0
    %3133 = vmatpush1.bf16.xpose.msra.mxu0 0
    %3134 = vmatprep.subr.bf16.mxu0 0
    %3135 = vmatpush1.bf16.xpose.msra.mxu0 0
    %3136 = vmatprep.subr.bf16.mxu0 0
    %3137 = vmatpush1.bf16.xpose.msra.mxu0 0
    %3138 = vmatprep.subr.bf16.mxu0 0
    %3139 = vmatpush1.bf16.xpose.msra.mxu0 0
    %3140 = vmatprep.subr.bf16.mxu0 0
    %3141 = vmatpush1.bf16.xpose.msra.mxu0 0
    %3142 = vmatprep.subr.bf16.mxu0 0
    %3143 = vmatpush1.bf16.xpose.msra.mxu0 0
    %3144 = vmatprep.subr.bf16.mxu0 0
    %3145 = vmatpush1.bf16.xpose.msra.mxu0 0
    %3146 = vmatprep.subr.bf16.mxu0 0
    %3147 = vmatpush1.bf16.xpose.msra.mxu0 0
    %3148 = vmatprep.subr.bf16.mxu0 0
    %3149 = vmatpush1.bf16.xpose.msra.mxu0 0
    %3150 = vmatprep.subr.bf16.mxu0 0
    %3151 = vmatpush1.bf16.xpose.msra.mxu0 0
    %3152 = vmatprep.subr.bf16.mxu0 0
    %3153 = vmatpush1.bf16.xpose.msra.mxu0 0
    %3154 = vmatprep.subr.bf16.mxu0 0
    %3155 = vmatpush1.bf16.xpose.msra.mxu0 0
    %3156 = vmatprep.mubr.bf16.mxu0 0
    %3157 = vmatmul.mubr.bf16.gmra.mrb[0].mxu0 %v2528
    %v3158 = vpop.f32.mrb[0].mxu0
    %v3159 = vadd.f32 0.0, %v3158
    %v3160 = vpop.f32.mrb[0].mxu0
    %v3161 = vpop.f32.mrb[0].mxu0
    %v3162 = vpop.f32.mrb[0].mxu0
    %3163 = vdwg.mxu0
    %3164 = vmatprep.subr.bf16.mxu0 0
    %3165 = vmatpush1.bf16.xpose.msra.mxu0 %v2593
    %3166 = vmatprep.subr.bf16.mxu0 0
    %3167 = vmatpush1.bf16.xpose.msra.mxu0 0
    %3168 = vmatprep.subr.bf16.mxu0 0
    %3169 = vmatpush1.bf16.xpose.msra.mxu0 0
    %3170 = vmatprep.subr.bf16.mxu0 0
    %3171 = vmatpush1.bf16.xpose.msra.mxu0 0
    %3172 = vmatprep.subr.bf16.mxu0 0
    %3173 = vmatpush1.bf16.xpose.msra.mxu0 0
    %3174 = vmatprep.subr.bf16.mxu0 0
    %3175 = vmatpush1.bf16.xpose.msra.mxu0 0
    %3176 = vmatprep.subr.bf16.mxu0 0
    %3177 = vmatpush1.bf16.xpose.msra.mxu0 0
    %3178 = vmatprep.subr.bf16.mxu0 0
    %3179 = vmatpush1.bf16.xpose.msra.mxu0 0
    %3180 = vmatprep.subr.bf16.mxu0 0
    %3181 = vmatpush1.bf16.xpose.msra.mxu0 0
    %3182 = vmatprep.subr.bf16.mxu0 0
    %3183 = vmatpush1.bf16.xpose.msra.mxu0 0
    %3184 = vmatprep.subr.bf16.mxu0 0
    %3185 = vmatpush1.bf16.xpose.msra.mxu0 0
    %3186 = vmatprep.subr.bf16.mxu0 0
    %3187 = vmatpush1.bf16.xpose.msra.mxu0 0
    %3188 = vmatprep.subr.bf16.mxu0 0
    %3189 = vmatpush1.bf16.xpose.msra.mxu0 0
    %3190 = vmatprep.subr.bf16.mxu0 0
    %3191 = vmatpush1.bf16.xpose.msra.mxu0 0
    %3192 = vmatprep.subr.bf16.mxu0 0
    %3193 = vmatpush1.bf16.xpose.msra.mxu0 0
    %3194 = vmatprep.subr.bf16.mxu0 0
    %3195 = vmatpush1.bf16.xpose.msra.mxu0 0
    %3196 = vmatprep.mubr.bf16.mxu0 0
    %3197 = vmatmul.mubr.bf16.gmra.mrb[0].mxu0 %v2529
    %v3198 = vpop.f32.mrb[0].mxu0
    %v3199 = vadd.f32 0.0, %v3198
    %v3200 = vpop.f32.mrb[0].mxu0
    %v3201 = vpop.f32.mrb[0].mxu0
    %v3202 = vpop.f32.mrb[0].mxu0
    %3203 = vdwg.mxu0
    %3204 = vmatprep.subr.bf16.mxu0 0
    %3205 = vmatpush1.bf16.xpose.msra.mxu0 %v2594
    %3206 = vmatprep.subr.bf16.mxu0 0
    %3207 = vmatpush1.bf16.xpose.msra.mxu0 0
    %3208 = vmatprep.subr.bf16.mxu0 0
    %3209 = vmatpush1.bf16.xpose.msra.mxu0 0
    %3210 = vmatprep.subr.bf16.mxu0 0
    %3211 = vmatpush1.bf16.xpose.msra.mxu0 0
    %3212 = vmatprep.subr.bf16.mxu0 0
    %3213 = vmatpush1.bf16.xpose.msra.mxu0 0
    %3214 = vmatprep.subr.bf16.mxu0 0
    %3215 = vmatpush1.bf16.xpose.msra.mxu0 0
    %3216 = vmatprep.subr.bf16.mxu0 0
    %3217 = vmatpush1.bf16.xpose.msra.mxu0 0
    %3218 = vmatprep.subr.bf16.mxu0 0
    %3219 = vmatpush1.bf16.xpose.msra.mxu0 0
    %3220 = vmatprep.subr.bf16.mxu0 0
    %3221 = vmatpush1.bf16.xpose.msra.mxu0 0
    %3222 = vmatprep.subr.bf16.mxu0 0
    %3223 = vmatpush1.bf16.xpose.msra.mxu0 0
    %3224 = vmatprep.subr.bf16.mxu0 0
    %3225 = vmatpush1.bf16.xpose.msra.mxu0 0
    %3226 = vmatprep.subr.bf16.mxu0 0
    %3227 = vmatpush1.bf16.xpose.msra.mxu0 0
    %3228 = vmatprep.subr.bf16.mxu0 0
    %3229 = vmatpush1.bf16.xpose.msra.mxu0 0
    %3230 = vmatprep.subr.bf16.mxu0 0
    %3231 = vmatpush1.bf16.xpose.msra.mxu0 0
    %3232 = vmatprep.subr.bf16.mxu0 0
    %3233 = vmatpush1.bf16.xpose.msra.mxu0 0
    %3234 = vmatprep.subr.bf16.mxu0 0
    %3235 = vmatpush1.bf16.xpose.msra.mxu0 0
    %3236 = vmatprep.mubr.bf16.mxu0 0
    %3237 = vmatmul.mubr.bf16.gmra.mrb[0].mxu0 %v2530
    %v3238 = vpop.f32.mrb[0].mxu0
    %v3239 = vadd.f32 0.0, %v3238
    %v3240 = vpop.f32.mrb[0].mxu0
    %v3241 = vpop.f32.mrb[0].mxu0
    %v3242 = vpop.f32.mrb[0].mxu0
    %3243 = vdwg.mxu0
    %3244 = vmatprep.subr.bf16.mxu0 0
    %3245 = vmatpush1.bf16.xpose.msra.mxu0 %v2595
    %3246 = vmatprep.subr.bf16.mxu0 0
    %3247 = vmatpush1.bf16.xpose.msra.mxu0 0
    %3248 = vmatprep.subr.bf16.mxu0 0
    %3249 = vmatpush1.bf16.xpose.msra.mxu0 0
    %3250 = vmatprep.subr.bf16.mxu0 0
    %3251 = vmatpush1.bf16.xpose.msra.mxu0 0
    %3252 = vmatprep.subr.bf16.mxu0 0
    %3253 = vmatpush1.bf16.xpose.msra.mxu0 0
    %3254 = vmatprep.subr.bf16.mxu0 0
    %3255 = vmatpush1.bf16.xpose.msra.mxu0 0
    %3256 = vmatprep.subr.bf16.mxu0 0
    %3257 = vmatpush1.bf16.xpose.msra.mxu0 0
    %3258 = vmatprep.subr.bf16.mxu0 0
    %3259 = vmatpush1.bf16.xpose.msra.mxu0 0
    %3260 = vmatprep.subr.bf16.mxu0 0
    %3261 = vmatpush1.bf16.xpose.msra.mxu0 0
    %3262 = vmatprep.subr.bf16.mxu0 0
    %3263 = vmatpush1.bf16.xpose.msra.mxu0 0
    %3264 = vmatprep.subr.bf16.mxu0 0
    %3265 = vmatpush1.bf16.xpose.msra.mxu0 0
    %3266 = vmatprep.subr.bf16.mxu0 0
    %3267 = vmatpush1.bf16.xpose.msra.mxu0 0
    %3268 = vmatprep.subr.bf16.mxu0 0
    %3269 = vmatpush1.bf16.xpose.msra.mxu0 0
    %3270 = vmatprep.subr.bf16.mxu0 0
    %3271 = vmatpush1.bf16.xpose.msra.mxu0 0
    %3272 = vmatprep.subr.bf16.mxu0 0
    %3273 = vmatpush1.bf16.xpose.msra.mxu0 0
    %3274 = vmatprep.subr.bf16.mxu0 0
    %3275 = vmatpush1.bf16.xpose.msra.mxu0 0
    %3276 = vmatprep.mubr.bf16.mxu0 0
    %3277 = vmatmul.mubr.bf16.gmra.mrb[0].mxu0 %v2531
    %v3278 = vpop.f32.mrb[0].mxu0
    %v3279 = vadd.f32 0.0, %v3278
    %v3280 = vpop.f32.mrb[0].mxu0
    %v3281 = vpop.f32.mrb[0].mxu0
    %v3282 = vpop.f32.mrb[0].mxu0
    %3283 = vdwg.mxu0
    %3284 = vmatprep.subr.bf16.mxu0 0
    %3285 = vmatpush1.bf16.xpose.msra.mxu0 %v2596
    %3286 = vmatprep.subr.bf16.mxu0 0
    %3287 = vmatpush1.bf16.xpose.msra.mxu0 0
    %3288 = vmatprep.subr.bf16.mxu0 0
    %3289 = vmatpush1.bf16.xpose.msra.mxu0 0
    %3290 = vmatprep.subr.bf16.mxu0 0
    %3291 = vmatpush1.bf16.xpose.msra.mxu0 0
    %3292 = vmatprep.subr.bf16.mxu0 0
    %3293 = vmatpush1.bf16.xpose.msra.mxu0 0
    %3294 = vmatprep.subr.bf16.mxu0 0
    %3295 = vmatpush1.bf16.xpose.msra.mxu0 0
    %3296 = vmatprep.subr.bf16.mxu0 0
    %3297 = vmatpush1.bf16.xpose.msra.mxu0 0
    %3298 = vmatprep.subr.bf16.mxu0 0
    %3299 = vmatpush1.bf16.xpose.msra.mxu0 0
    %3300 = vmatprep.subr.bf16.mxu0 0
    %3301 = vmatpush1.bf16.xpose.msra.mxu0 0
    %3302 = vmatprep.subr.bf16.mxu0 0
    %3303 = vmatpush1.bf16.xpose.msra.mxu0 0
    %3304 = vmatprep.subr.bf16.mxu0 0
    %3305 = vmatpush1.bf16.xpose.msra.mxu0 0
    %3306 = vmatprep.subr.bf16.mxu0 0
    %3307 = vmatpush1.bf16.xpose.msra.mxu0 0
    %3308 = vmatprep.subr.bf16.mxu0 0
    %3309 = vmatpush1.bf16.xpose.msra.mxu0 0
    %3310 = vmatprep.subr.bf16.mxu0 0
    %3311 = vmatpush1.bf16.xpose.msra.mxu0 0
    %3312 = vmatprep.subr.bf16.mxu0 0
    %3313 = vmatpush1.bf16.xpose.msra.mxu0 0
    %3314 = vmatprep.subr.bf16.mxu0 0
    %3315 = vmatpush1.bf16.xpose.msra.mxu0 0
    %3316 = vmatprep.mubr.bf16.mxu0 0
    %3317 = vmatmul.mubr.bf16.gmra.mrb[0].mxu0 %v2532
    %v3318 = vpop.f32.mrb[0].mxu0
    %v3319 = vadd.f32 0.0, %v3318
    %v3320 = vpop.f32.mrb[0].mxu0
    %v3321 = vpop.f32.mrb[0].mxu0
    %v3322 = vpop.f32.mrb[0].mxu0
    %3323 = vdwg.mxu0
    %3324 = vmatprep.subr.bf16.mxu0 0
    %3325 = vmatpush1.bf16.xpose.msra.mxu0 %v2597
    %3326 = vmatprep.subr.bf16.mxu0 0
    %3327 = vmatpush1.bf16.xpose.msra.mxu0 0
    %3328 = vmatprep.subr.bf16.mxu0 0
    %3329 = vmatpush1.bf16.xpose.msra.mxu0 0
    %3330 = vmatprep.subr.bf16.mxu0 0
    %3331 = vmatpush1.bf16.xpose.msra.mxu0 0
    %3332 = vmatprep.subr.bf16.mxu0 0
    %3333 = vmatpush1.bf16.xpose.msra.mxu0 0
    %3334 = vmatprep.subr.bf16.mxu0 0
    %3335 = vmatpush1.bf16.xpose.msra.mxu0 0
    %3336 = vmatprep.subr.bf16.mxu0 0
    %3337 = vmatpush1.bf16.xpose.msra.mxu0 0
    %3338 = vmatprep.subr.bf16.mxu0 0
    %3339 = vmatpush1.bf16.xpose.msra.mxu0 0
    %3340 = vmatprep.subr.bf16.mxu0 0
    %3341 = vmatpush1.bf16.xpose.msra.mxu0 0
    %3342 = vmatprep.subr.bf16.mxu0 0
    %3343 = vmatpush1.bf16.xpose.msra.mxu0 0
    %3344 = vmatprep.subr.bf16.mxu0 0
    %3345 = vmatpush1.bf16.xpose.msra.mxu0 0
    %3346 = vmatprep.subr.bf16.mxu0 0
    %3347 = vmatpush1.bf16.xpose.msra.mxu0 0
    %3348 = vmatprep.subr.bf16.mxu0 0
    %3349 = vmatpush1.bf16.xpose.msra.mxu0 0
    %3350 = vmatprep.subr.bf16.mxu0 0
    %3351 = vmatpush1.bf16.xpose.msra.mxu0 0
    %3352 = vmatprep.subr.bf16.mxu0 0
    %3353 = vmatpush1.bf16.xpose.msra.mxu0 0
    %3354 = vmatprep.subr.bf16.mxu0 0
    %3355 = vmatpush1.bf16.xpose.msra.mxu0 0
    %3356 = vmatprep.mubr.bf16.mxu0 0
    %3357 = vmatmul.mubr.bf16.gmra.mrb[0].mxu0 %v2533
    %v3358 = vpop.f32.mrb[0].mxu0
    %v3359 = vadd.f32 0.0, %v3358
    %v3360 = vpop.f32.mrb[0].mxu0
    %v3361 = vpop.f32.mrb[0].mxu0
    %v3362 = vpop.f32.mrb[0].mxu0
    %3363 = vdwg.mxu0
    %3364 = vmatprep.subr.bf16.mxu0 0
    %3365 = vmatpush1.bf16.xpose.msra.mxu0 %v2598
    %3366 = vmatprep.subr.bf16.mxu0 0
    %3367 = vmatpush1.bf16.xpose.msra.mxu0 0
    %3368 = vmatprep.subr.bf16.mxu0 0
    %3369 = vmatpush1.bf16.xpose.msra.mxu0 0
    %3370 = vmatprep.subr.bf16.mxu0 0
    %3371 = vmatpush1.bf16.xpose.msra.mxu0 0
    %3372 = vmatprep.subr.bf16.mxu0 0
    %3373 = vmatpush1.bf16.xpose.msra.mxu0 0
    %3374 = vmatprep.subr.bf16.mxu0 0
    %3375 = vmatpush1.bf16.xpose.msra.mxu0 0
    %3376 = vmatprep.subr.bf16.mxu0 0
    %3377 = vmatpush1.bf16.xpose.msra.mxu0 0
    %3378 = vmatprep.subr.bf16.mxu0 0
    %3379 = vmatpush1.bf16.xpose.msra.mxu0 0
    %3380 = vmatprep.subr.bf16.mxu0 0
    %3381 = vmatpush1.bf16.xpose.msra.mxu0 0
    %3382 = vmatprep.subr.bf16.mxu0 0
    %3383 = vmatpush1.bf16.xpose.msra.mxu0 0
    %3384 = vmatprep.subr.bf16.mxu0 0
    %3385 = vmatpush1.bf16.xpose.msra.mxu0 0
    %3386 = vmatprep.subr.bf16.mxu0 0
    %3387 = vmatpush1.bf16.xpose.msra.mxu0 0
    %3388 = vmatprep.subr.bf16.mxu0 0
    %3389 = vmatpush1.bf16.xpose.msra.mxu0 0
    %3390 = vmatprep.subr.bf16.mxu0 0
    %3391 = vmatpush1.bf16.xpose.msra.mxu0 0
    %3392 = vmatprep.subr.bf16.mxu0 0
    %3393 = vmatpush1.bf16.xpose.msra.mxu0 0
    %3394 = vmatprep.subr.bf16.mxu0 0
    %3395 = vmatpush1.bf16.xpose.msra.mxu0 0
    %3396 = vmatprep.mubr.bf16.mxu0 0
    %3397 = vmatmul.mubr.bf16.gmra.mrb[0].mxu0 %v2534
    %v3398 = vpop.f32.mrb[0].mxu0
    %v3399 = vadd.f32 0.0, %v3398
    %v3400 = vpop.f32.mrb[0].mxu0
    %v3401 = vpop.f32.mrb[0].mxu0
    %v3402 = vpop.f32.mrb[0].mxu0
    %3403 = vdwg.mxu0
    %3404 = vmatprep.subr.bf16.mxu0 0
    %3405 = vmatpush1.bf16.xpose.msra.mxu0 %v2599
    %3406 = vmatprep.subr.bf16.mxu0 0
    %3407 = vmatpush1.bf16.xpose.msra.mxu0 0
    %3408 = vmatprep.subr.bf16.mxu0 0
    %3409 = vmatpush1.bf16.xpose.msra.mxu0 0
    %3410 = vmatprep.subr.bf16.mxu0 0
    %3411 = vmatpush1.bf16.xpose.msra.mxu0 0
    %3412 = vmatprep.subr.bf16.mxu0 0
    %3413 = vmatpush1.bf16.xpose.msra.mxu0 0
    %3414 = vmatprep.subr.bf16.mxu0 0
    %3415 = vmatpush1.bf16.xpose.msra.mxu0 0
    %3416 = vmatprep.subr.bf16.mxu0 0
    %3417 = vmatpush1.bf16.xpose.msra.mxu0 0
    %3418 = vmatprep.subr.bf16.mxu0 0
    %3419 = vmatpush1.bf16.xpose.msra.mxu0 0
    %3420 = vmatprep.subr.bf16.mxu0 0
    %3421 = vmatpush1.bf16.xpose.msra.mxu0 0
    %3422 = vmatprep.subr.bf16.mxu0 0
    %3423 = vmatpush1.bf16.xpose.msra.mxu0 0
    %3424 = vmatprep.subr.bf16.mxu0 0
    %3425 = vmatpush1.bf16.xpose.msra.mxu0 0
    %3426 = vmatprep.subr.bf16.mxu0 0
    %3427 = vmatpush1.bf16.xpose.msra.mxu0 0
    %3428 = vmatprep.subr.bf16.mxu0 0
    %3429 = vmatpush1.bf16.xpose.msra.mxu0 0
    %3430 = vmatprep.subr.bf16.mxu0 0
    %3431 = vmatpush1.bf16.xpose.msra.mxu0 0
    %3432 = vmatprep.subr.bf16.mxu0 0
    %3433 = vmatpush1.bf16.xpose.msra.mxu0 0
    %3434 = vmatprep.subr.bf16.mxu0 0
    %3435 = vmatpush1.bf16.xpose.msra.mxu0 0
    %3436 = vmatprep.mubr.bf16.mxu0 0
    %3437 = vmatmul.mubr.bf16.gmra.mrb[0].mxu0 %v2535
    %v3438 = vpop.f32.mrb[0].mxu0
    %v3439 = vadd.f32 0.0, %v3438
    %v3440 = vpop.f32.mrb[0].mxu0
    %v3441 = vpop.f32.mrb[0].mxu0
    %v3442 = vpop.f32.mrb[0].mxu0
    %3443 = vdwg.mxu0
    %3444 = vmatprep.subr.bf16.mxu0 0
    %3445 = vmatpush1.bf16.xpose.msra.mxu0 %v2600
    %3446 = vmatprep.subr.bf16.mxu0 0
    %3447 = vmatpush1.bf16.xpose.msra.mxu0 0
    %3448 = vmatprep.subr.bf16.mxu0 0
    %3449 = vmatpush1.bf16.xpose.msra.mxu0 0
    %3450 = vmatprep.subr.bf16.mxu0 0
    %3451 = vmatpush1.bf16.xpose.msra.mxu0 0
    %3452 = vmatprep.subr.bf16.mxu0 0
    %3453 = vmatpush1.bf16.xpose.msra.mxu0 0
    %3454 = vmatprep.subr.bf16.mxu0 0
    %3455 = vmatpush1.bf16.xpose.msra.mxu0 0
    %3456 = vmatprep.subr.bf16.mxu0 0
    %3457 = vmatpush1.bf16.xpose.msra.mxu0 0
    %3458 = vmatprep.subr.bf16.mxu0 0
    %3459 = vmatpush1.bf16.xpose.msra.mxu0 0
    %3460 = vmatprep.subr.bf16.mxu0 0
    %3461 = vmatpush1.bf16.xpose.msra.mxu0 0
    %3462 = vmatprep.subr.bf16.mxu0 0
    %3463 = vmatpush1.bf16.xpose.msra.mxu0 0
    %3464 = vmatprep.subr.bf16.mxu0 0
    %3465 = vmatpush1.bf16.xpose.msra.mxu0 0
    %3466 = vmatprep.subr.bf16.mxu0 0
    %3467 = vmatpush1.bf16.xpose.msra.mxu0 0
    %3468 = vmatprep.subr.bf16.mxu0 0
    %3469 = vmatpush1.bf16.xpose.msra.mxu0 0
    %3470 = vmatprep.subr.bf16.mxu0 0
    %3471 = vmatpush1.bf16.xpose.msra.mxu0 0
    %3472 = vmatprep.subr.bf16.mxu0 0
    %3473 = vmatpush1.bf16.xpose.msra.mxu0 0
    %3474 = vmatprep.subr.bf16.mxu0 0
    %3475 = vmatpush1.bf16.xpose.msra.mxu0 0
    %3476 = vmatprep.mubr.bf16.mxu0 0
    %3477 = vmatmul.mubr.bf16.gmra.mrb[0].mxu0 %v2536
    %v3478 = vpop.f32.mrb[0].mxu0
    %v3479 = vadd.f32 0.0, %v3478
    %v3480 = vpop.f32.mrb[0].mxu0
    %v3481 = vpop.f32.mrb[0].mxu0
    %v3482 = vpop.f32.mrb[0].mxu0
    %3483 = vdwg.mxu0
    %3484 = vmatprep.subr.bf16.mxu0 0
    %3485 = vmatpush1.bf16.xpose.msra.mxu0 %v2601
    %3486 = vmatprep.subr.bf16.mxu0 0
    %3487 = vmatpush1.bf16.xpose.msra.mxu0 0
    %3488 = vmatprep.subr.bf16.mxu0 0
    %3489 = vmatpush1.bf16.xpose.msra.mxu0 0
    %3490 = vmatprep.subr.bf16.mxu0 0
    %3491 = vmatpush1.bf16.xpose.msra.mxu0 0
    %3492 = vmatprep.subr.bf16.mxu0 0
    %3493 = vmatpush1.bf16.xpose.msra.mxu0 0
    %3494 = vmatprep.subr.bf16.mxu0 0
    %3495 = vmatpush1.bf16.xpose.msra.mxu0 0
    %3496 = vmatprep.subr.bf16.mxu0 0
    %3497 = vmatpush1.bf16.xpose.msra.mxu0 0
    %3498 = vmatprep.subr.bf16.mxu0 0
    %3499 = vmatpush1.bf16.xpose.msra.mxu0 0
    %3500 = vmatprep.subr.bf16.mxu0 0
    %3501 = vmatpush1.bf16.xpose.msra.mxu0 0
    %3502 = vmatprep.subr.bf16.mxu0 0
    %3503 = vmatpush1.bf16.xpose.msra.mxu0 0
    %3504 = vmatprep.subr.bf16.mxu0 0
    %3505 = vmatpush1.bf16.xpose.msra.mxu0 0
    %3506 = vmatprep.subr.bf16.mxu0 0
    %3507 = vmatpush1.bf16.xpose.msra.mxu0 0
    %3508 = vmatprep.subr.bf16.mxu0 0
    %3509 = vmatpush1.bf16.xpose.msra.mxu0 0
    %3510 = vmatprep.subr.bf16.mxu0 0
    %3511 = vmatpush1.bf16.xpose.msra.mxu0 0
    %3512 = vmatprep.subr.bf16.mxu0 0
    %3513 = vmatpush1.bf16.xpose.msra.mxu0 0
    %3514 = vmatprep.subr.bf16.mxu0 0
    %3515 = vmatpush1.bf16.xpose.msra.mxu0 0
    %3516 = vmatprep.mubr.bf16.mxu0 0
    %3517 = vmatmul.mubr.bf16.gmra.mrb[0].mxu0 %v2537
    %v3518 = vpop.f32.mrb[0].mxu0
    %v3519 = vadd.f32 0.0, %v3518
    %v3520 = vpop.f32.mrb[0].mxu0
    %v3521 = vpop.f32.mrb[0].mxu0
    %v3522 = vpop.f32.mrb[0].mxu0
    %3523 = vdwg.mxu0
    %3524 = vmatprep.subr.bf16.mxu0 0
    %3525 = vmatpush1.bf16.xpose.msra.mxu0 %v2602
    %3526 = vmatprep.subr.bf16.mxu0 0
    %3527 = vmatpush1.bf16.xpose.msra.mxu0 0
    %3528 = vmatprep.subr.bf16.mxu0 0
    %3529 = vmatpush1.bf16.xpose.msra.mxu0 0
    %3530 = vmatprep.subr.bf16.mxu0 0
    %3531 = vmatpush1.bf16.xpose.msra.mxu0 0
    %3532 = vmatprep.subr.bf16.mxu0 0
    %3533 = vmatpush1.bf16.xpose.msra.mxu0 0
    %3534 = vmatprep.subr.bf16.mxu0 0
    %3535 = vmatpush1.bf16.xpose.msra.mxu0 0
    %3536 = vmatprep.subr.bf16.mxu0 0
    %3537 = vmatpush1.bf16.xpose.msra.mxu0 0
    %3538 = vmatprep.subr.bf16.mxu0 0
    %3539 = vmatpush1.bf16.xpose.msra.mxu0 0
    %3540 = vmatprep.subr.bf16.mxu0 0
    %3541 = vmatpush1.bf16.xpose.msra.mxu0 0
    %3542 = vmatprep.subr.bf16.mxu0 0
    %3543 = vmatpush1.bf16.xpose.msra.mxu0 0
    %3544 = vmatprep.subr.bf16.mxu0 0
    %3545 = vmatpush1.bf16.xpose.msra.mxu0 0
    %3546 = vmatprep.subr.bf16.mxu0 0
    %3547 = vmatpush1.bf16.xpose.msra.mxu0 0
    %3548 = vmatprep.subr.bf16.mxu0 0
    %3549 = vmatpush1.bf16.xpose.msra.mxu0 0
    %3550 = vmatprep.subr.bf16.mxu0 0
    %3551 = vmatpush1.bf16.xpose.msra.mxu0 0
    %3552 = vmatprep.subr.bf16.mxu0 0
    %3553 = vmatpush1.bf16.xpose.msra.mxu0 0
    %3554 = vmatprep.subr.bf16.mxu0 0
    %3555 = vmatpush1.bf16.xpose.msra.mxu0 0
    %3556 = vmatprep.mubr.bf16.mxu0 0
    %3557 = vmatmul.mubr.bf16.gmra.mrb[0].mxu0 %v2538
    %v3558 = vpop.f32.mrb[0].mxu0
    %v3559 = vadd.f32 0.0, %v3558
    %v3560 = vpop.f32.mrb[0].mxu0
    %v3561 = vpop.f32.mrb[0].mxu0
    %v3562 = vpop.f32.mrb[0].mxu0
    %3563 = vdwg.mxu0
    %3564 = vmatprep.subr.bf16.mxu0 0
    %3565 = vmatpush1.bf16.xpose.msra.mxu0 %v2603
    %3566 = vmatprep.subr.bf16.mxu0 0
    %3567 = vmatpush1.bf16.xpose.msra.mxu0 0
    %3568 = vmatprep.subr.bf16.mxu0 0
    %3569 = vmatpush1.bf16.xpose.msra.mxu0 0
    %3570 = vmatprep.subr.bf16.mxu0 0
    %3571 = vmatpush1.bf16.xpose.msra.mxu0 0
    %3572 = vmatprep.subr.bf16.mxu0 0
    %3573 = vmatpush1.bf16.xpose.msra.mxu0 0
    %3574 = vmatprep.subr.bf16.mxu0 0
    %3575 = vmatpush1.bf16.xpose.msra.mxu0 0
    %3576 = vmatprep.subr.bf16.mxu0 0
    %3577 = vmatpush1.bf16.xpose.msra.mxu0 0
    %3578 = vmatprep.subr.bf16.mxu0 0
    %3579 = vmatpush1.bf16.xpose.msra.mxu0 0
    %3580 = vmatprep.subr.bf16.mxu0 0
    %3581 = vmatpush1.bf16.xpose.msra.mxu0 0
    %3582 = vmatprep.subr.bf16.mxu0 0
    %3583 = vmatpush1.bf16.xpose.msra.mxu0 0
    %3584 = vmatprep.subr.bf16.mxu0 0
    %3585 = vmatpush1.bf16.xpose.msra.mxu0 0
    %3586 = vmatprep.subr.bf16.mxu0 0
    %3587 = vmatpush1.bf16.xpose.msra.mxu0 0
    %3588 = vmatprep.subr.bf16.mxu0 0
    %3589 = vmatpush1.bf16.xpose.msra.mxu0 0
    %3590 = vmatprep.subr.bf16.mxu0 0
    %3591 = vmatpush1.bf16.xpose.msra.mxu0 0
    %3592 = vmatprep.subr.bf16.mxu0 0
    %3593 = vmatpush1.bf16.xpose.msra.mxu0 0
    %3594 = vmatprep.subr.bf16.mxu0 0
    %3595 = vmatpush1.bf16.xpose.msra.mxu0 0
    %3596 = vmatprep.mubr.bf16.mxu0 0
    %3597 = vmatmul.mubr.bf16.gmra.mrb[0].mxu0 %v2539
    %v3598 = vpop.f32.mrb[0].mxu0
    %v3599 = vadd.f32 0.0, %v3598
    %v3600 = vpop.f32.mrb[0].mxu0
    %v3601 = vpop.f32.mrb[0].mxu0
    %v3602 = vpop.f32.mrb[0].mxu0
    %3603 = vdwg.mxu0
    %3604 = vmatprep.subr.bf16.mxu0 0
    %3605 = vmatpush1.bf16.xpose.msra.mxu0 %v2604
    %3606 = vmatprep.subr.bf16.mxu0 0
    %3607 = vmatpush1.bf16.xpose.msra.mxu0 0
    %3608 = vmatprep.subr.bf16.mxu0 0
    %3609 = vmatpush1.bf16.xpose.msra.mxu0 0
    %3610 = vmatprep.subr.bf16.mxu0 0
    %3611 = vmatpush1.bf16.xpose.msra.mxu0 0
    %3612 = vmatprep.subr.bf16.mxu0 0
    %3613 = vmatpush1.bf16.xpose.msra.mxu0 0
    %3614 = vmatprep.subr.bf16.mxu0 0
    %3615 = vmatpush1.bf16.xpose.msra.mxu0 0
    %3616 = vmatprep.subr.bf16.mxu0 0
    %3617 = vmatpush1.bf16.xpose.msra.mxu0 0
    %3618 = vmatprep.subr.bf16.mxu0 0
    %3619 = vmatpush1.bf16.xpose.msra.mxu0 0
    %3620 = vmatprep.subr.bf16.mxu0 0
    %3621 = vmatpush1.bf16.xpose.msra.mxu0 0
    %3622 = vmatprep.subr.bf16.mxu0 0
    %3623 = vmatpush1.bf16.xpose.msra.mxu0 0
    %3624 = vmatprep.subr.bf16.mxu0 0
    %3625 = vmatpush1.bf16.xpose.msra.mxu0 0
    %3626 = vmatprep.subr.bf16.mxu0 0
    %3627 = vmatpush1.bf16.xpose.msra.mxu0 0
    %3628 = vmatprep.subr.bf16.mxu0 0
    %3629 = vmatpush1.bf16.xpose.msra.mxu0 0
    %3630 = vmatprep.subr.bf16.mxu0 0
    %3631 = vmatpush1.bf16.xpose.msra.mxu0 0
    %3632 = vmatprep.subr.bf16.mxu0 0
    %3633 = vmatpush1.bf16.xpose.msra.mxu0 0
    %3634 = vmatprep.subr.bf16.mxu0 0
    %3635 = vmatpush1.bf16.xpose.msra.mxu0 0
    %3636 = vmatprep.mubr.bf16.mxu0 0
    %3637 = vmatmul.mubr.bf16.gmra.mrb[0].mxu0 %v2540
    %v3638 = vpop.f32.mrb[0].mxu0
    %v3639 = vadd.f32 0.0, %v3638
    %v3640 = vpop.f32.mrb[0].mxu0
    %v3641 = vpop.f32.mrb[0].mxu0
    %v3642 = vpop.f32.mrb[0].mxu0
    %3643 = vdwg.mxu0
    %3644 = vmatprep.subr.bf16.mxu0 0
    %3645 = vmatpush1.bf16.xpose.msra.mxu0 %v2605
    %3646 = vmatprep.subr.bf16.mxu0 0
    %3647 = vmatpush1.bf16.xpose.msra.mxu0 0
    %3648 = vmatprep.subr.bf16.mxu0 0
    %3649 = vmatpush1.bf16.xpose.msra.mxu0 0
    %3650 = vmatprep.subr.bf16.mxu0 0
    %3651 = vmatpush1.bf16.xpose.msra.mxu0 0
    %3652 = vmatprep.subr.bf16.mxu0 0
    %3653 = vmatpush1.bf16.xpose.msra.mxu0 0
    %3654 = vmatprep.subr.bf16.mxu0 0
    %3655 = vmatpush1.bf16.xpose.msra.mxu0 0
    %3656 = vmatprep.subr.bf16.mxu0 0
    %3657 = vmatpush1.bf16.xpose.msra.mxu0 0
    %3658 = vmatprep.subr.bf16.mxu0 0
    %3659 = vmatpush1.bf16.xpose.msra.mxu0 0
    %3660 = vmatprep.subr.bf16.mxu0 0
    %3661 = vmatpush1.bf16.xpose.msra.mxu0 0
    %3662 = vmatprep.subr.bf16.mxu0 0
    %3663 = vmatpush1.bf16.xpose.msra.mxu0 0
    %3664 = vmatprep.subr.bf16.mxu0 0
    %3665 = vmatpush1.bf16.xpose.msra.mxu0 0
    %3666 = vmatprep.subr.bf16.mxu0 0
    %3667 = vmatpush1.bf16.xpose.msra.mxu0 0
    %3668 = vmatprep.subr.bf16.mxu0 0
    %3669 = vmatpush1.bf16.xpose.msra.mxu0 0
    %3670 = vmatprep.subr.bf16.mxu0 0
    %3671 = vmatpush1.bf16.xpose.msra.mxu0 0
    %3672 = vmatprep.subr.bf16.mxu0 0
    %3673 = vmatpush1.bf16.xpose.msra.mxu0 0
    %3674 = vmatprep.subr.bf16.mxu0 0
    %3675 = vmatpush1.bf16.xpose.msra.mxu0 0
    %3676 = vmatprep.mubr.bf16.mxu0 0
    %3677 = vmatmul.mubr.bf16.gmra.mrb[0].mxu0 %v2541
    %v3678 = vpop.f32.mrb[0].mxu0
    %v3679 = vadd.f32 0.0, %v3678
    %v3680 = vpop.f32.mrb[0].mxu0
    %v3681 = vpop.f32.mrb[0].mxu0
    %v3682 = vpop.f32.mrb[0].mxu0
    %3683 = vdwg.mxu0
    %3684 = vmatprep.subr.bf16.mxu0 0
    %3685 = vmatpush1.bf16.xpose.msra.mxu0 %v2606
    %3686 = vmatprep.subr.bf16.mxu0 0
    %3687 = vmatpush1.bf16.xpose.msra.mxu0 0
    %3688 = vmatprep.subr.bf16.mxu0 0
    %3689 = vmatpush1.bf16.xpose.msra.mxu0 0
    %3690 = vmatprep.subr.bf16.mxu0 0
    %3691 = vmatpush1.bf16.xpose.msra.mxu0 0
    %3692 = vmatprep.subr.bf16.mxu0 0
    %3693 = vmatpush1.bf16.xpose.msra.mxu0 0
    %3694 = vmatprep.subr.bf16.mxu0 0
    %3695 = vmatpush1.bf16.xpose.msra.mxu0 0
    %3696 = vmatprep.subr.bf16.mxu0 0
    %3697 = vmatpush1.bf16.xpose.msra.mxu0 0
    %3698 = vmatprep.subr.bf16.mxu0 0
    %3699 = vmatpush1.bf16.xpose.msra.mxu0 0
    %3700 = vmatprep.subr.bf16.mxu0 0
    %3701 = vmatpush1.bf16.xpose.msra.mxu0 0
    %3702 = vmatprep.subr.bf16.mxu0 0
    %3703 = vmatpush1.bf16.xpose.msra.mxu0 0
    %3704 = vmatprep.subr.bf16.mxu0 0
    %3705 = vmatpush1.bf16.xpose.msra.mxu0 0
    %3706 = vmatprep.subr.bf16.mxu0 0
    %3707 = vmatpush1.bf16.xpose.msra.mxu0 0
    %3708 = vmatprep.subr.bf16.mxu0 0
    %3709 = vmatpush1.bf16.xpose.msra.mxu0 0
    %3710 = vmatprep.subr.bf16.mxu0 0
    %3711 = vmatpush1.bf16.xpose.msra.mxu0 0
    %3712 = vmatprep.subr.bf16.mxu0 0
    %3713 = vmatpush1.bf16.xpose.msra.mxu0 0
    %3714 = vmatprep.subr.bf16.mxu0 0
    %3715 = vmatpush1.bf16.xpose.msra.mxu0 0
    %3716 = vmatprep.mubr.bf16.mxu0 0
    %3717 = vmatmul.mubr.bf16.gmra.mrb[0].mxu0 %v2542
    %v3718 = vpop.f32.mrb[0].mxu0
    %v3719 = vadd.f32 0.0, %v3718
    %v3720 = vpop.f32.mrb[0].mxu0
    %v3721 = vpop.f32.mrb[0].mxu0
    %v3722 = vpop.f32.mrb[0].mxu0
    %3723 = vdwg.mxu0
    %3724 = vmatprep.subr.bf16.mxu0 0
    %3725 = vmatpush1.bf16.xpose.msra.mxu0 %v2607
    %3726 = vmatprep.subr.bf16.mxu0 0
    %3727 = vmatpush1.bf16.xpose.msra.mxu0 0
    %3728 = vmatprep.subr.bf16.mxu0 0
    %3729 = vmatpush1.bf16.xpose.msra.mxu0 0
    %3730 = vmatprep.subr.bf16.mxu0 0
    %3731 = vmatpush1.bf16.xpose.msra.mxu0 0
    %3732 = vmatprep.subr.bf16.mxu0 0
    %3733 = vmatpush1.bf16.xpose.msra.mxu0 0
    %3734 = vmatprep.subr.bf16.mxu0 0
    %3735 = vmatpush1.bf16.xpose.msra.mxu0 0
    %3736 = vmatprep.subr.bf16.mxu0 0
    %3737 = vmatpush1.bf16.xpose.msra.mxu0 0
    %3738 = vmatprep.subr.bf16.mxu0 0
    %3739 = vmatpush1.bf16.xpose.msra.mxu0 0
    %3740 = vmatprep.subr.bf16.mxu0 0
    %3741 = vmatpush1.bf16.xpose.msra.mxu0 0
    %3742 = vmatprep.subr.bf16.mxu0 0
    %3743 = vmatpush1.bf16.xpose.msra.mxu0 0
    %3744 = vmatprep.subr.bf16.mxu0 0
    %3745 = vmatpush1.bf16.xpose.msra.mxu0 0
    %3746 = vmatprep.subr.bf16.mxu0 0
    %3747 = vmatpush1.bf16.xpose.msra.mxu0 0
    %3748 = vmatprep.subr.bf16.mxu0 0
    %3749 = vmatpush1.bf16.xpose.msra.mxu0 0
    %3750 = vmatprep.subr.bf16.mxu0 0
    %3751 = vmatpush1.bf16.xpose.msra.mxu0 0
    %3752 = vmatprep.subr.bf16.mxu0 0
    %3753 = vmatpush1.bf16.xpose.msra.mxu0 0
    %3754 = vmatprep.subr.bf16.mxu0 0
    %3755 = vmatpush1.bf16.xpose.msra.mxu0 0
    %3756 = vmatprep.mubr.bf16.mxu0 0
    %3757 = vmatmul.mubr.bf16.gmra.mrb[0].mxu0 %v2543
    %v3758 = vpop.f32.mrb[0].mxu0
    %v3759 = vadd.f32 0.0, %v3758
    %v3760 = vpop.f32.mrb[0].mxu0
    %v3761 = vpop.f32.mrb[0].mxu0
    %v3762 = vpop.f32.mrb[0].mxu0
    %3763 = vdwg.mxu0
    %3764 = vmatprep.subr.bf16.mxu0 0
    %3765 = vmatpush1.bf16.xpose.msra.mxu0 %v2608
    %3766 = vmatprep.subr.bf16.mxu0 0
    %3767 = vmatpush1.bf16.xpose.msra.mxu0 0
    %3768 = vmatprep.subr.bf16.mxu0 0
    %3769 = vmatpush1.bf16.xpose.msra.mxu0 0
    %3770 = vmatprep.subr.bf16.mxu0 0
    %3771 = vmatpush1.bf16.xpose.msra.mxu0 0
    %3772 = vmatprep.subr.bf16.mxu0 0
    %3773 = vmatpush1.bf16.xpose.msra.mxu0 0
    %3774 = vmatprep.subr.bf16.mxu0 0
    %3775 = vmatpush1.bf16.xpose.msra.mxu0 0
    %3776 = vmatprep.subr.bf16.mxu0 0
    %3777 = vmatpush1.bf16.xpose.msra.mxu0 0
    %3778 = vmatprep.subr.bf16.mxu0 0
    %3779 = vmatpush1.bf16.xpose.msra.mxu0 0
    %3780 = vmatprep.subr.bf16.mxu0 0
    %3781 = vmatpush1.bf16.xpose.msra.mxu0 0
    %3782 = vmatprep.subr.bf16.mxu0 0
    %3783 = vmatpush1.bf16.xpose.msra.mxu0 0
    %3784 = vmatprep.subr.bf16.mxu0 0
    %3785 = vmatpush1.bf16.xpose.msra.mxu0 0
    %3786 = vmatprep.subr.bf16.mxu0 0
    %3787 = vmatpush1.bf16.xpose.msra.mxu0 0
    %3788 = vmatprep.subr.bf16.mxu0 0
    %3789 = vmatpush1.bf16.xpose.msra.mxu0 0
    %3790 = vmatprep.subr.bf16.mxu0 0
    %3791 = vmatpush1.bf16.xpose.msra.mxu0 0
    %3792 = vmatprep.subr.bf16.mxu0 0
    %3793 = vmatpush1.bf16.xpose.msra.mxu0 0
    %3794 = vmatprep.subr.bf16.mxu0 0
    %3795 = vmatpush1.bf16.xpose.msra.mxu0 0
    %3796 = vmatprep.mubr.bf16.mxu0 0
    %3797 = vmatmul.mubr.bf16.gmra.mrb[0].mxu0 %v2544
    %v3798 = vpop.f32.mrb[0].mxu0
    %v3799 = vadd.f32 0.0, %v3798
    %v3800 = vpop.f32.mrb[0].mxu0
    %v3801 = vpop.f32.mrb[0].mxu0
    %v3802 = vpop.f32.mrb[0].mxu0
    %3803 = vdwg.mxu0
    %3804 = vmatprep.subr.bf16.mxu0 0
    %3805 = vmatpush1.bf16.xpose.msra.mxu0 %v2609
    %3806 = vmatprep.subr.bf16.mxu0 0
    %3807 = vmatpush1.bf16.xpose.msra.mxu0 0
    %3808 = vmatprep.subr.bf16.mxu0 0
    %3809 = vmatpush1.bf16.xpose.msra.mxu0 0
    %3810 = vmatprep.subr.bf16.mxu0 0
    %3811 = vmatpush1.bf16.xpose.msra.mxu0 0
    %3812 = vmatprep.subr.bf16.mxu0 0
    %3813 = vmatpush1.bf16.xpose.msra.mxu0 0
    %3814 = vmatprep.subr.bf16.mxu0 0
    %3815 = vmatpush1.bf16.xpose.msra.mxu0 0
    %3816 = vmatprep.subr.bf16.mxu0 0
    %3817 = vmatpush1.bf16.xpose.msra.mxu0 0
    %3818 = vmatprep.subr.bf16.mxu0 0
    %3819 = vmatpush1.bf16.xpose.msra.mxu0 0
    %3820 = vmatprep.subr.bf16.mxu0 0
    %3821 = vmatpush1.bf16.xpose.msra.mxu0 0
    %3822 = vmatprep.subr.bf16.mxu0 0
    %3823 = vmatpush1.bf16.xpose.msra.mxu0 0
    %3824 = vmatprep.subr.bf16.mxu0 0
    %3825 = vmatpush1.bf16.xpose.msra.mxu0 0
    %3826 = vmatprep.subr.bf16.mxu0 0
    %3827 = vmatpush1.bf16.xpose.msra.mxu0 0
    %3828 = vmatprep.subr.bf16.mxu0 0
    %3829 = vmatpush1.bf16.xpose.msra.mxu0 0
    %3830 = vmatprep.subr.bf16.mxu0 0
    %3831 = vmatpush1.bf16.xpose.msra.mxu0 0
    %3832 = vmatprep.subr.bf16.mxu0 0
    %3833 = vmatpush1.bf16.xpose.msra.mxu0 0
    %3834 = vmatprep.subr.bf16.mxu0 0
    %3835 = vmatpush1.bf16.xpose.msra.mxu0 0
    %3836 = vmatprep.mubr.bf16.mxu0 0
    %3837 = vmatmul.mubr.bf16.gmra.mrb[0].mxu0 %v2545
    %v3838 = vpop.f32.mrb[0].mxu0
    %v3839 = vadd.f32 0.0, %v3838
    %v3840 = vpop.f32.mrb[0].mxu0
    %v3841 = vpop.f32.mrb[0].mxu0
    %v3842 = vpop.f32.mrb[0].mxu0
    %3843 = vdwg.mxu0
    %3844 = vmatprep.subr.bf16.mxu0 0
    %3845 = vmatpush1.bf16.xpose.msra.mxu0 %v2610
    %3846 = vmatprep.subr.bf16.mxu0 0
    %3847 = vmatpush1.bf16.xpose.msra.mxu0 0
    %3848 = vmatprep.subr.bf16.mxu0 0
    %3849 = vmatpush1.bf16.xpose.msra.mxu0 0
    %3850 = vmatprep.subr.bf16.mxu0 0
    %3851 = vmatpush1.bf16.xpose.msra.mxu0 0
    %3852 = vmatprep.subr.bf16.mxu0 0
    %3853 = vmatpush1.bf16.xpose.msra.mxu0 0
    %3854 = vmatprep.subr.bf16.mxu0 0
    %3855 = vmatpush1.bf16.xpose.msra.mxu0 0
    %3856 = vmatprep.subr.bf16.mxu0 0
    %3857 = vmatpush1.bf16.xpose.msra.mxu0 0
    %3858 = vmatprep.subr.bf16.mxu0 0
    %3859 = vmatpush1.bf16.xpose.msra.mxu0 0
    %3860 = vmatprep.subr.bf16.mxu0 0
    %3861 = vmatpush1.bf16.xpose.msra.mxu0 0
    %3862 = vmatprep.subr.bf16.mxu0 0
    %3863 = vmatpush1.bf16.xpose.msra.mxu0 0
    %3864 = vmatprep.subr.bf16.mxu0 0
    %3865 = vmatpush1.bf16.xpose.msra.mxu0 0
    %3866 = vmatprep.subr.bf16.mxu0 0
    %3867 = vmatpush1.bf16.xpose.msra.mxu0 0
    %3868 = vmatprep.subr.bf16.mxu0 0
    %3869 = vmatpush1.bf16.xpose.msra.mxu0 0
    %3870 = vmatprep.subr.bf16.mxu0 0
    %3871 = vmatpush1.bf16.xpose.msra.mxu0 0
    %3872 = vmatprep.subr.bf16.mxu0 0
    %3873 = vmatpush1.bf16.xpose.msra.mxu0 0
    %3874 = vmatprep.subr.bf16.mxu0 0
    %3875 = vmatpush1.bf16.xpose.msra.mxu0 0
    %3876 = vmatprep.mubr.bf16.mxu0 0
    %3877 = vmatmul.mubr.bf16.gmra.mrb[0].mxu0 %v2546
    %v3878 = vpop.f32.mrb[0].mxu0
    %v3879 = vadd.f32 0.0, %v3878
    %v3880 = vpop.f32.mrb[0].mxu0
    %v3881 = vpop.f32.mrb[0].mxu0
    %v3882 = vpop.f32.mrb[0].mxu0
    %3883 = vdwg.mxu0
    %3884 = vmatprep.subr.bf16.mxu0 0
    %3885 = vmatpush1.bf16.xpose.msra.mxu0 %v2611
    %3886 = vmatprep.subr.bf16.mxu0 0
    %3887 = vmatpush1.bf16.xpose.msra.mxu0 0
    %3888 = vmatprep.subr.bf16.mxu0 0
    %3889 = vmatpush1.bf16.xpose.msra.mxu0 0
    %3890 = vmatprep.subr.bf16.mxu0 0
    %3891 = vmatpush1.bf16.xpose.msra.mxu0 0
    %3892 = vmatprep.subr.bf16.mxu0 0
    %3893 = vmatpush1.bf16.xpose.msra.mxu0 0
    %3894 = vmatprep.subr.bf16.mxu0 0
    %3895 = vmatpush1.bf16.xpose.msra.mxu0 0
    %3896 = vmatprep.subr.bf16.mxu0 0
    %3897 = vmatpush1.bf16.xpose.msra.mxu0 0
    %3898 = vmatprep.subr.bf16.mxu0 0
    %3899 = vmatpush1.bf16.xpose.msra.mxu0 0
    %3900 = vmatprep.subr.bf16.mxu0 0
    %3901 = vmatpush1.bf16.xpose.msra.mxu0 0
    %3902 = vmatprep.subr.bf16.mxu0 0
    %3903 = vmatpush1.bf16.xpose.msra.mxu0 0
    %3904 = vmatprep.subr.bf16.mxu0 0
    %3905 = vmatpush1.bf16.xpose.msra.mxu0 0
    %3906 = vmatprep.subr.bf16.mxu0 0
    %3907 = vmatpush1.bf16.xpose.msra.mxu0 0
    %3908 = vmatprep.subr.bf16.mxu0 0
    %3909 = vmatpush1.bf16.xpose.msra.mxu0 0
    %3910 = vmatprep.subr.bf16.mxu0 0
    %3911 = vmatpush1.bf16.xpose.msra.mxu0 0
    %3912 = vmatprep.subr.bf16.mxu0 0
    %3913 = vmatpush1.bf16.xpose.msra.mxu0 0
    %3914 = vmatprep.subr.bf16.mxu0 0
    %3915 = vmatpush1.bf16.xpose.msra.mxu0 0
    %3916 = vmatprep.mubr.bf16.mxu0 0
    %3917 = vmatmul.mubr.bf16.gmra.mrb[0].mxu0 %v2547
    %v3918 = vpop.f32.mrb[0].mxu0
    %v3919 = vadd.f32 0.0, %v3918
    %v3920 = vpop.f32.mrb[0].mxu0
    %v3921 = vpop.f32.mrb[0].mxu0
    %v3922 = vpop.f32.mrb[0].mxu0
    %3923 = vdwg.mxu0
    %3924 = vmatprep.subr.bf16.mxu0 0
    %3925 = vmatpush1.bf16.xpose.msra.mxu0 %v2612
    %3926 = vmatprep.subr.bf16.mxu0 0
    %3927 = vmatpush1.bf16.xpose.msra.mxu0 0
    %3928 = vmatprep.subr.bf16.mxu0 0
    %3929 = vmatpush1.bf16.xpose.msra.mxu0 0
    %3930 = vmatprep.subr.bf16.mxu0 0
    %3931 = vmatpush1.bf16.xpose.msra.mxu0 0
    %3932 = vmatprep.subr.bf16.mxu0 0
    %3933 = vmatpush1.bf16.xpose.msra.mxu0 0
    %3934 = vmatprep.subr.bf16.mxu0 0
    %3935 = vmatpush1.bf16.xpose.msra.mxu0 0
    %3936 = vmatprep.subr.bf16.mxu0 0
    %3937 = vmatpush1.bf16.xpose.msra.mxu0 0
    %3938 = vmatprep.subr.bf16.mxu0 0
    %3939 = vmatpush1.bf16.xpose.msra.mxu0 0
    %3940 = vmatprep.subr.bf16.mxu0 0
    %3941 = vmatpush1.bf16.xpose.msra.mxu0 0
    %3942 = vmatprep.subr.bf16.mxu0 0
    %3943 = vmatpush1.bf16.xpose.msra.mxu0 0
    %3944 = vmatprep.subr.bf16.mxu0 0
    %3945 = vmatpush1.bf16.xpose.msra.mxu0 0
    %3946 = vmatprep.subr.bf16.mxu0 0
    %3947 = vmatpush1.bf16.xpose.msra.mxu0 0
    %3948 = vmatprep.subr.bf16.mxu0 0
    %3949 = vmatpush1.bf16.xpose.msra.mxu0 0
    %3950 = vmatprep.subr.bf16.mxu0 0
    %3951 = vmatpush1.bf16.xpose.msra.mxu0 0
    %3952 = vmatprep.subr.bf16.mxu0 0
    %3953 = vmatpush1.bf16.xpose.msra.mxu0 0
    %3954 = vmatprep.subr.bf16.mxu0 0
    %3955 = vmatpush1.bf16.xpose.msra.mxu0 0
    %3956 = vmatprep.mubr.bf16.mxu0 0
    %3957 = vmatmul.mubr.bf16.gmra.mrb[0].mxu0 %v2548
    %v3958 = vpop.f32.mrb[0].mxu0
    %v3959 = vadd.f32 0.0, %v3958
    %v3960 = vpop.f32.mrb[0].mxu0
    %v3961 = vpop.f32.mrb[0].mxu0
    %v3962 = vpop.f32.mrb[0].mxu0
    %3963 = vdwg.mxu0
    %3964 = vmatprep.subr.bf16.mxu0 0
    %3965 = vmatpush1.bf16.xpose.msra.mxu0 %v2613
    %3966 = vmatprep.subr.bf16.mxu0 0
    %3967 = vmatpush1.bf16.xpose.msra.mxu0 0
    %3968 = vmatprep.subr.bf16.mxu0 0
    %3969 = vmatpush1.bf16.xpose.msra.mxu0 0
    %3970 = vmatprep.subr.bf16.mxu0 0
    %3971 = vmatpush1.bf16.xpose.msra.mxu0 0
    %3972 = vmatprep.subr.bf16.mxu0 0
    %3973 = vmatpush1.bf16.xpose.msra.mxu0 0
    %3974 = vmatprep.subr.bf16.mxu0 0
    %3975 = vmatpush1.bf16.xpose.msra.mxu0 0
    %3976 = vmatprep.subr.bf16.mxu0 0
    %3977 = vmatpush1.bf16.xpose.msra.mxu0 0
    %3978 = vmatprep.subr.bf16.mxu0 0
    %3979 = vmatpush1.bf16.xpose.msra.mxu0 0
    %3980 = vmatprep.subr.bf16.mxu0 0
    %3981 = vmatpush1.bf16.xpose.msra.mxu0 0
    %3982 = vmatprep.subr.bf16.mxu0 0
    %3983 = vmatpush1.bf16.xpose.msra.mxu0 0
    %3984 = vmatprep.subr.bf16.mxu0 0
    %3985 = vmatpush1.bf16.xpose.msra.mxu0 0
    %3986 = vmatprep.subr.bf16.mxu0 0
    %3987 = vmatpush1.bf16.xpose.msra.mxu0 0
    %3988 = vmatprep.subr.bf16.mxu0 0
    %3989 = vmatpush1.bf16.xpose.msra.mxu0 0
    %3990 = vmatprep.subr.bf16.mxu0 0
    %3991 = vmatpush1.bf16.xpose.msra.mxu0 0
    %3992 = vmatprep.subr.bf16.mxu0 0
    %3993 = vmatpush1.bf16.xpose.msra.mxu0 0
    %3994 = vmatprep.subr.bf16.mxu0 0
    %3995 = vmatpush1.bf16.xpose.msra.mxu0 0
    %3996 = vmatprep.mubr.bf16.mxu0 0
    %3997 = vmatmul.mubr.bf16.gmra.mrb[0].mxu0 %v2549
    %v3998 = vpop.f32.mrb[0].mxu0
    %v3999 = vadd.f32 0.0, %v3998
    %v4000 = vpop.f32.mrb[0].mxu0
    %v4001 = vpop.f32.mrb[0].mxu0
    %v4002 = vpop.f32.mrb[0].mxu0
    %4003 = vdwg.mxu0
    %4004 = vmatprep.subr.bf16.mxu0 0
    %4005 = vmatpush1.bf16.xpose.msra.mxu0 %v2614
    %4006 = vmatprep.subr.bf16.mxu0 0
    %4007 = vmatpush1.bf16.xpose.msra.mxu0 0
    %4008 = vmatprep.subr.bf16.mxu0 0
    %4009 = vmatpush1.bf16.xpose.msra.mxu0 0
    %4010 = vmatprep.subr.bf16.mxu0 0
    %4011 = vmatpush1.bf16.xpose.msra.mxu0 0
    %4012 = vmatprep.subr.bf16.mxu0 0
    %4013 = vmatpush1.bf16.xpose.msra.mxu0 0
    %4014 = vmatprep.subr.bf16.mxu0 0
    %4015 = vmatpush1.bf16.xpose.msra.mxu0 0
    %4016 = vmatprep.subr.bf16.mxu0 0
    %4017 = vmatpush1.bf16.xpose.msra.mxu0 0
    %4018 = vmatprep.subr.bf16.mxu0 0
    %4019 = vmatpush1.bf16.xpose.msra.mxu0 0
    %4020 = vmatprep.subr.bf16.mxu0 0
    %4021 = vmatpush1.bf16.xpose.msra.mxu0 0
    %4022 = vmatprep.subr.bf16.mxu0 0
    %4023 = vmatpush1.bf16.xpose.msra.mxu0 0
    %4024 = vmatprep.subr.bf16.mxu0 0
    %4025 = vmatpush1.bf16.xpose.msra.mxu0 0
    %4026 = vmatprep.subr.bf16.mxu0 0
    %4027 = vmatpush1.bf16.xpose.msra.mxu0 0
    %4028 = vmatprep.subr.bf16.mxu0 0
    %4029 = vmatpush1.bf16.xpose.msra.mxu0 0
    %4030 = vmatprep.subr.bf16.mxu0 0
    %4031 = vmatpush1.bf16.xpose.msra.mxu0 0
    %4032 = vmatprep.subr.bf16.mxu0 0
    %4033 = vmatpush1.bf16.xpose.msra.mxu0 0
    %4034 = vmatprep.subr.bf16.mxu0 0
    %4035 = vmatpush1.bf16.xpose.msra.mxu0 0
    %4036 = vmatprep.mubr.bf16.mxu0 0
    %4037 = vmatmul.mubr.bf16.gmra.mrb[0].mxu0 %v2550
    %v4038 = vpop.f32.mrb[0].mxu0
    %v4039 = vadd.f32 0.0, %v4038
    %v4040 = vpop.f32.mrb[0].mxu0
    %v4041 = vpop.f32.mrb[0].mxu0
    %v4042 = vpop.f32.mrb[0].mxu0
    %4043 = vdwg.mxu0
    %4044 = vmatprep.subr.bf16.mxu0 0
    %4045 = vmatpush1.bf16.xpose.msra.mxu0 %v2615
    %4046 = vmatprep.subr.bf16.mxu0 0
    %4047 = vmatpush1.bf16.xpose.msra.mxu0 0
    %4048 = vmatprep.subr.bf16.mxu0 0
    %4049 = vmatpush1.bf16.xpose.msra.mxu0 0
    %4050 = vmatprep.subr.bf16.mxu0 0
    %4051 = vmatpush1.bf16.xpose.msra.mxu0 0
    %4052 = vmatprep.subr.bf16.mxu0 0
    %4053 = vmatpush1.bf16.xpose.msra.mxu0 0
    %4054 = vmatprep.subr.bf16.mxu0 0
    %4055 = vmatpush1.bf16.xpose.msra.mxu0 0
    %4056 = vmatprep.subr.bf16.mxu0 0
    %4057 = vmatpush1.bf16.xpose.msra.mxu0 0
    %4058 = vmatprep.subr.bf16.mxu0 0
    %4059 = vmatpush1.bf16.xpose.msra.mxu0 0
    %4060 = vmatprep.subr.bf16.mxu0 0
    %4061 = vmatpush1.bf16.xpose.msra.mxu0 0
    %4062 = vmatprep.subr.bf16.mxu0 0
    %4063 = vmatpush1.bf16.xpose.msra.mxu0 0
    %4064 = vmatprep.subr.bf16.mxu0 0
    %4065 = vmatpush1.bf16.xpose.msra.mxu0 0
    %4066 = vmatprep.subr.bf16.mxu0 0
    %4067 = vmatpush1.bf16.xpose.msra.mxu0 0
    %4068 = vmatprep.subr.bf16.mxu0 0
    %4069 = vmatpush1.bf16.xpose.msra.mxu0 0
    %4070 = vmatprep.subr.bf16.mxu0 0
    %4071 = vmatpush1.bf16.xpose.msra.mxu0 0
    %4072 = vmatprep.subr.bf16.mxu0 0
    %4073 = vmatpush1.bf16.xpose.msra.mxu0 0
    %4074 = vmatprep.subr.bf16.mxu0 0
    %4075 = vmatpush1.bf16.xpose.msra.mxu0 0
    %4076 = vmatprep.mubr.bf16.mxu0 0
    %4077 = vmatmul.mubr.bf16.gmra.mrb[0].mxu0 %v2551
    %v4078 = vpop.f32.mrb[0].mxu0
    %v4079 = vadd.f32 0.0, %v4078
    %v4080 = vpop.f32.mrb[0].mxu0
    %v4081 = vpop.f32.mrb[0].mxu0
    %v4082 = vpop.f32.mrb[0].mxu0
    %4083 = vdwg.mxu0
    %4084 = vmatprep.subr.bf16.mxu0 0
    %4085 = vmatpush1.bf16.xpose.msra.mxu0 %v2616
    %4086 = vmatprep.subr.bf16.mxu0 0
    %4087 = vmatpush1.bf16.xpose.msra.mxu0 0
    %4088 = vmatprep.subr.bf16.mxu0 0
    %4089 = vmatpush1.bf16.xpose.msra.mxu0 0
    %4090 = vmatprep.subr.bf16.mxu0 0
    %4091 = vmatpush1.bf16.xpose.msra.mxu0 0
    %4092 = vmatprep.subr.bf16.mxu0 0
    %4093 = vmatpush1.bf16.xpose.msra.mxu0 0
    %4094 = vmatprep.subr.bf16.mxu0 0
    %4095 = vmatpush1.bf16.xpose.msra.mxu0 0
    %4096 = vmatprep.subr.bf16.mxu0 0
    %4097 = vmatpush1.bf16.xpose.msra.mxu0 0
    %4098 = vmatprep.subr.bf16.mxu0 0
    %4099 = vmatpush1.bf16.xpose.msra.mxu0 0
    %4100 = vmatprep.subr.bf16.mxu0 0
    %4101 = vmatpush1.bf16.xpose.msra.mxu0 0
    %4102 = vmatprep.subr.bf16.mxu0 0
    %4103 = vmatpush1.bf16.xpose.msra.mxu0 0
    %4104 = vmatprep.subr.bf16.mxu0 0
    %4105 = vmatpush1.bf16.xpose.msra.mxu0 0
    %4106 = vmatprep.subr.bf16.mxu0 0
    %4107 = vmatpush1.bf16.xpose.msra.mxu0 0
    %4108 = vmatprep.subr.bf16.mxu0 0
    %4109 = vmatpush1.bf16.xpose.msra.mxu0 0
    %4110 = vmatprep.subr.bf16.mxu0 0
    %4111 = vmatpush1.bf16.xpose.msra.mxu0 0
    %4112 = vmatprep.subr.bf16.mxu0 0
    %4113 = vmatpush1.bf16.xpose.msra.mxu0 0
    %4114 = vmatprep.subr.bf16.mxu0 0
    %4115 = vmatpush1.bf16.xpose.msra.mxu0 0
    %4116 = vmatprep.mubr.bf16.mxu0 0
    %4117 = vmatmul.mubr.bf16.gmra.mrb[0].mxu0 %v2552
    %v4118 = vpop.f32.mrb[0].mxu0
    %v4119 = vadd.f32 0.0, %v4118
    %v4120 = vpop.f32.mrb[0].mxu0
    %v4121 = vpop.f32.mrb[0].mxu0
    %v4122 = vpop.f32.mrb[0].mxu0
    %4123 = vdwg.mxu0
    %4124 = vmatprep.subr.bf16.mxu0 0
    %4125 = vmatpush1.bf16.xpose.msra.mxu0 %v2617
    %4126 = vmatprep.subr.bf16.mxu0 0
    %4127 = vmatpush1.bf16.xpose.msra.mxu0 0
    %4128 = vmatprep.subr.bf16.mxu0 0
    %4129 = vmatpush1.bf16.xpose.msra.mxu0 0
    %4130 = vmatprep.subr.bf16.mxu0 0
    %4131 = vmatpush1.bf16.xpose.msra.mxu0 0
    %4132 = vmatprep.subr.bf16.mxu0 0
    %4133 = vmatpush1.bf16.xpose.msra.mxu0 0
    %4134 = vmatprep.subr.bf16.mxu0 0
    %4135 = vmatpush1.bf16.xpose.msra.mxu0 0
    %4136 = vmatprep.subr.bf16.mxu0 0
    %4137 = vmatpush1.bf16.xpose.msra.mxu0 0
    %4138 = vmatprep.subr.bf16.mxu0 0
    %4139 = vmatpush1.bf16.xpose.msra.mxu0 0
    %4140 = vmatprep.subr.bf16.mxu0 0
    %4141 = vmatpush1.bf16.xpose.msra.mxu0 0
    %4142 = vmatprep.subr.bf16.mxu0 0
    %4143 = vmatpush1.bf16.xpose.msra.mxu0 0
    %4144 = vmatprep.subr.bf16.mxu0 0
    %4145 = vmatpush1.bf16.xpose.msra.mxu0 0
    %4146 = vmatprep.subr.bf16.mxu0 0
    %4147 = vmatpush1.bf16.xpose.msra.mxu0 0
    %4148 = vmatprep.subr.bf16.mxu0 0
    %4149 = vmatpush1.bf16.xpose.msra.mxu0 0
    %4150 = vmatprep.subr.bf16.mxu0 0
    %4151 = vmatpush1.bf16.xpose.msra.mxu0 0
    %4152 = vmatprep.subr.bf16.mxu0 0
    %4153 = vmatpush1.bf16.xpose.msra.mxu0 0
    %4154 = vmatprep.subr.bf16.mxu0 0
    %4155 = vmatpush1.bf16.xpose.msra.mxu0 0
    %4156 = vmatprep.mubr.bf16.mxu0 0
    %4157 = vmatmul.mubr.bf16.gmra.mrb[0].mxu0 %v2553
    %v4158 = vpop.f32.mrb[0].mxu0
    %v4159 = vadd.f32 0.0, %v4158
    %v4160 = vpop.f32.mrb[0].mxu0
    %v4161 = vpop.f32.mrb[0].mxu0
    %v4162 = vpop.f32.mrb[0].mxu0
    %4163 = vdwg.mxu0
    %4164 = vmatprep.subr.bf16.mxu0 0
    %4165 = vmatpush1.bf16.xpose.msra.mxu0 %v2618
    %4166 = vmatprep.subr.bf16.mxu0 0
    %4167 = vmatpush1.bf16.xpose.msra.mxu0 0
    %4168 = vmatprep.subr.bf16.mxu0 0
    %4169 = vmatpush1.bf16.xpose.msra.mxu0 0
    %4170 = vmatprep.subr.bf16.mxu0 0
    %4171 = vmatpush1.bf16.xpose.msra.mxu0 0
    %4172 = vmatprep.subr.bf16.mxu0 0
    %4173 = vmatpush1.bf16.xpose.msra.mxu0 0
    %4174 = vmatprep.subr.bf16.mxu0 0
    %4175 = vmatpush1.bf16.xpose.msra.mxu0 0
    %4176 = vmatprep.subr.bf16.mxu0 0
    %4177 = vmatpush1.bf16.xpose.msra.mxu0 0
    %4178 = vmatprep.subr.bf16.mxu0 0
    %4179 = vmatpush1.bf16.xpose.msra.mxu0 0
    %4180 = vmatprep.subr.bf16.mxu0 0
    %4181 = vmatpush1.bf16.xpose.msra.mxu0 0
    %4182 = vmatprep.subr.bf16.mxu0 0
    %4183 = vmatpush1.bf16.xpose.msra.mxu0 0
    %4184 = vmatprep.subr.bf16.mxu0 0
    %4185 = vmatpush1.bf16.xpose.msra.mxu0 0
    %4186 = vmatprep.subr.bf16.mxu0 0
    %4187 = vmatpush1.bf16.xpose.msra.mxu0 0
    %4188 = vmatprep.subr.bf16.mxu0 0
    %4189 = vmatpush1.bf16.xpose.msra.mxu0 0
    %4190 = vmatprep.subr.bf16.mxu0 0
    %4191 = vmatpush1.bf16.xpose.msra.mxu0 0
    %4192 = vmatprep.subr.bf16.mxu0 0
    %4193 = vmatpush1.bf16.xpose.msra.mxu0 0
    %4194 = vmatprep.subr.bf16.mxu0 0
    %4195 = vmatpush1.bf16.xpose.msra.mxu0 0
    %4196 = vmatprep.mubr.bf16.mxu0 0
    %4197 = vmatmul.mubr.bf16.gmra.mrb[0].mxu0 %v2554
    %v4198 = vpop.f32.mrb[0].mxu0
    %v4199 = vadd.f32 0.0, %v4198
    %v4200 = vpop.f32.mrb[0].mxu0
    %v4201 = vpop.f32.mrb[0].mxu0
    %v4202 = vpop.f32.mrb[0].mxu0
    %4203 = vdwg.mxu0
    %4204 = vmatprep.subr.bf16.mxu0 0
    %4205 = vmatpush1.bf16.xpose.msra.mxu0 %v2619
    %4206 = vmatprep.subr.bf16.mxu0 0
    %4207 = vmatpush1.bf16.xpose.msra.mxu0 0
    %4208 = vmatprep.subr.bf16.mxu0 0
    %4209 = vmatpush1.bf16.xpose.msra.mxu0 0
    %4210 = vmatprep.subr.bf16.mxu0 0
    %4211 = vmatpush1.bf16.xpose.msra.mxu0 0
    %4212 = vmatprep.subr.bf16.mxu0 0
    %4213 = vmatpush1.bf16.xpose.msra.mxu0 0
    %4214 = vmatprep.subr.bf16.mxu0 0
    %4215 = vmatpush1.bf16.xpose.msra.mxu0 0
    %4216 = vmatprep.subr.bf16.mxu0 0
    %4217 = vmatpush1.bf16.xpose.msra.mxu0 0
    %4218 = vmatprep.subr.bf16.mxu0 0
    %4219 = vmatpush1.bf16.xpose.msra.mxu0 0
    %4220 = vmatprep.subr.bf16.mxu0 0
    %4221 = vmatpush1.bf16.xpose.msra.mxu0 0
    %4222 = vmatprep.subr.bf16.mxu0 0
    %4223 = vmatpush1.bf16.xpose.msra.mxu0 0
    %4224 = vmatprep.subr.bf16.mxu0 0
    %4225 = vmatpush1.bf16.xpose.msra.mxu0 0
    %4226 = vmatprep.subr.bf16.mxu0 0
    %4227 = vmatpush1.bf16.xpose.msra.mxu0 0
    %4228 = vmatprep.subr.bf16.mxu0 0
    %4229 = vmatpush1.bf16.xpose.msra.mxu0 0
    %4230 = vmatprep.subr.bf16.mxu0 0
    %4231 = vmatpush1.bf16.xpose.msra.mxu0 0
    %4232 = vmatprep.subr.bf16.mxu0 0
    %4233 = vmatpush1.bf16.xpose.msra.mxu0 0
    %4234 = vmatprep.subr.bf16.mxu0 0
    %4235 = vmatpush1.bf16.xpose.msra.mxu0 0
    %4236 = vmatprep.mubr.bf16.mxu0 0
    %4237 = vmatmul.mubr.bf16.gmra.mrb[0].mxu0 %v2555
    %v4238 = vpop.f32.mrb[0].mxu0
    %v4239 = vadd.f32 0.0, %v4238
    %v4240 = vpop.f32.mrb[0].mxu0
    %v4241 = vpop.f32.mrb[0].mxu0
    %v4242 = vpop.f32.mrb[0].mxu0
    %4243 = vdwg.mxu0
    %4244 = vmatprep.subr.bf16.mxu0 0
    %4245 = vmatpush1.bf16.xpose.msra.mxu0 %v2620
    %4246 = vmatprep.subr.bf16.mxu0 0
    %4247 = vmatpush1.bf16.xpose.msra.mxu0 0
    %4248 = vmatprep.subr.bf16.mxu0 0
    %4249 = vmatpush1.bf16.xpose.msra.mxu0 0
    %4250 = vmatprep.subr.bf16.mxu0 0
    %4251 = vmatpush1.bf16.xpose.msra.mxu0 0
    %4252 = vmatprep.subr.bf16.mxu0 0
    %4253 = vmatpush1.bf16.xpose.msra.mxu0 0
    %4254 = vmatprep.subr.bf16.mxu0 0
    %4255 = vmatpush1.bf16.xpose.msra.mxu0 0
    %4256 = vmatprep.subr.bf16.mxu0 0
    %4257 = vmatpush1.bf16.xpose.msra.mxu0 0
    %4258 = vmatprep.subr.bf16.mxu0 0
    %4259 = vmatpush1.bf16.xpose.msra.mxu0 0
    %4260 = vmatprep.subr.bf16.mxu0 0
    %4261 = vmatpush1.bf16.xpose.msra.mxu0 0
    %4262 = vmatprep.subr.bf16.mxu0 0
    %4263 = vmatpush1.bf16.xpose.msra.mxu0 0
    %4264 = vmatprep.subr.bf16.mxu0 0
    %4265 = vmatpush1.bf16.xpose.msra.mxu0 0
    %4266 = vmatprep.subr.bf16.mxu0 0
    %4267 = vmatpush1.bf16.xpose.msra.mxu0 0
    %4268 = vmatprep.subr.bf16.mxu0 0
    %4269 = vmatpush1.bf16.xpose.msra.mxu0 0
    %4270 = vmatprep.subr.bf16.mxu0 0
    %4271 = vmatpush1.bf16.xpose.msra.mxu0 0
    %4272 = vmatprep.subr.bf16.mxu0 0
    %4273 = vmatpush1.bf16.xpose.msra.mxu0 0
    %4274 = vmatprep.subr.bf16.mxu0 0
    %4275 = vmatpush1.bf16.xpose.msra.mxu0 0
    %4276 = vmatprep.mubr.bf16.mxu0 0
    %4277 = vmatmul.mubr.bf16.gmra.mrb[0].mxu0 %v2556
    %v4278 = vpop.f32.mrb[0].mxu0
    %v4279 = vadd.f32 0.0, %v4278
    %v4280 = vpop.f32.mrb[0].mxu0
    %v4281 = vpop.f32.mrb[0].mxu0
    %v4282 = vpop.f32.mrb[0].mxu0
    %4283 = vdwg.mxu0
    %4284 = vmatprep.subr.bf16.mxu0 0
    %4285 = vmatpush1.bf16.xpose.msra.mxu0 %v2621
    %4286 = vmatprep.subr.bf16.mxu0 0
    %4287 = vmatpush1.bf16.xpose.msra.mxu0 0
    %4288 = vmatprep.subr.bf16.mxu0 0
    %4289 = vmatpush1.bf16.xpose.msra.mxu0 0
    %4290 = vmatprep.subr.bf16.mxu0 0
    %4291 = vmatpush1.bf16.xpose.msra.mxu0 0
    %4292 = vmatprep.subr.bf16.mxu0 0
    %4293 = vmatpush1.bf16.xpose.msra.mxu0 0
    %4294 = vmatprep.subr.bf16.mxu0 0
    %4295 = vmatpush1.bf16.xpose.msra.mxu0 0
    %4296 = vmatprep.subr.bf16.mxu0 0
    %4297 = vmatpush1.bf16.xpose.msra.mxu0 0
    %4298 = vmatprep.subr.bf16.mxu0 0
    %4299 = vmatpush1.bf16.xpose.msra.mxu0 0
    %4300 = vmatprep.subr.bf16.mxu0 0
    %4301 = vmatpush1.bf16.xpose.msra.mxu0 0
    %4302 = vmatprep.subr.bf16.mxu0 0
    %4303 = vmatpush1.bf16.xpose.msra.mxu0 0
    %4304 = vmatprep.subr.bf16.mxu0 0
    %4305 = vmatpush1.bf16.xpose.msra.mxu0 0
    %4306 = vmatprep.subr.bf16.mxu0 0
    %4307 = vmatpush1.bf16.xpose.msra.mxu0 0
    %4308 = vmatprep.subr.bf16.mxu0 0
    %4309 = vmatpush1.bf16.xpose.msra.mxu0 0
    %4310 = vmatprep.subr.bf16.mxu0 0
    %4311 = vmatpush1.bf16.xpose.msra.mxu0 0
    %4312 = vmatprep.subr.bf16.mxu0 0
    %4313 = vmatpush1.bf16.xpose.msra.mxu0 0
    %4314 = vmatprep.subr.bf16.mxu0 0
    %4315 = vmatpush1.bf16.xpose.msra.mxu0 0
    %4316 = vmatprep.mubr.bf16.mxu0 0
    %4317 = vmatmul.mubr.bf16.gmra.mrb[0].mxu0 %v2557
    %v4318 = vpop.f32.mrb[0].mxu0
    %v4319 = vadd.f32 0.0, %v4318
    %v4320 = vpop.f32.mrb[0].mxu0
    %v4321 = vpop.f32.mrb[0].mxu0
    %v4322 = vpop.f32.mrb[0].mxu0
    %4323 = vdwg.mxu0
    %4324 = vmatprep.subr.bf16.mxu0 0
    %4325 = vmatpush1.bf16.xpose.msra.mxu0 %v2622
    %4326 = vmatprep.subr.bf16.mxu0 0
    %4327 = vmatpush1.bf16.xpose.msra.mxu0 0
    %4328 = vmatprep.subr.bf16.mxu0 0
    %4329 = vmatpush1.bf16.xpose.msra.mxu0 0
    %4330 = vmatprep.subr.bf16.mxu0 0
    %4331 = vmatpush1.bf16.xpose.msra.mxu0 0
    %4332 = vmatprep.subr.bf16.mxu0 0
    %4333 = vmatpush1.bf16.xpose.msra.mxu0 0
    %4334 = vmatprep.subr.bf16.mxu0 0
    %4335 = vmatpush1.bf16.xpose.msra.mxu0 0
    %4336 = vmatprep.subr.bf16.mxu0 0
    %4337 = vmatpush1.bf16.xpose.msra.mxu0 0
    %4338 = vmatprep.subr.bf16.mxu0 0
    %4339 = vmatpush1.bf16.xpose.msra.mxu0 0
    %4340 = vmatprep.subr.bf16.mxu0 0
    %4341 = vmatpush1.bf16.xpose.msra.mxu0 0
    %4342 = vmatprep.subr.bf16.mxu0 0
    %4343 = vmatpush1.bf16.xpose.msra.mxu0 0
    %4344 = vmatprep.subr.bf16.mxu0 0
    %4345 = vmatpush1.bf16.xpose.msra.mxu0 0
    %4346 = vmatprep.subr.bf16.mxu0 0
    %4347 = vmatpush1.bf16.xpose.msra.mxu0 0
    %4348 = vmatprep.subr.bf16.mxu0 0
    %4349 = vmatpush1.bf16.xpose.msra.mxu0 0
    %4350 = vmatprep.subr.bf16.mxu0 0
    %4351 = vmatpush1.bf16.xpose.msra.mxu0 0
    %4352 = vmatprep.subr.bf16.mxu0 0
    %4353 = vmatpush1.bf16.xpose.msra.mxu0 0
    %4354 = vmatprep.subr.bf16.mxu0 0
    %4355 = vmatpush1.bf16.xpose.msra.mxu0 0
    %4356 = vmatprep.mubr.bf16.mxu0 0
    %4357 = vmatmul.mubr.bf16.gmra.mrb[0].mxu0 %v2558
    %v4358 = vpop.f32.mrb[0].mxu0
    %v4359 = vadd.f32 0.0, %v4358
    %v4360 = vpop.f32.mrb[0].mxu0
    %v4361 = vpop.f32.mrb[0].mxu0
    %v4362 = vpop.f32.mrb[0].mxu0
    %4363 = vdwg.mxu0
    %4364 = vmatprep.subr.bf16.mxu0 0
    %4365 = vmatpush1.bf16.xpose.msra.mxu0 %v2623
    %4366 = vmatprep.subr.bf16.mxu0 0
    %4367 = vmatpush1.bf16.xpose.msra.mxu0 0
    %4368 = vmatprep.subr.bf16.mxu0 0
    %4369 = vmatpush1.bf16.xpose.msra.mxu0 0
    %4370 = vmatprep.subr.bf16.mxu0 0
    %4371 = vmatpush1.bf16.xpose.msra.mxu0 0
    %4372 = vmatprep.subr.bf16.mxu0 0
    %4373 = vmatpush1.bf16.xpose.msra.mxu0 0
    %4374 = vmatprep.subr.bf16.mxu0 0
    %4375 = vmatpush1.bf16.xpose.msra.mxu0 0
    %4376 = vmatprep.subr.bf16.mxu0 0
    %4377 = vmatpush1.bf16.xpose.msra.mxu0 0
    %4378 = vmatprep.subr.bf16.mxu0 0
    %4379 = vmatpush1.bf16.xpose.msra.mxu0 0
    %4380 = vmatprep.subr.bf16.mxu0 0
    %4381 = vmatpush1.bf16.xpose.msra.mxu0 0
    %4382 = vmatprep.subr.bf16.mxu0 0
    %4383 = vmatpush1.bf16.xpose.msra.mxu0 0
    %4384 = vmatprep.subr.bf16.mxu0 0
    %4385 = vmatpush1.bf16.xpose.msra.mxu0 0
    %4386 = vmatprep.subr.bf16.mxu0 0
    %4387 = vmatpush1.bf16.xpose.msra.mxu0 0
    %4388 = vmatprep.subr.bf16.mxu0 0
    %4389 = vmatpush1.bf16.xpose.msra.mxu0 0
    %4390 = vmatprep.subr.bf16.mxu0 0
    %4391 = vmatpush1.bf16.xpose.msra.mxu0 0
    %4392 = vmatprep.subr.bf16.mxu0 0
    %4393 = vmatpush1.bf16.xpose.msra.mxu0 0
    %4394 = vmatprep.subr.bf16.mxu0 0
    %4395 = vmatpush1.bf16.xpose.msra.mxu0 0
    %4396 = vmatprep.mubr.bf16.mxu0 0
    %4397 = vmatmul.mubr.bf16.gmra.mrb[0].mxu0 %v2559
    %v4398 = vpop.f32.mrb[0].mxu0
    %v4399 = vadd.f32 0.0, %v4398
    %v4400 = vpop.f32.mrb[0].mxu0
    %v4401 = vpop.f32.mrb[0].mxu0
    %v4402 = vpop.f32.mrb[0].mxu0
    %4403 = vdwg.mxu0
    %4404 = vmatprep.subr.bf16.mxu0 0
    %4405 = vmatpush1.bf16.xpose.msra.mxu0 %v2624
    %4406 = vmatprep.subr.bf16.mxu0 0
    %4407 = vmatpush1.bf16.xpose.msra.mxu0 0
    %4408 = vmatprep.subr.bf16.mxu0 0
    %4409 = vmatpush1.bf16.xpose.msra.mxu0 0
    %4410 = vmatprep.subr.bf16.mxu0 0
    %4411 = vmatpush1.bf16.xpose.msra.mxu0 0
    %4412 = vmatprep.subr.bf16.mxu0 0
    %4413 = vmatpush1.bf16.xpose.msra.mxu0 0
    %4414 = vmatprep.subr.bf16.mxu0 0
    %4415 = vmatpush1.bf16.xpose.msra.mxu0 0
    %4416 = vmatprep.subr.bf16.mxu0 0
    %4417 = vmatpush1.bf16.xpose.msra.mxu0 0
    %4418 = vmatprep.subr.bf16.mxu0 0
    %4419 = vmatpush1.bf16.xpose.msra.mxu0 0
    %4420 = vmatprep.subr.bf16.mxu0 0
    %4421 = vmatpush1.bf16.xpose.msra.mxu0 0
    %4422 = vmatprep.subr.bf16.mxu0 0
    %4423 = vmatpush1.bf16.xpose.msra.mxu0 0
    %4424 = vmatprep.subr.bf16.mxu0 0
    %4425 = vmatpush1.bf16.xpose.msra.mxu0 0
    %4426 = vmatprep.subr.bf16.mxu0 0
    %4427 = vmatpush1.bf16.xpose.msra.mxu0 0
    %4428 = vmatprep.subr.bf16.mxu0 0
    %4429 = vmatpush1.bf16.xpose.msra.mxu0 0
    %4430 = vmatprep.subr.bf16.mxu0 0
    %4431 = vmatpush1.bf16.xpose.msra.mxu0 0
    %4432 = vmatprep.subr.bf16.mxu0 0
    %4433 = vmatpush1.bf16.xpose.msra.mxu0 0
    %4434 = vmatprep.subr.bf16.mxu0 0
    %4435 = vmatpush1.bf16.xpose.msra.mxu0 0
    %4436 = vmatprep.mubr.bf16.mxu0 0
    %4437 = vmatmul.mubr.bf16.gmra.mrb[0].mxu0 %v2560
    %v4438 = vpop.f32.mrb[0].mxu0
    %v4439 = vadd.f32 0.0, %v4438
    %v4440 = vpop.f32.mrb[0].mxu0
    %v4441 = vpop.f32.mrb[0].mxu0
    %v4442 = vpop.f32.mrb[0].mxu0
    %4443 = vdwg.mxu0
    %4444 = vmatprep.subr.bf16.mxu0 0
    %4445 = vmatpush1.bf16.xpose.msra.mxu0 %v2625
    %4446 = vmatprep.subr.bf16.mxu0 0
    %4447 = vmatpush1.bf16.xpose.msra.mxu0 0
    %4448 = vmatprep.subr.bf16.mxu0 0
    %4449 = vmatpush1.bf16.xpose.msra.mxu0 0
    %4450 = vmatprep.subr.bf16.mxu0 0
    %4451 = vmatpush1.bf16.xpose.msra.mxu0 0
    %4452 = vmatprep.subr.bf16.mxu0 0
    %4453 = vmatpush1.bf16.xpose.msra.mxu0 0
    %4454 = vmatprep.subr.bf16.mxu0 0
    %4455 = vmatpush1.bf16.xpose.msra.mxu0 0
    %4456 = vmatprep.subr.bf16.mxu0 0
    %4457 = vmatpush1.bf16.xpose.msra.mxu0 0
    %4458 = vmatprep.subr.bf16.mxu0 0
    %4459 = vmatpush1.bf16.xpose.msra.mxu0 0
    %4460 = vmatprep.subr.bf16.mxu0 0
    %4461 = vmatpush1.bf16.xpose.msra.mxu0 0
    %4462 = vmatprep.subr.bf16.mxu0 0
    %4463 = vmatpush1.bf16.xpose.msra.mxu0 0
    %4464 = vmatprep.subr.bf16.mxu0 0
    %4465 = vmatpush1.bf16.xpose.msra.mxu0 0
    %4466 = vmatprep.subr.bf16.mxu0 0
    %4467 = vmatpush1.bf16.xpose.msra.mxu0 0
    %4468 = vmatprep.subr.bf16.mxu0 0
    %4469 = vmatpush1.bf16.xpose.msra.mxu0 0
    %4470 = vmatprep.subr.bf16.mxu0 0
    %4471 = vmatpush1.bf16.xpose.msra.mxu0 0
    %4472 = vmatprep.subr.bf16.mxu0 0
    %4473 = vmatpush1.bf16.xpose.msra.mxu0 0
    %4474 = vmatprep.subr.bf16.mxu0 0
    %4475 = vmatpush1.bf16.xpose.msra.mxu0 0
    %4476 = vmatprep.mubr.bf16.mxu0 0
    %4477 = vmatmul.mubr.bf16.gmra.mrb[0].mxu0 %v2561
    %v4478 = vpop.f32.mrb[0].mxu0
    %v4479 = vadd.f32 0.0, %v4478
    %v4480 = vpop.f32.mrb[0].mxu0
    %v4481 = vpop.f32.mrb[0].mxu0
    %v4482 = vpop.f32.mrb[0].mxu0
    %4483 = vdwg.mxu0
    %4484 = vmatprep.subr.bf16.mxu0 0
    %4485 = vmatpush1.bf16.xpose.msra.mxu0 %v2626
    %4486 = vmatprep.subr.bf16.mxu0 0
    %4487 = vmatpush1.bf16.xpose.msra.mxu0 0
    %4488 = vmatprep.subr.bf16.mxu0 0
    %4489 = vmatpush1.bf16.xpose.msra.mxu0 0
    %4490 = vmatprep.subr.bf16.mxu0 0
    %4491 = vmatpush1.bf16.xpose.msra.mxu0 0
    %4492 = vmatprep.subr.bf16.mxu0 0
    %4493 = vmatpush1.bf16.xpose.msra.mxu0 0
    %4494 = vmatprep.subr.bf16.mxu0 0
    %4495 = vmatpush1.bf16.xpose.msra.mxu0 0
    %4496 = vmatprep.subr.bf16.mxu0 0
    %4497 = vmatpush1.bf16.xpose.msra.mxu0 0
    %4498 = vmatprep.subr.bf16.mxu0 0
    %4499 = vmatpush1.bf16.xpose.msra.mxu0 0
    %4500 = vmatprep.subr.bf16.mxu0 0
    %4501 = vmatpush1.bf16.xpose.msra.mxu0 0
    %4502 = vmatprep.subr.bf16.mxu0 0
    %4503 = vmatpush1.bf16.xpose.msra.mxu0 0
    %4504 = vmatprep.subr.bf16.mxu0 0
    %4505 = vmatpush1.bf16.xpose.msra.mxu0 0
    %4506 = vmatprep.subr.bf16.mxu0 0
    %4507 = vmatpush1.bf16.xpose.msra.mxu0 0
    %4508 = vmatprep.subr.bf16.mxu0 0
    %4509 = vmatpush1.bf16.xpose.msra.mxu0 0
    %4510 = vmatprep.subr.bf16.mxu0 0
    %4511 = vmatpush1.bf16.xpose.msra.mxu0 0
    %4512 = vmatprep.subr.bf16.mxu0 0
    %4513 = vmatpush1.bf16.xpose.msra.mxu0 0
    %4514 = vmatprep.subr.bf16.mxu0 0
    %4515 = vmatpush1.bf16.xpose.msra.mxu0 0
    %4516 = vmatprep.mubr.bf16.mxu0 0
    %4517 = vmatmul.mubr.bf16.gmra.mrb[0].mxu0 %v2562
    %v4518 = vpop.f32.mrb[0].mxu0
    %v4519 = vadd.f32 0.0, %v4518
    %v4520 = vpop.f32.mrb[0].mxu0
    %v4521 = vpop.f32.mrb[0].mxu0
    %v4522 = vpop.f32.mrb[0].mxu0
    %4523 = vdwg.mxu0
    %4524 = vmatprep.subr.bf16.mxu0 0
    %4525 = vmatpush1.bf16.xpose.msra.mxu0 %v2627
    %4526 = vmatprep.subr.bf16.mxu0 0
    %4527 = vmatpush1.bf16.xpose.msra.mxu0 0
    %4528 = vmatprep.subr.bf16.mxu0 0
    %4529 = vmatpush1.bf16.xpose.msra.mxu0 0
    %4530 = vmatprep.subr.bf16.mxu0 0
    %4531 = vmatpush1.bf16.xpose.msra.mxu0 0
    %4532 = vmatprep.subr.bf16.mxu0 0
    %4533 = vmatpush1.bf16.xpose.msra.mxu0 0
    %4534 = vmatprep.subr.bf16.mxu0 0
    %4535 = vmatpush1.bf16.xpose.msra.mxu0 0
    %4536 = vmatprep.subr.bf16.mxu0 0
    %4537 = vmatpush1.bf16.xpose.msra.mxu0 0
    %4538 = vmatprep.subr.bf16.mxu0 0
    %4539 = vmatpush1.bf16.xpose.msra.mxu0 0
    %4540 = vmatprep.subr.bf16.mxu0 0
    %4541 = vmatpush1.bf16.xpose.msra.mxu0 0
    %4542 = vmatprep.subr.bf16.mxu0 0
    %4543 = vmatpush1.bf16.xpose.msra.mxu0 0
    %4544 = vmatprep.subr.bf16.mxu0 0
    %4545 = vmatpush1.bf16.xpose.msra.mxu0 0
    %4546 = vmatprep.subr.bf16.mxu0 0
    %4547 = vmatpush1.bf16.xpose.msra.mxu0 0
    %4548 = vmatprep.subr.bf16.mxu0 0
    %4549 = vmatpush1.bf16.xpose.msra.mxu0 0
    %4550 = vmatprep.subr.bf16.mxu0 0
    %4551 = vmatpush1.bf16.xpose.msra.mxu0 0
    %4552 = vmatprep.subr.bf16.mxu0 0
    %4553 = vmatpush1.bf16.xpose.msra.mxu0 0
    %4554 = vmatprep.subr.bf16.mxu0 0
    %4555 = vmatpush1.bf16.xpose.msra.mxu0 0
    %4556 = vmatprep.mubr.bf16.mxu0 0
    %4557 = vmatmul.mubr.bf16.gmra.mrb[0].mxu0 %v2563
    %v4558 = vpop.f32.mrb[0].mxu0
    %v4559 = vadd.f32 0.0, %v4558
    %v4560 = vpop.f32.mrb[0].mxu0
    %v4561 = vpop.f32.mrb[0].mxu0
    %v4562 = vpop.f32.mrb[0].mxu0
    %4563 = vdwg.mxu0
    %4564 = vmatprep.subr.bf16.mxu0 0
    %4565 = vmatpush1.bf16.xpose.msra.mxu0 %v2628
    %4566 = vmatprep.subr.bf16.mxu0 0
    %4567 = vmatpush1.bf16.xpose.msra.mxu0 0
    %4568 = vmatprep.subr.bf16.mxu0 0
    %4569 = vmatpush1.bf16.xpose.msra.mxu0 0
    %4570 = vmatprep.subr.bf16.mxu0 0
    %4571 = vmatpush1.bf16.xpose.msra.mxu0 0
    %4572 = vmatprep.subr.bf16.mxu0 0
    %4573 = vmatpush1.bf16.xpose.msra.mxu0 0
    %4574 = vmatprep.subr.bf16.mxu0 0
    %4575 = vmatpush1.bf16.xpose.msra.mxu0 0
    %4576 = vmatprep.subr.bf16.mxu0 0
    %4577 = vmatpush1.bf16.xpose.msra.mxu0 0
    %4578 = vmatprep.subr.bf16.mxu0 0
    %4579 = vmatpush1.bf16.xpose.msra.mxu0 0
    %4580 = vmatprep.subr.bf16.mxu0 0
    %4581 = vmatpush1.bf16.xpose.msra.mxu0 0
    %4582 = vmatprep.subr.bf16.mxu0 0
    %4583 = vmatpush1.bf16.xpose.msra.mxu0 0
    %4584 = vmatprep.subr.bf16.mxu0 0
    %4585 = vmatpush1.bf16.xpose.msra.mxu0 0
    %4586 = vmatprep.subr.bf16.mxu0 0
    %4587 = vmatpush1.bf16.xpose.msra.mxu0 0
    %4588 = vmatprep.subr.bf16.mxu0 0
    %4589 = vmatpush1.bf16.xpose.msra.mxu0 0
    %4590 = vmatprep.subr.bf16.mxu0 0
    %4591 = vmatpush1.bf16.xpose.msra.mxu0 0
    %4592 = vmatprep.subr.bf16.mxu0 0
    %4593 = vmatpush1.bf16.xpose.msra.mxu0 0
    %4594 = vmatprep.subr.bf16.mxu0 0
    %4595 = vmatpush1.bf16.xpose.msra.mxu0 0
    %4596 = vmatprep.mubr.bf16.mxu0 0
    %4597 = vmatmul.mubr.bf16.gmra.mrb[0].mxu0 %v2564
    %v4598 = vpop.f32.mrb[0].mxu0
    %v4599 = vadd.f32 0.0, %v4598
    %v4600 = vpop.f32.mrb[0].mxu0
    %v4601 = vpop.f32.mrb[0].mxu0
    %v4602 = vpop.f32.mrb[0].mxu0
    %4603 = vdwg.mxu0
    %4604 = vmatprep.subr.bf16.mxu0 0
    %4605 = vmatpush1.bf16.xpose.msra.mxu0 %v2629
    %4606 = vmatprep.subr.bf16.mxu0 0
    %4607 = vmatpush1.bf16.xpose.msra.mxu0 0
    %4608 = vmatprep.subr.bf16.mxu0 0
    %4609 = vmatpush1.bf16.xpose.msra.mxu0 0
    %4610 = vmatprep.subr.bf16.mxu0 0
    %4611 = vmatpush1.bf16.xpose.msra.mxu0 0
    %4612 = vmatprep.subr.bf16.mxu0 0
    %4613 = vmatpush1.bf16.xpose.msra.mxu0 0
    %4614 = vmatprep.subr.bf16.mxu0 0
    %4615 = vmatpush1.bf16.xpose.msra.mxu0 0
    %4616 = vmatprep.subr.bf16.mxu0 0
    %4617 = vmatpush1.bf16.xpose.msra.mxu0 0
    %4618 = vmatprep.subr.bf16.mxu0 0
    %4619 = vmatpush1.bf16.xpose.msra.mxu0 0
    %4620 = vmatprep.subr.bf16.mxu0 0
    %4621 = vmatpush1.bf16.xpose.msra.mxu0 0
    %4622 = vmatprep.subr.bf16.mxu0 0
    %4623 = vmatpush1.bf16.xpose.msra.mxu0 0
    %4624 = vmatprep.subr.bf16.mxu0 0
    %4625 = vmatpush1.bf16.xpose.msra.mxu0 0
    %4626 = vmatprep.subr.bf16.mxu0 0
    %4627 = vmatpush1.bf16.xpose.msra.mxu0 0
    %4628 = vmatprep.subr.bf16.mxu0 0
    %4629 = vmatpush1.bf16.xpose.msra.mxu0 0
    %4630 = vmatprep.subr.bf16.mxu0 0
    %4631 = vmatpush1.bf16.xpose.msra.mxu0 0
    %4632 = vmatprep.subr.bf16.mxu0 0
    %4633 = vmatpush1.bf16.xpose.msra.mxu0 0
    %4634 = vmatprep.subr.bf16.mxu0 0
    %4635 = vmatpush1.bf16.xpose.msra.mxu0 0
    %4636 = vmatprep.mubr.bf16.mxu0 0
    %4637 = vmatmul.mubr.bf16.gmra.mrb[0].mxu0 %v2565
    %v4638 = vpop.f32.mrb[0].mxu0
    %v4639 = vadd.f32 0.0, %v4638
    %v4640 = vpop.f32.mrb[0].mxu0
    %v4641 = vpop.f32.mrb[0].mxu0
    %v4642 = vpop.f32.mrb[0].mxu0
    %4643 = vdwg.mxu0
    %4644 = vmatprep.subr.bf16.mxu0 0
    %4645 = vmatpush1.bf16.xpose.msra.mxu0 %v2630
    %4646 = vmatprep.subr.bf16.mxu0 0
    %4647 = vmatpush1.bf16.xpose.msra.mxu0 0
    %4648 = vmatprep.subr.bf16.mxu0 0
    %4649 = vmatpush1.bf16.xpose.msra.mxu0 0
    %4650 = vmatprep.subr.bf16.mxu0 0
    %4651 = vmatpush1.bf16.xpose.msra.mxu0 0
    %4652 = vmatprep.subr.bf16.mxu0 0
    %4653 = vmatpush1.bf16.xpose.msra.mxu0 0
    %4654 = vmatprep.subr.bf16.mxu0 0
    %4655 = vmatpush1.bf16.xpose.msra.mxu0 0
    %4656 = vmatprep.subr.bf16.mxu0 0
    %4657 = vmatpush1.bf16.xpose.msra.mxu0 0
    %4658 = vmatprep.subr.bf16.mxu0 0
    %4659 = vmatpush1.bf16.xpose.msra.mxu0 0
    %4660 = vmatprep.subr.bf16.mxu0 0
    %4661 = vmatpush1.bf16.xpose.msra.mxu0 0
    %4662 = vmatprep.subr.bf16.mxu0 0
    %4663 = vmatpush1.bf16.xpose.msra.mxu0 0
    %4664 = vmatprep.subr.bf16.mxu0 0
    %4665 = vmatpush1.bf16.xpose.msra.mxu0 0
    %4666 = vmatprep.subr.bf16.mxu0 0
    %4667 = vmatpush1.bf16.xpose.msra.mxu0 0
    %4668 = vmatprep.subr.bf16.mxu0 0
    %4669 = vmatpush1.bf16.xpose.msra.mxu0 0
    %4670 = vmatprep.subr.bf16.mxu0 0
    %4671 = vmatpush1.bf16.xpose.msra.mxu0 0
    %4672 = vmatprep.subr.bf16.mxu0 0
    %4673 = vmatpush1.bf16.xpose.msra.mxu0 0
    %4674 = vmatprep.subr.bf16.mxu0 0
    %4675 = vmatpush1.bf16.xpose.msra.mxu0 0
    %4676 = vmatprep.mubr.bf16.mxu0 0
    %4677 = vmatmul.mubr.bf16.gmra.mrb[0].mxu0 %v2566
    %v4678 = vpop.f32.mrb[0].mxu0
    %v4679 = vadd.f32 0.0, %v4678
    %v4680 = vpop.f32.mrb[0].mxu0
    %v4681 = vpop.f32.mrb[0].mxu0
    %v4682 = vpop.f32.mrb[0].mxu0
    %4683 = vdwg.mxu0
    %4684 = vmatprep.subr.bf16.mxu0 0
    %4685 = vmatpush1.bf16.xpose.msra.mxu0 %v2631
    %4686 = vmatprep.subr.bf16.mxu0 0
    %4687 = vmatpush1.bf16.xpose.msra.mxu0 0
    %4688 = vmatprep.subr.bf16.mxu0 0
    %4689 = vmatpush1.bf16.xpose.msra.mxu0 0
    %4690 = vmatprep.subr.bf16.mxu0 0
    %4691 = vmatpush1.bf16.xpose.msra.mxu0 0
    %4692 = vmatprep.subr.bf16.mxu0 0
    %4693 = vmatpush1.bf16.xpose.msra.mxu0 0
    %4694 = vmatprep.subr.bf16.mxu0 0
    %4695 = vmatpush1.bf16.xpose.msra.mxu0 0
    %4696 = vmatprep.subr.bf16.mxu0 0
    %4697 = vmatpush1.bf16.xpose.msra.mxu0 0
    %4698 = vmatprep.subr.bf16.mxu0 0
    %4699 = vmatpush1.bf16.xpose.msra.mxu0 0
    %4700 = vmatprep.subr.bf16.mxu0 0
    %4701 = vmatpush1.bf16.xpose.msra.mxu0 0
    %4702 = vmatprep.subr.bf16.mxu0 0
    %4703 = vmatpush1.bf16.xpose.msra.mxu0 0
    %4704 = vmatprep.subr.bf16.mxu0 0
    %4705 = vmatpush1.bf16.xpose.msra.mxu0 0
    %4706 = vmatprep.subr.bf16.mxu0 0
    %4707 = vmatpush1.bf16.xpose.msra.mxu0 0
    %4708 = vmatprep.subr.bf16.mxu0 0
    %4709 = vmatpush1.bf16.xpose.msra.mxu0 0
    %4710 = vmatprep.subr.bf16.mxu0 0
    %4711 = vmatpush1.bf16.xpose.msra.mxu0 0
    %4712 = vmatprep.subr.bf16.mxu0 0
    %4713 = vmatpush1.bf16.xpose.msra.mxu0 0
    %4714 = vmatprep.subr.bf16.mxu0 0
    %4715 = vmatpush1.bf16.xpose.msra.mxu0 0
    %4716 = vmatprep.mubr.bf16.mxu0 0
    %4717 = vmatmul.mubr.bf16.gmra.mrb[0].mxu0 %v2567
    %v4718 = vpop.f32.mrb[0].mxu0
    %v4719 = vadd.f32 0.0, %v4718
    %v4720 = vpop.f32.mrb[0].mxu0
    %v4721 = vpop.f32.mrb[0].mxu0
    %v4722 = vpop.f32.mrb[0].mxu0
    %4723 = vdwg.mxu0
    %4724 = vmatprep.subr.bf16.mxu0 0
    %4725 = vmatpush1.bf16.xpose.msra.mxu0 %v2632
    %4726 = vmatprep.subr.bf16.mxu0 0
    %4727 = vmatpush1.bf16.xpose.msra.mxu0 0
    %4728 = vmatprep.subr.bf16.mxu0 0
    %4729 = vmatpush1.bf16.xpose.msra.mxu0 0
    %4730 = vmatprep.subr.bf16.mxu0 0
    %4731 = vmatpush1.bf16.xpose.msra.mxu0 0
    %4732 = vmatprep.subr.bf16.mxu0 0
    %4733 = vmatpush1.bf16.xpose.msra.mxu0 0
    %4734 = vmatprep.subr.bf16.mxu0 0
    %4735 = vmatpush1.bf16.xpose.msra.mxu0 0
    %4736 = vmatprep.subr.bf16.mxu0 0
    %4737 = vmatpush1.bf16.xpose.msra.mxu0 0
    %4738 = vmatprep.subr.bf16.mxu0 0
    %4739 = vmatpush1.bf16.xpose.msra.mxu0 0
    %4740 = vmatprep.subr.bf16.mxu0 0
    %4741 = vmatpush1.bf16.xpose.msra.mxu0 0
    %4742 = vmatprep.subr.bf16.mxu0 0
    %4743 = vmatpush1.bf16.xpose.msra.mxu0 0
    %4744 = vmatprep.subr.bf16.mxu0 0
    %4745 = vmatpush1.bf16.xpose.msra.mxu0 0
    %4746 = vmatprep.subr.bf16.mxu0 0
    %4747 = vmatpush1.bf16.xpose.msra.mxu0 0
    %4748 = vmatprep.subr.bf16.mxu0 0
    %4749 = vmatpush1.bf16.xpose.msra.mxu0 0
    %4750 = vmatprep.subr.bf16.mxu0 0
    %4751 = vmatpush1.bf16.xpose.msra.mxu0 0
    %4752 = vmatprep.subr.bf16.mxu0 0
    %4753 = vmatpush1.bf16.xpose.msra.mxu0 0
    %4754 = vmatprep.subr.bf16.mxu0 0
    %4755 = vmatpush1.bf16.xpose.msra.mxu0 0
    %4756 = vmatprep.mubr.bf16.mxu0 0
    %4757 = vmatmul.mubr.bf16.gmra.mrb[0].mxu0 %v2568
    %v4758 = vpop.f32.mrb[0].mxu0
    %v4759 = vadd.f32 0.0, %v4758
    %v4760 = vpop.f32.mrb[0].mxu0
    %v4761 = vpop.f32.mrb[0].mxu0
    %v4762 = vpop.f32.mrb[0].mxu0
    %4763 = vdwg.mxu0
    %4764 = vmatprep.subr.bf16.mxu0 0
    %4765 = vmatpush1.bf16.xpose.msra.mxu0 %v2633
    %4766 = vmatprep.subr.bf16.mxu0 0
    %4767 = vmatpush1.bf16.xpose.msra.mxu0 0
    %4768 = vmatprep.subr.bf16.mxu0 0
    %4769 = vmatpush1.bf16.xpose.msra.mxu0 0
    %4770 = vmatprep.subr.bf16.mxu0 0
    %4771 = vmatpush1.bf16.xpose.msra.mxu0 0
    %4772 = vmatprep.subr.bf16.mxu0 0
    %4773 = vmatpush1.bf16.xpose.msra.mxu0 0
    %4774 = vmatprep.subr.bf16.mxu0 0
    %4775 = vmatpush1.bf16.xpose.msra.mxu0 0
    %4776 = vmatprep.subr.bf16.mxu0 0
    %4777 = vmatpush1.bf16.xpose.msra.mxu0 0
    %4778 = vmatprep.subr.bf16.mxu0 0
    %4779 = vmatpush1.bf16.xpose.msra.mxu0 0
    %4780 = vmatprep.subr.bf16.mxu0 0
    %4781 = vmatpush1.bf16.xpose.msra.mxu0 0
    %4782 = vmatprep.subr.bf16.mxu0 0
    %4783 = vmatpush1.bf16.xpose.msra.mxu0 0
    %4784 = vmatprep.subr.bf16.mxu0 0
    %4785 = vmatpush1.bf16.xpose.msra.mxu0 0
    %4786 = vmatprep.subr.bf16.mxu0 0
    %4787 = vmatpush1.bf16.xpose.msra.mxu0 0
    %4788 = vmatprep.subr.bf16.mxu0 0
    %4789 = vmatpush1.bf16.xpose.msra.mxu0 0
    %4790 = vmatprep.subr.bf16.mxu0 0
    %4791 = vmatpush1.bf16.xpose.msra.mxu0 0
    %4792 = vmatprep.subr.bf16.mxu0 0
    %4793 = vmatpush1.bf16.xpose.msra.mxu0 0
    %4794 = vmatprep.subr.bf16.mxu0 0
    %4795 = vmatpush1.bf16.xpose.msra.mxu0 0
    %4796 = vmatprep.mubr.bf16.mxu0 0
    %4797 = vmatmul.mubr.bf16.gmra.mrb[0].mxu0 %v2569
    %v4798 = vpop.f32.mrb[0].mxu0
    %v4799 = vadd.f32 0.0, %v4798
    %v4800 = vpop.f32.mrb[0].mxu0
    %v4801 = vpop.f32.mrb[0].mxu0
    %v4802 = vpop.f32.mrb[0].mxu0
    %4803 = vdwg.mxu0
    %4804 = vmatprep.subr.bf16.mxu0 0
    %4805 = vmatpush1.bf16.xpose.msra.mxu0 %v2634
    %4806 = vmatprep.subr.bf16.mxu0 0
    %4807 = vmatpush1.bf16.xpose.msra.mxu0 0
    %4808 = vmatprep.subr.bf16.mxu0 0
    %4809 = vmatpush1.bf16.xpose.msra.mxu0 0
    %4810 = vmatprep.subr.bf16.mxu0 0
    %4811 = vmatpush1.bf16.xpose.msra.mxu0 0
    %4812 = vmatprep.subr.bf16.mxu0 0
    %4813 = vmatpush1.bf16.xpose.msra.mxu0 0
    %4814 = vmatprep.subr.bf16.mxu0 0
    %4815 = vmatpush1.bf16.xpose.msra.mxu0 0
    %4816 = vmatprep.subr.bf16.mxu0 0
    %4817 = vmatpush1.bf16.xpose.msra.mxu0 0
    %4818 = vmatprep.subr.bf16.mxu0 0
    %4819 = vmatpush1.bf16.xpose.msra.mxu0 0
    %4820 = vmatprep.subr.bf16.mxu0 0
    %4821 = vmatpush1.bf16.xpose.msra.mxu0 0
    %4822 = vmatprep.subr.bf16.mxu0 0
    %4823 = vmatpush1.bf16.xpose.msra.mxu0 0
    %4824 = vmatprep.subr.bf16.mxu0 0
    %4825 = vmatpush1.bf16.xpose.msra.mxu0 0
    %4826 = vmatprep.subr.bf16.mxu0 0
    %4827 = vmatpush1.bf16.xpose.msra.mxu0 0
    %4828 = vmatprep.subr.bf16.mxu0 0
    %4829 = vmatpush1.bf16.xpose.msra.mxu0 0
    %4830 = vmatprep.subr.bf16.mxu0 0
    %4831 = vmatpush1.bf16.xpose.msra.mxu0 0
    %4832 = vmatprep.subr.bf16.mxu0 0
    %4833 = vmatpush1.bf16.xpose.msra.mxu0 0
    %4834 = vmatprep.subr.bf16.mxu0 0
    %4835 = vmatpush1.bf16.xpose.msra.mxu0 0
    %4836 = vmatprep.mubr.bf16.mxu0 0
    %4837 = vmatmul.mubr.bf16.gmra.mrb[0].mxu0 %v2570
    %v4838 = vpop.f32.mrb[0].mxu0
    %v4839 = vadd.f32 0.0, %v4838
    %v4840 = vpop.f32.mrb[0].mxu0
    %v4841 = vpop.f32.mrb[0].mxu0
    %v4842 = vpop.f32.mrb[0].mxu0
    %4843 = vdwg.mxu0
    %4844 = vmatprep.subr.bf16.mxu0 0
    %4845 = vmatpush1.bf16.xpose.msra.mxu0 %v2635
    %4846 = vmatprep.subr.bf16.mxu0 0
    %4847 = vmatpush1.bf16.xpose.msra.mxu0 0
    %4848 = vmatprep.subr.bf16.mxu0 0
    %4849 = vmatpush1.bf16.xpose.msra.mxu0 0
    %4850 = vmatprep.subr.bf16.mxu0 0
    %4851 = vmatpush1.bf16.xpose.msra.mxu0 0
    %4852 = vmatprep.subr.bf16.mxu0 0
    %4853 = vmatpush1.bf16.xpose.msra.mxu0 0
    %4854 = vmatprep.subr.bf16.mxu0 0
    %4855 = vmatpush1.bf16.xpose.msra.mxu0 0
    %4856 = vmatprep.subr.bf16.mxu0 0
    %4857 = vmatpush1.bf16.xpose.msra.mxu0 0
    %4858 = vmatprep.subr.bf16.mxu0 0
    %4859 = vmatpush1.bf16.xpose.msra.mxu0 0
    %4860 = vmatprep.subr.bf16.mxu0 0
    %4861 = vmatpush1.bf16.xpose.msra.mxu0 0
    %4862 = vmatprep.subr.bf16.mxu0 0
    %4863 = vmatpush1.bf16.xpose.msra.mxu0 0
    %4864 = vmatprep.subr.bf16.mxu0 0
    %4865 = vmatpush1.bf16.xpose.msra.mxu0 0
    %4866 = vmatprep.subr.bf16.mxu0 0
    %4867 = vmatpush1.bf16.xpose.msra.mxu0 0
    %4868 = vmatprep.subr.bf16.mxu0 0
    %4869 = vmatpush1.bf16.xpose.msra.mxu0 0
    %4870 = vmatprep.subr.bf16.mxu0 0
    %4871 = vmatpush1.bf16.xpose.msra.mxu0 0
    %4872 = vmatprep.subr.bf16.mxu0 0
    %4873 = vmatpush1.bf16.xpose.msra.mxu0 0
    %4874 = vmatprep.subr.bf16.mxu0 0
    %4875 = vmatpush1.bf16.xpose.msra.mxu0 0
    %4876 = vmatprep.mubr.bf16.mxu0 0
    %4877 = vmatmul.mubr.bf16.gmra.mrb[0].mxu0 %v2571
    %v4878 = vpop.f32.mrb[0].mxu0
    %v4879 = vadd.f32 0.0, %v4878
    %v4880 = vpop.f32.mrb[0].mxu0
    %v4881 = vpop.f32.mrb[0].mxu0
    %v4882 = vpop.f32.mrb[0].mxu0
    %4883 = vdwg.mxu0
    %4884 = vmatprep.subr.bf16.mxu0 0
    %4885 = vmatpush1.bf16.xpose.msra.mxu0 %v2636
    %4886 = vmatprep.subr.bf16.mxu0 0
    %4887 = vmatpush1.bf16.xpose.msra.mxu0 0
    %4888 = vmatprep.subr.bf16.mxu0 0
    %4889 = vmatpush1.bf16.xpose.msra.mxu0 0
    %4890 = vmatprep.subr.bf16.mxu0 0
    %4891 = vmatpush1.bf16.xpose.msra.mxu0 0
    %4892 = vmatprep.subr.bf16.mxu0 0
    %4893 = vmatpush1.bf16.xpose.msra.mxu0 0
    %4894 = vmatprep.subr.bf16.mxu0 0
    %4895 = vmatpush1.bf16.xpose.msra.mxu0 0
    %4896 = vmatprep.subr.bf16.mxu0 0
    %4897 = vmatpush1.bf16.xpose.msra.mxu0 0
    %4898 = vmatprep.subr.bf16.mxu0 0
    %4899 = vmatpush1.bf16.xpose.msra.mxu0 0
    %4900 = vmatprep.subr.bf16.mxu0 0
    %4901 = vmatpush1.bf16.xpose.msra.mxu0 0
    %4902 = vmatprep.subr.bf16.mxu0 0
    %4903 = vmatpush1.bf16.xpose.msra.mxu0 0
    %4904 = vmatprep.subr.bf16.mxu0 0
    %4905 = vmatpush1.bf16.xpose.msra.mxu0 0
    %4906 = vmatprep.subr.bf16.mxu0 0
    %4907 = vmatpush1.bf16.xpose.msra.mxu0 0
    %4908 = vmatprep.subr.bf16.mxu0 0
    %4909 = vmatpush1.bf16.xpose.msra.mxu0 0
    %4910 = vmatprep.subr.bf16.mxu0 0
    %4911 = vmatpush1.bf16.xpose.msra.mxu0 0
    %4912 = vmatprep.subr.bf16.mxu0 0
    %4913 = vmatpush1.bf16.xpose.msra.mxu0 0
    %4914 = vmatprep.subr.bf16.mxu0 0
    %4915 = vmatpush1.bf16.xpose.msra.mxu0 0
    %4916 = vmatprep.mubr.bf16.mxu0 0
    %4917 = vmatmul.mubr.bf16.gmra.mrb[0].mxu0 %v2572
    %v4918 = vpop.f32.mrb[0].mxu0
    %v4919 = vadd.f32 0.0, %v4918
    %v4920 = vpop.f32.mrb[0].mxu0
    %v4921 = vpop.f32.mrb[0].mxu0
    %v4922 = vpop.f32.mrb[0].mxu0
    %4923 = vdwg.mxu0
    %4924 = vmatprep.subr.bf16.mxu0 0
    %4925 = vmatpush1.bf16.xpose.msra.mxu0 %v2637
    %4926 = vmatprep.subr.bf16.mxu0 0
    %4927 = vmatpush1.bf16.xpose.msra.mxu0 0
    %4928 = vmatprep.subr.bf16.mxu0 0
    %4929 = vmatpush1.bf16.xpose.msra.mxu0 0
    %4930 = vmatprep.subr.bf16.mxu0 0
    %4931 = vmatpush1.bf16.xpose.msra.mxu0 0
    %4932 = vmatprep.subr.bf16.mxu0 0
    %4933 = vmatpush1.bf16.xpose.msra.mxu0 0
    %4934 = vmatprep.subr.bf16.mxu0 0
    %4935 = vmatpush1.bf16.xpose.msra.mxu0 0
    %4936 = vmatprep.subr.bf16.mxu0 0
    %4937 = vmatpush1.bf16.xpose.msra.mxu0 0
    %4938 = vmatprep.subr.bf16.mxu0 0
    %4939 = vmatpush1.bf16.xpose.msra.mxu0 0
    %4940 = vmatprep.subr.bf16.mxu0 0
    %4941 = vmatpush1.bf16.xpose.msra.mxu0 0
    %4942 = vmatprep.subr.bf16.mxu0 0
    %4943 = vmatpush1.bf16.xpose.msra.mxu0 0
    %4944 = vmatprep.subr.bf16.mxu0 0
    %4945 = vmatpush1.bf16.xpose.msra.mxu0 0
    %4946 = vmatprep.subr.bf16.mxu0 0
    %4947 = vmatpush1.bf16.xpose.msra.mxu0 0
    %4948 = vmatprep.subr.bf16.mxu0 0
    %4949 = vmatpush1.bf16.xpose.msra.mxu0 0
    %4950 = vmatprep.subr.bf16.mxu0 0
    %4951 = vmatpush1.bf16.xpose.msra.mxu0 0
    %4952 = vmatprep.subr.bf16.mxu0 0
    %4953 = vmatpush1.bf16.xpose.msra.mxu0 0
    %4954 = vmatprep.subr.bf16.mxu0 0
    %4955 = vmatpush1.bf16.xpose.msra.mxu0 0
    %4956 = vmatprep.mubr.bf16.mxu0 0
    %4957 = vmatmul.mubr.bf16.gmra.mrb[0].mxu0 %v2573
    %v4958 = vpop.f32.mrb[0].mxu0
    %v4959 = vadd.f32 0.0, %v4958
    %v4960 = vpop.f32.mrb[0].mxu0
    %v4961 = vpop.f32.mrb[0].mxu0
    %v4962 = vpop.f32.mrb[0].mxu0
    %4963 = vdwg.mxu0
    %4964 = vmatprep.subr.bf16.mxu0 0
    %4965 = vmatpush1.bf16.xpose.msra.mxu0 %v2638
    %4966 = vmatprep.subr.bf16.mxu0 0
    %4967 = vmatpush1.bf16.xpose.msra.mxu0 0
    %4968 = vmatprep.subr.bf16.mxu0 0
    %4969 = vmatpush1.bf16.xpose.msra.mxu0 0
    %4970 = vmatprep.subr.bf16.mxu0 0
    %4971 = vmatpush1.bf16.xpose.msra.mxu0 0
    %4972 = vmatprep.subr.bf16.mxu0 0
    %4973 = vmatpush1.bf16.xpose.msra.mxu0 0
    %4974 = vmatprep.subr.bf16.mxu0 0
    %4975 = vmatpush1.bf16.xpose.msra.mxu0 0
    %4976 = vmatprep.subr.bf16.mxu0 0
    %4977 = vmatpush1.bf16.xpose.msra.mxu0 0
    %4978 = vmatprep.subr.bf16.mxu0 0
    %4979 = vmatpush1.bf16.xpose.msra.mxu0 0
    %4980 = vmatprep.subr.bf16.mxu0 0
    %4981 = vmatpush1.bf16.xpose.msra.mxu0 0
    %4982 = vmatprep.subr.bf16.mxu0 0
    %4983 = vmatpush1.bf16.xpose.msra.mxu0 0
    %4984 = vmatprep.subr.bf16.mxu0 0
    %4985 = vmatpush1.bf16.xpose.msra.mxu0 0
    %4986 = vmatprep.subr.bf16.mxu0 0
    %4987 = vmatpush1.bf16.xpose.msra.mxu0 0
    %4988 = vmatprep.subr.bf16.mxu0 0
    %4989 = vmatpush1.bf16.xpose.msra.mxu0 0
    %4990 = vmatprep.subr.bf16.mxu0 0
    %4991 = vmatpush1.bf16.xpose.msra.mxu0 0
    %4992 = vmatprep.subr.bf16.mxu0 0
    %4993 = vmatpush1.bf16.xpose.msra.mxu0 0
    %4994 = vmatprep.subr.bf16.mxu0 0
    %4995 = vmatpush1.bf16.xpose.msra.mxu0 0
    %4996 = vmatprep.mubr.bf16.mxu0 0
    %4997 = vmatmul.mubr.bf16.gmra.mrb[0].mxu0 %v2574
    %v4998 = vpop.f32.mrb[0].mxu0
    %v4999 = vadd.f32 0.0, %v4998
    %v5000 = vpop.f32.mrb[0].mxu0
    %v5001 = vpop.f32.mrb[0].mxu0
    %v5002 = vpop.f32.mrb[0].mxu0
    %5003 = vdwg.mxu0
    %5004 = vmatprep.subr.bf16.mxu0 0
    %5005 = vmatpush1.bf16.xpose.msra.mxu0 %v2639
    %5006 = vmatprep.subr.bf16.mxu0 0
    %5007 = vmatpush1.bf16.xpose.msra.mxu0 0
    %5008 = vmatprep.subr.bf16.mxu0 0
    %5009 = vmatpush1.bf16.xpose.msra.mxu0 0
    %5010 = vmatprep.subr.bf16.mxu0 0
    %5011 = vmatpush1.bf16.xpose.msra.mxu0 0
    %5012 = vmatprep.subr.bf16.mxu0 0
    %5013 = vmatpush1.bf16.xpose.msra.mxu0 0
    %5014 = vmatprep.subr.bf16.mxu0 0
    %5015 = vmatpush1.bf16.xpose.msra.mxu0 0
    %5016 = vmatprep.subr.bf16.mxu0 0
    %5017 = vmatpush1.bf16.xpose.msra.mxu0 0
    %5018 = vmatprep.subr.bf16.mxu0 0
    %5019 = vmatpush1.bf16.xpose.msra.mxu0 0
    %5020 = vmatprep.subr.bf16.mxu0 0
    %5021 = vmatpush1.bf16.xpose.msra.mxu0 0
    %5022 = vmatprep.subr.bf16.mxu0 0
    %5023 = vmatpush1.bf16.xpose.msra.mxu0 0
    %5024 = vmatprep.subr.bf16.mxu0 0
    %5025 = vmatpush1.bf16.xpose.msra.mxu0 0
    %5026 = vmatprep.subr.bf16.mxu0 0
    %5027 = vmatpush1.bf16.xpose.msra.mxu0 0
    %5028 = vmatprep.subr.bf16.mxu0 0
    %5029 = vmatpush1.bf16.xpose.msra.mxu0 0
    %5030 = vmatprep.subr.bf16.mxu0 0
    %5031 = vmatpush1.bf16.xpose.msra.mxu0 0
    %5032 = vmatprep.subr.bf16.mxu0 0
    %5033 = vmatpush1.bf16.xpose.msra.mxu0 0
    %5034 = vmatprep.subr.bf16.mxu0 0
    %5035 = vmatpush1.bf16.xpose.msra.mxu0 0
    %5036 = vmatprep.mubr.bf16.mxu0 0
    %5037 = vmatmul.mubr.bf16.gmra.mrb[0].mxu0 %v2575
    %v5038 = vpop.f32.mrb[0].mxu0
    %v5039 = vadd.f32 0.0, %v5038
    %v5040 = vpop.f32.mrb[0].mxu0
    %v5041 = vpop.f32.mrb[0].mxu0
    %v5042 = vpop.f32.mrb[0].mxu0
    %5043 = vdwg.mxu0
    %5044 = vmatprep.subr.bf16.mxu0 0
    %5045 = vmatpush1.bf16.xpose.msra.mxu0 %v2640
    %5046 = vmatprep.subr.bf16.mxu0 0
    %5047 = vmatpush1.bf16.xpose.msra.mxu0 0
    %5048 = vmatprep.subr.bf16.mxu0 0
    %5049 = vmatpush1.bf16.xpose.msra.mxu0 0
    %5050 = vmatprep.subr.bf16.mxu0 0
    %5051 = vmatpush1.bf16.xpose.msra.mxu0 0
    %5052 = vmatprep.subr.bf16.mxu0 0
    %5053 = vmatpush1.bf16.xpose.msra.mxu0 0
    %5054 = vmatprep.subr.bf16.mxu0 0
    %5055 = vmatpush1.bf16.xpose.msra.mxu0 0
    %5056 = vmatprep.subr.bf16.mxu0 0
    %5057 = vmatpush1.bf16.xpose.msra.mxu0 0
    %5058 = vmatprep.subr.bf16.mxu0 0
    %5059 = vmatpush1.bf16.xpose.msra.mxu0 0
    %5060 = vmatprep.subr.bf16.mxu0 0
    %5061 = vmatpush1.bf16.xpose.msra.mxu0 0
    %5062 = vmatprep.subr.bf16.mxu0 0
    %5063 = vmatpush1.bf16.xpose.msra.mxu0 0
    %5064 = vmatprep.subr.bf16.mxu0 0
    %5065 = vmatpush1.bf16.xpose.msra.mxu0 0
    %5066 = vmatprep.subr.bf16.mxu0 0
    %5067 = vmatpush1.bf16.xpose.msra.mxu0 0
    %5068 = vmatprep.subr.bf16.mxu0 0
    %5069 = vmatpush1.bf16.xpose.msra.mxu0 0
    %5070 = vmatprep.subr.bf16.mxu0 0
    %5071 = vmatpush1.bf16.xpose.msra.mxu0 0
    %5072 = vmatprep.subr.bf16.mxu0 0
    %5073 = vmatpush1.bf16.xpose.msra.mxu0 0
    %5074 = vmatprep.subr.bf16.mxu0 0
    %5075 = vmatpush1.bf16.xpose.msra.mxu0 0
    %5076 = vmatprep.mubr.bf16.mxu0 0
    %5077 = vmatmul.mubr.bf16.gmra.mrb[0].mxu0 %v2576
    %v5078 = vpop.f32.mrb[0].mxu0
    %v5079 = vadd.f32 0.0, %v5078
    %v5080 = vpop.f32.mrb[0].mxu0
    %v5081 = vpop.f32.mrb[0].mxu0
    %v5082 = vpop.f32.mrb[0].mxu0
    %5083 = vdwg.mxu0
    %5084 = vmatprep.subr.bf16.mxu0 0
    %5085 = vmatpush1.bf16.xpose.msra.mxu0 %v2641
    %5086 = vmatprep.subr.bf16.mxu0 0
    %5087 = vmatpush1.bf16.xpose.msra.mxu0 0
    %5088 = vmatprep.subr.bf16.mxu0 0
    %5089 = vmatpush1.bf16.xpose.msra.mxu0 0
    %5090 = vmatprep.subr.bf16.mxu0 0
    %5091 = vmatpush1.bf16.xpose.msra.mxu0 0
    %5092 = vmatprep.subr.bf16.mxu0 0
    %5093 = vmatpush1.bf16.xpose.msra.mxu0 0
    %5094 = vmatprep.subr.bf16.mxu0 0
    %5095 = vmatpush1.bf16.xpose.msra.mxu0 0
    %5096 = vmatprep.subr.bf16.mxu0 0
    %5097 = vmatpush1.bf16.xpose.msra.mxu0 0
    %5098 = vmatprep.subr.bf16.mxu0 0
    %5099 = vmatpush1.bf16.xpose.msra.mxu0 0
    %5100 = vmatprep.subr.bf16.mxu0 0
    %5101 = vmatpush1.bf16.xpose.msra.mxu0 0
    %5102 = vmatprep.subr.bf16.mxu0 0
    %5103 = vmatpush1.bf16.xpose.msra.mxu0 0
    %5104 = vmatprep.subr.bf16.mxu0 0
    %5105 = vmatpush1.bf16.xpose.msra.mxu0 0
    %5106 = vmatprep.subr.bf16.mxu0 0
    %5107 = vmatpush1.bf16.xpose.msra.mxu0 0
    %5108 = vmatprep.subr.bf16.mxu0 0
    %5109 = vmatpush1.bf16.xpose.msra.mxu0 0
    %5110 = vmatprep.subr.bf16.mxu0 0
    %5111 = vmatpush1.bf16.xpose.msra.mxu0 0
    %5112 = vmatprep.subr.bf16.mxu0 0
    %5113 = vmatpush1.bf16.xpose.msra.mxu0 0
    %5114 = vmatprep.subr.bf16.mxu0 0
    %5115 = vmatpush1.bf16.xpose.msra.mxu0 0
    %5116 = vmatprep.mubr.bf16.mxu0 0
    %5117 = vmatmul.mubr.bf16.gmra.mrb[0].mxu0 %v2577
    %v5118 = vpop.f32.mrb[0].mxu0
    %v5119 = vadd.f32 0.0, %v5118
    %v5120 = vpop.f32.mrb[0].mxu0
    %v5121 = vpop.f32.mrb[0].mxu0
    %v5122 = vpop.f32.mrb[0].mxu0
    %5123 = vdwg.mxu0
    %5124 = vmatprep.subr.bf16.mxu0 0
    %5125 = vmatpush1.bf16.xpose.msra.mxu0 %v2642
    %5126 = vmatprep.subr.bf16.mxu0 0
    %5127 = vmatpush1.bf16.xpose.msra.mxu0 0
    %5128 = vmatprep.subr.bf16.mxu0 0
    %5129 = vmatpush1.bf16.xpose.msra.mxu0 0
    %5130 = vmatprep.subr.bf16.mxu0 0
    %5131 = vmatpush1.bf16.xpose.msra.mxu0 0
    %5132 = vmatprep.subr.bf16.mxu0 0
    %5133 = vmatpush1.bf16.xpose.msra.mxu0 0
    %5134 = vmatprep.subr.bf16.mxu0 0
    %5135 = vmatpush1.bf16.xpose.msra.mxu0 0
    %5136 = vmatprep.subr.bf16.mxu0 0
    %5137 = vmatpush1.bf16.xpose.msra.mxu0 0
    %5138 = vmatprep.subr.bf16.mxu0 0
    %5139 = vmatpush1.bf16.xpose.msra.mxu0 0
    %5140 = vmatprep.subr.bf16.mxu0 0
    %5141 = vmatpush1.bf16.xpose.msra.mxu0 0
    %5142 = vmatprep.subr.bf16.mxu0 0
    %5143 = vmatpush1.bf16.xpose.msra.mxu0 0
    %5144 = vmatprep.subr.bf16.mxu0 0
    %5145 = vmatpush1.bf16.xpose.msra.mxu0 0
    %5146 = vmatprep.subr.bf16.mxu0 0
    %5147 = vmatpush1.bf16.xpose.msra.mxu0 0
    %5148 = vmatprep.subr.bf16.mxu0 0
    %5149 = vmatpush1.bf16.xpose.msra.mxu0 0
    %5150 = vmatprep.subr.bf16.mxu0 0
    %5151 = vmatpush1.bf16.xpose.msra.mxu0 0
    %5152 = vmatprep.subr.bf16.mxu0 0
    %5153 = vmatpush1.bf16.xpose.msra.mxu0 0
    %5154 = vmatprep.subr.bf16.mxu0 0
    %5155 = vmatpush1.bf16.xpose.msra.mxu0 0
    %5156 = vmatprep.mubr.bf16.mxu0 0
    %5157 = vmatmul.mubr.bf16.gmra.mrb[0].mxu0 %v2578
    %v5158 = vpop.f32.mrb[0].mxu0
    %v5159 = vadd.f32 0.0, %v5158
    %v5160 = vpop.f32.mrb[0].mxu0
    %v5161 = vpop.f32.mrb[0].mxu0
    %v5162 = vpop.f32.mrb[0].mxu0
    %5163 = vdwg.mxu0
    %5164 = vmatprep.subr.bf16.mxu0 0
    %5165 = vmatpush1.bf16.xpose.msra.mxu0 %v2643
    %5166 = vmatprep.subr.bf16.mxu0 0
    %5167 = vmatpush1.bf16.xpose.msra.mxu0 0
    %5168 = vmatprep.subr.bf16.mxu0 0
    %5169 = vmatpush1.bf16.xpose.msra.mxu0 0
    %5170 = vmatprep.subr.bf16.mxu0 0
    %5171 = vmatpush1.bf16.xpose.msra.mxu0 0
    %5172 = vmatprep.subr.bf16.mxu0 0
    %5173 = vmatpush1.bf16.xpose.msra.mxu0 0
    %5174 = vmatprep.subr.bf16.mxu0 0
    %5175 = vmatpush1.bf16.xpose.msra.mxu0 0
    %5176 = vmatprep.subr.bf16.mxu0 0
    %5177 = vmatpush1.bf16.xpose.msra.mxu0 0
    %5178 = vmatprep.subr.bf16.mxu0 0
    %5179 = vmatpush1.bf16.xpose.msra.mxu0 0
    %5180 = vmatprep.subr.bf16.mxu0 0
    %5181 = vmatpush1.bf16.xpose.msra.mxu0 0
    %5182 = vmatprep.subr.bf16.mxu0 0
    %5183 = vmatpush1.bf16.xpose.msra.mxu0 0
    %5184 = vmatprep.subr.bf16.mxu0 0
    %5185 = vmatpush1.bf16.xpose.msra.mxu0 0
    %5186 = vmatprep.subr.bf16.mxu0 0
    %5187 = vmatpush1.bf16.xpose.msra.mxu0 0
    %5188 = vmatprep.subr.bf16.mxu0 0
    %5189 = vmatpush1.bf16.xpose.msra.mxu0 0
    %5190 = vmatprep.subr.bf16.mxu0 0
    %5191 = vmatpush1.bf16.xpose.msra.mxu0 0
    %5192 = vmatprep.subr.bf16.mxu0 0
    %5193 = vmatpush1.bf16.xpose.msra.mxu0 0
    %5194 = vmatprep.subr.bf16.mxu0 0
    %5195 = vmatpush1.bf16.xpose.msra.mxu0 0
    %5196 = vmatprep.mubr.bf16.mxu0 0
    %5197 = vmatmul.mubr.bf16.gmra.mrb[0].mxu0 %v2579
    %v5198 = vpop.f32.mrb[0].mxu0
    %v5199 = vadd.f32 0.0, %v5198
    %v5200 = vpop.f32.mrb[0].mxu0
    %v5201 = vpop.f32.mrb[0].mxu0
    %v5202 = vpop.f32.mrb[0].mxu0
    %5203 = vdwg.mxu0
    %vm5204 = vcmask 64512
    %v5205 = vsel %vm5204, %v2679, 0.0
    %v5206 = vsel %vm5204, %v2719, 0.0
    %v5207 = vadd.f32 %v5205, %v5206
    %v5208 = vsel %vm5204, %v2759, 0.0
    %v5209 = vadd.f32 %v5207, %v5208
    %v5210 = vsel %vm5204, %v2799, 0.0
    %v5211 = vadd.f32 %v5209, %v5210
    %v5212 = vsel %vm5204, %v2839, 0.0
    %v5213 = vadd.f32 %v5211, %v5212
    %v5214 = vsel %vm5204, %v2879, 0.0
    %v5215 = vadd.f32 %v5213, %v5214
    %v5216 = vsel %vm5204, %v2919, 0.0
    %v5217 = vadd.f32 %v5215, %v5216
    %v5218 = vsel %vm5204, %v2959, 0.0
    %v5219 = vadd.f32 %v5217, %v5218
    %v5220 = vsel %vm5204, %v2999, 0.0
    %v5221 = vadd.f32 %v5219, %v5220
    %v5222 = vsel %vm5204, %v3039, 0.0
    %v5223 = vadd.f32 %v5221, %v5222
    %v5224 = vsel %vm5204, %v3079, 0.0
    %v5225 = vadd.f32 %v5223, %v5224
    %v5226 = vsel %vm5204, %v3119, 0.0
    %v5227 = vadd.f32 %v5225, %v5226
    %v5228 = vsel %vm5204, %v3159, 0.0
    %v5229 = vadd.f32 %v5227, %v5228
    %v5230 = vsel %vm5204, %v3199, 0.0
    %v5231 = vadd.f32 %v5229, %v5230
    %v5232 = vsel %vm5204, %v3239, 0.0
    %v5233 = vadd.f32 %v5231, %v5232
    %v5234 = vsel %vm5204, %v3279, 0.0
    %v5235 = vadd.f32 %v5233, %v5234
    %v5236 = vsel %vm5204, %v3319, 0.0
    %v5237 = vadd.f32 %v5235, %v5236
    %v5238 = vsel %vm5204, %v3359, 0.0
    %v5239 = vadd.f32 %v5237, %v5238
    %v5240 = vsel %vm5204, %v3399, 0.0
    %v5241 = vadd.f32 %v5239, %v5240
    %v5242 = vsel %vm5204, %v3439, 0.0
    %v5243 = vadd.f32 %v5241, %v5242
    %v5244 = vsel %vm5204, %v3479, 0.0
    %v5245 = vadd.f32 %v5243, %v5244
    %v5246 = vsel %vm5204, %v3519, 0.0
    %v5247 = vadd.f32 %v5245, %v5246
    %v5248 = vsel %vm5204, %v3559, 0.0
    %v5249 = vadd.f32 %v5247, %v5248
    %v5250 = vsel %vm5204, %v3599, 0.0
    %v5251 = vadd.f32 %v5249, %v5250
    %v5252 = vsel %vm5204, %v3639, 0.0
    %v5253 = vadd.f32 %v5251, %v5252
    %v5254 = vsel %vm5204, %v3679, 0.0
    %v5255 = vadd.f32 %v5253, %v5254
    %v5256 = vsel %vm5204, %v3719, 0.0
    %v5257 = vadd.f32 %v5255, %v5256
    %v5258 = vsel %vm5204, %v3759, 0.0
    %v5259 = vadd.f32 %v5257, %v5258
    %v5260 = vsel %vm5204, %v3799, 0.0
    %v5261 = vadd.f32 %v5259, %v5260
    %v5262 = vsel %vm5204, %v3839, 0.0
    %v5263 = vadd.f32 %v5261, %v5262
    %v5264 = vsel %vm5204, %v3879, 0.0
    %v5265 = vadd.f32 %v5263, %v5264
    %v5266 = vsel %vm5204, %v3919, 0.0
    %v5267 = vadd.f32 %v5265, %v5266
    %v5268 = vsel %vm5204, %v3959, 0.0
    %v5269 = vadd.f32 %v5267, %v5268
    %v5270 = vsel %vm5204, %v3999, 0.0
    %v5271 = vadd.f32 %v5269, %v5270
    %v5272 = vsel %vm5204, %v4039, 0.0
    %v5273 = vadd.f32 %v5271, %v5272
    %v5274 = vsel %vm5204, %v4079, 0.0
    %v5275 = vadd.f32 %v5273, %v5274
    %v5276 = vsel %vm5204, %v4119, 0.0
    %v5277 = vadd.f32 %v5275, %v5276
    %v5278 = vsel %vm5204, %v4159, 0.0
    %v5279 = vadd.f32 %v5277, %v5278
    %v5280 = vsel %vm5204, %v4199, 0.0
    %v5281 = vadd.f32 %v5279, %v5280
    %v5282 = vsel %vm5204, %v4239, 0.0
    %v5283 = vadd.f32 %v5281, %v5282
    %v5284 = vsel %vm5204, %v4279, 0.0
    %v5285 = vadd.f32 %v5283, %v5284
    %v5286 = vsel %vm5204, %v4319, 0.0
    %v5287 = vadd.f32 %v5285, %v5286
    %v5288 = vsel %vm5204, %v4359, 0.0
    %v5289 = vadd.f32 %v5287, %v5288
    %v5290 = vsel %vm5204, %v4399, 0.0
    %v5291 = vadd.f32 %v5289, %v5290
    %v5292 = vsel %vm5204, %v4439, 0.0
    %v5293 = vadd.f32 %v5291, %v5292
    %v5294 = vsel %vm5204, %v4479, 0.0
    %v5295 = vadd.f32 %v5293, %v5294
    %v5296 = vsel %vm5204, %v4519, 0.0
    %v5297 = vadd.f32 %v5295, %v5296
    %v5298 = vsel %vm5204, %v4559, 0.0
    %v5299 = vadd.f32 %v5297, %v5298
    %v5300 = vsel %vm5204, %v4599, 0.0
    %v5301 = vadd.f32 %v5299, %v5300
    %v5302 = vsel %vm5204, %v4639, 0.0
    %v5303 = vadd.f32 %v5301, %v5302
    %v5304 = vsel %vm5204, %v4679, 0.0
    %v5305 = vadd.f32 %v5303, %v5304
    %v5306 = vsel %vm5204, %v4719, 0.0
    %v5307 = vadd.f32 %v5305, %v5306
    %v5308 = vsel %vm5204, %v4759, 0.0
    %v5309 = vadd.f32 %v5307, %v5308
    %v5310 = vsel %vm5204, %v4799, 0.0
    %v5311 = vadd.f32 %v5309, %v5310
    %v5312 = vsel %vm5204, %v4839, 0.0
    %v5313 = vadd.f32 %v5311, %v5312
    %v5314 = vsel %vm5204, %v4879, 0.0
    %v5315 = vadd.f32 %v5313, %v5314
    %v5316 = vsel %vm5204, %v4919, 0.0
    %v5317 = vadd.f32 %v5315, %v5316
    %v5318 = vsel %vm5204, %v4959, 0.0
    %v5319 = vadd.f32 %v5317, %v5318
    %v5320 = vsel %vm5204, %v4999, 0.0
    %v5321 = vadd.f32 %v5319, %v5320
    %v5322 = vsel %vm5204, %v5039, 0.0
    %v5323 = vadd.f32 %v5321, %v5322
    %v5324 = vsel %vm5204, %v5079, 0.0
    %v5325 = vadd.f32 %v5323, %v5324
    %v5326 = vsel %vm5204, %v5119, 0.0
    %v5327 = vadd.f32 %v5325, %v5326
    %v5328 = vsel %vm5204, %v5159, 0.0
    %v5329 = vadd.f32 %v5327, %v5328
    %v5330 = vsel %vm5204, %v5199, 0.0
    %v5331 = vadd.f32 %v5329, %v5330
    %v5332 = vld [vmem:[%s5] sm:$0x1]
    %v5334 = vlaneseq
    %v5335 = vshrl.u32 %v5334, 7
    %v5336 = vsub.s32 0, %v5335
    %v5337 = vrot.slane %v5332, %v5336
    %v5339 = vadd.f32 %v5331, %v5337
    %5340 = vst.msk [vmem:[%s6] sm:$0xff] %vm5204, %v5339
    // Predicated region
    $region34: #{classifier_forward.1} parent=1 // pred_check
      _
    $region35: #{classifier_forward.1} parent=1 // pred_check_branch
      %5342 = sbr.rel (0) target = $region37
    $region36: #{classifier_forward.1} parent=1 // pred_region
      _
    $region37: #{classifier_forward.1} parent=1 // pred_fallthru
      _
    // Predicated region
    $region38: #{classifier_forward.1} parent=1 // pred_check
      _
    $region39: #{classifier_forward.1} parent=1 // pred_check_branch
      %5344 = sbr.rel (0) target = $region41
    $region40: #{classifier_forward.1} parent=1 // pred_region
      _
    $region41: #{classifier_forward.1} parent=1 // pred_fallthru
      _
    %5345 = vsyncpa [#allocation3], 1
    %5346 = vsyncpa [#allocation5], 1

</llo_original>
